<compile_context>
chip_gen: v6e
topology: v6e:2x2x1
jax: 0.10.0
libtpu: 0.0.40
codegen_flags: <defaults>
</compile_context>

<pallas_src>
import functools
import math

import jax
import jax.numpy as jnp
from jax import lax
from jax.experimental import pallas as pl
from jax.experimental.pallas import tpu as pltpu


# ----------------------------- Pallas kernel ------------------------------ #

def _layernorm(v, g, b, eps=1e-5):
    # nn.LayerNorm(size): eps=1e-5, elementwise affine; all in f32.
    mu = jnp.mean(v, axis=-1, keepdims=True)
    var = jnp.mean((v - mu) ** 2, axis=-1, keepdims=True)
    return (v - mu) * lax.rsqrt(var + eps) * g + b


def _gelu(x):
    # GELU (tanh approximation), matching codertimo BERT-pytorch's GELU module.
    return 0.5 * x * (1.0 + jnp.tanh(math.sqrt(2.0 / math.pi)
                                     * (x + 0.044715 * x * x * x)))


def transformer_block_kernel(x_q_ref, x_kv_ref, bias_ref,
                             wq_ref, bq_ref, wk_ref, bk_ref, wv_ref, bv_ref,
                             wo_ref, bo_ref,
                             ln1_g_ref, ln1_b_ref, ln2_g_ref, ln2_b_ref,
                             w1_ref, b1_ref, w2_ref, b2_ref,
                             out_ref, *, num_heads):
    f32, bf16 = jnp.float32, jnp.bfloat16

    x_q = x_q_ref[0]            # (TQ, H) f32 — query rows / residual stream
    x_kv = x_kv_ref[0]          # (S,  H) f32 — full sequence for keys/values
    bias = bias_ref[0]          # (1,  S) f32 — additive key mask (0 or -1e9)
    TQ, H = x_q.shape
    S = x_kv.shape[0]
    dk = H // num_heads
    inv_sqrt_dk = 1.0 / math.sqrt(dk)

    # Hoist all parameter loads out of the head loop (no repeated broadcasts).
    ln1_g, ln1_b = ln1_g_ref[0], ln1_b_ref[0]
    ln2_g, ln2_b = ln2_g_ref[0], ln2_b_ref[0]
    bq, bk, bv, bo = bq_ref[0], bk_ref[0], bv_ref[0], bo_ref[0]
    b1, b2 = b1_ref[0], b2_ref[0]
    wo = wo_ref[...]                                           # (H, H) bf16

    # ---------------- attention sublayer (pre-norm residual) --------------- #
    xq_n = _layernorm(x_q, ln1_g, ln1_b).astype(bf16)
    if TQ == S:
        xkv_n = xq_n                      # single query tile: same rows, reuse
    else:
        xkv_n = _layernorm(x_kv, ln1_g, ln1_b).astype(bf16)

    q = jnp.dot(xq_n, wq_ref[...], preferred_element_type=f32) + bq    # (TQ, H)
    k = jnp.dot(xkv_n, wk_ref[...], preferred_element_type=f32) + bk   # (S,  H)
    v = jnp.dot(xkv_n, wv_ref[...], preferred_element_type=f32) + bv   # (S,  H)
    q, k, v = q.astype(bf16), k.astype(bf16), v.astype(bf16)

    # Per-head attention; the output projection is accumulated per head
    # (attn += ctx_h @ wo[h*dk:(h+1)*dk, :]) instead of concatenating heads
    # (avoids an XLU relayout and the extra (TQ, H) materialization).
    # num_heads is small & static here, so an unrolled Python loop is fine.
    # TODO(synk): for many heads (>=12) switch to a fori_loop + VMEM scratch.
    attn = jnp.zeros((TQ, H), f32)
    for h in range(num_heads):
        lo = h * dk
        qh = q[:, lo:lo + dk]             # (TQ, dk)
        kh = k[:, lo:lo + dk]             # (S,  dk)
        vh = v[:, lo:lo + dk]             # (S,  dk)
        # scores = qh @ kh^T / sqrt(dk) + mask_bias (no transpose materialized)
        scores = lax.dot_general(qh, kh, (((1,), (1,)), ((), ())),
                                 preferred_element_type=f32)
        scores = scores * inv_sqrt_dk + bias
        scores = scores - jnp.max(scores, axis=-1, keepdims=True)
        p = jnp.exp(scores)
        p = p * pl.reciprocal(jnp.sum(p, axis=-1, keepdims=True), approx=True)
        ctx = jnp.dot(p.astype(bf16), vh, preferred_element_type=f32)   # (TQ,dk)
        attn = attn + jnp.dot(ctx.astype(bf16), wo[lo:lo + dk, :],
                              preferred_element_type=f32)               # (TQ,H)
    x = x_q + attn + bo                    # residual (+ output-proj bias once)

    # ---------------- feed-forward sublayer (pre-norm residual) ------------ #
    xn2 = _layernorm(x, ln2_g, ln2_b).astype(bf16)
    hmid = jnp.dot(xn2, w1_ref[...], preferred_element_type=f32) + b1
    hmid = _gelu(hmid).astype(bf16)
    y = jnp.dot(hmid, w2_ref[...], preferred_element_type=f32) + b2
    # TODO(synk): dropout (sublayers, embedding, block output) is identity here.
    out_ref[0] = x + y


def run_transformer_block(x, mask_bias, p, *, num_heads, q_tile=128):
    """x: (B,S,H) f32 residual stream; mask_bias: (B,1,S) f32 additive bias."""
    B, S, H = x.shape
    TQ = min(q_tile, S)                    # 128-row query tiles at real sizes
    assert S % TQ == 0, "sequence length must be a multiple of the query tile"
    n_q = S // TQ

    weights = [p["wq"], p["bq"], p["wk"], p["bk"], p["wv"], p["bv"],
               p["wo"], p["bo"],
               p["ln1_g"], p["ln1_b"], p["ln2_g"], p["ln2_b"],
               p["w1"], p["b1"], p["w2"], p["b2"]]

    # Query-tile view (aliased with the output) and full-sequence K/V view of x.
    x_q_spec = pl.BlockSpec((1, TQ, H), lambda b, qi: (b, qi, 0))
    x_kv_spec = pl.BlockSpec((1, S, H), lambda b, qi: (b, 0, 0))
    bias_spec = pl.BlockSpec((1, 1, S), lambda b, qi: (b, 0, 0))

    def w_spec(shape):
        return pl.BlockSpec(shape, lambda b, qi: (0,) * len(shape))

    FFd = p["w1"].shape[1]
    flops = 2 * B * S * H * H * (2 + 2 * n_q)       # Q/out proj + K,V proj per q-tile
    flops += 4 * B * S * S * H                      # QK^T and PV over all heads
    flops += 4 * B * S * H * FFd                    # feed-forward matmuls
    transcendentals = B * num_heads * S * S + B * S * FFd   # softmax exp + GELU tanh
    bytes_accessed = (x.size * 4 * (2 + n_q) + mask_bias.size * 4 * n_q
                      + sum(int(w.size) * w.dtype.itemsize for w in weights))

    kernel = functools.partial(transformer_block_kernel, num_heads=num_heads)
    return pl.pallas_call(
        kernel,
        out_shape=jax.ShapeDtypeStruct((B, S, H), jnp.float32),
        grid=(B, n_q),
        in_specs=[x_q_spec, x_kv_spec, bias_spec] + [w_spec(w.shape) for w in weights],
        out_specs=x_q_spec,
        # Residual stream is read-modify-write: update it in place.
        input_output_aliases={0: 0},
        # Batch tiles are independent -> "parallel" (megacore / 2-TC sharding).
        # The q-tile axis stays "arbitrary": the output aliases the input and
        # the K/V view reads the full (pre-layer) sequence, so q-tiles of one
        # batch row must not be split across cores.
        compiler_params=pltpu.CompilerParams(
            dimension_semantics=("parallel", "arbitrary"),
            vmem_limit_bytes=64 * 1024 * 1024),
        cost_estimate=pl.CostEstimate(
            flops=int(flops), transcendentals=int(transcendentals),
            bytes_accessed=int(bytes_accessed)),
    )(x, x, mask_bias, *weights)


# ------------------------------ JAX glue ---------------------------------- #

def sinusoidal_position_embedding(max_len, d_model):
    pos = jnp.arange(max_len, dtype=jnp.float32)[:, None]
    div = jnp.exp(jnp.arange(0, d_model, 2, dtype=jnp.float32)
                  * -(math.log(10000.0) / d_model))
    pe = jnp.zeros((max_len, d_model), jnp.float32)
    pe = pe.at[:, 0::2].set(jnp.sin(pos * div))
    pe = pe.at[:, 1::2].set(jnp.cos(pos * div))
    return pe


def init_bert_params(key, vocab_size, hidden, n_layers, ff_hidden):
    keys = jax.random.split(key, 3 + n_layers)
    scale = 0.02

    tok_emb = scale * jax.random.normal(keys[0], (vocab_size, hidden), jnp.float32)
    tok_emb = tok_emb.at[0].set(0.0)                      # padding_idx=0
    seg_emb = scale * jax.random.normal(keys[1], (3, hidden), jnp.float32)
    seg_emb = seg_emb.at[0].set(0.0)                      # padding_idx=0

    def init_layer(k):
        ks = jax.random.split(k, 6)

        def lin(kk, din, dout):
            # bf16 matmul weights (MXU-native, half the VMEM/HBM traffic),
            # f32 biases (added after f32 accumulation).
            w = (scale * jax.random.normal(kk, (din, dout), jnp.float32)
                 ).astype(jnp.bfloat16)
            return w, jnp.zeros((1, dout), jnp.float32)

        wq, bq = lin(ks[0], hidden, hidden)
        wk, bk = lin(ks[1], hidden, hidden)
        wv, bv = lin(ks[2], hidden, hidden)
        wo, bo = lin(ks[3], hidden, hidden)
        w1, b1 = lin(ks[4], hidden, ff_hidden)
        w2, b2 = lin(ks[5], ff_hidden, hidden)
        return dict(
            wq=wq, bq=bq, wk=wk, bk=bk, wv=wv, bv=bv, wo=wo, bo=bo,
            ln1_g=jnp.ones((1, hidden), jnp.float32),
            ln1_b=jnp.zeros((1, hidden), jnp.float32),
            ln2_g=jnp.ones((1, hidden), jnp.float32),
            ln2_b=jnp.zeros((1, hidden), jnp.float32),
            w1=w1, b1=b1, w2=w2, b2=b2)

    layers = [init_layer(keys[3 + i]) for i in range(n_layers)]
    return dict(tok_emb=tok_emb, seg_emb=seg_emb, layers=layers)


def bert_forward(tokens, segments, params, *, num_heads):
    """tokens, segments: (B, S) int32.  Returns (B, S, H) float32."""
    B, S = tokens.shape
    H = params["tok_emb"].shape[1]

    # PyTorch: mask = (x > 0).unsqueeze(1).repeat(1, S, 1) -> key j attendable
    # iff tokens[b, j] > 0.  Stored compactly as a (B, 1, S) additive bias
    # (0 keep / -1e9 mask) instead of materializing the (B, S, S) mask.
    mask_bias = jnp.where(tokens > 0, 0.0, -1e9).astype(jnp.float32)[:, None, :]

    # BERTEmbedding: token + sinusoidal position + segment (dropout = identity).
    pe = sinusoidal_position_embedding(S, H)
    x = (jnp.take(params["tok_emb"], tokens, axis=0)
         + pe[None, :, :]
         + jnp.take(params["seg_emb"], segments, axis=0)).astype(jnp.float32)

    for layer_params in params["layers"]:
        x = run_transformer_block(x, mask_bias, layer_params, num_heads=num_heads)
    return x


# -------------------------------- main ------------------------------------ #

if __name__ == "__main__":
    VOCAB = 50
    HIDDEN = 32
    N_LAYERS = 2
    HEADS = 4
    FF = 4 * HIDDEN
    B, S = 2, 8

    root = jax.random.PRNGKey(0)
    k_tok, k_seg, k_par = jax.random.split(root, 3)

    tokens = jax.random.randint(k_tok, (B, S), 0, VOCAB, dtype=jnp.int32)
    segments = jax.random.randint(k_seg, (B, S), 0, 3, dtype=jnp.int32)
    params = init_bert_params(k_par, VOCAB, N_LAYERS and HIDDEN, N_LAYERS, FF)

    forward = jax.jit(functools.partial(bert_forward, num_heads=HEADS))
    out = forward(tokens, segments, params)
    out = jax.block_until_ready(out)

    assert out.shape == (B, S, HIDDEN)
    assert bool(jnp.all(jnp.isfinite(out)))
    print("KERNEL_OK")
</pallas_src>

<mosaic_0001>
module attributes {stable_mosaic.version = 11 : i64} {
  func.func @transformer_block_kernel(%arg0: i32, %arg1: i32, %arg2: memref<1x8x32xf32, #tpu.memory_space<vmem>>, %arg3: memref<1x8x32xf32, #tpu.memory_space<vmem>>, %arg4: memref<1x1x8xf32, #tpu.memory_space<vmem>>, %arg5: memref<32x32xbf16, #tpu.memory_space<vmem>>, %arg6: memref<1x32xf32, #tpu.memory_space<vmem>>, %arg7: memref<32x32xbf16, #tpu.memory_space<vmem>>, %arg8: memref<1x32xf32, #tpu.memory_space<vmem>>, %arg9: memref<32x32xbf16, #tpu.memory_space<vmem>>, %arg10: memref<1x32xf32, #tpu.memory_space<vmem>>, %arg11: memref<32x32xbf16, #tpu.memory_space<vmem>>, %arg12: memref<1x32xf32, #tpu.memory_space<vmem>>, %arg13: memref<1x32xf32, #tpu.memory_space<vmem>>, %arg14: memref<1x32xf32, #tpu.memory_space<vmem>>, %arg15: memref<1x32xf32, #tpu.memory_space<vmem>>, %arg16: memref<1x32xf32, #tpu.memory_space<vmem>>, %arg17: memref<32x128xbf16, #tpu.memory_space<vmem>>, %arg18: memref<1x128xf32, #tpu.memory_space<vmem>>, %arg19: memref<128x32xbf16, #tpu.memory_space<vmem>>, %arg20: memref<1x32xf32, #tpu.memory_space<vmem>>, %arg21: memref<1x8x32xf32, #tpu.memory_space<vmem>>) attributes {dimension_semantics = [#tpu.dimension_semantics<parallel>, #tpu.dimension_semantics<arbitrary>], iteration_bounds = array<i64: 2, 1>, scalar_prefetch = 0 : i64, scratch_operands = 0 : i64, tpu.core_type = #tpu.core_type<tc>, window_params = [{transform_indices = @transform_0, window_bounds = array<i64: 1, 8, 32>}, {transform_indices = @transform_1, window_bounds = array<i64: 1, 8, 32>}, {transform_indices = @transform_2, window_bounds = array<i64: 1, 1, 8>}, {pipeline_mode = #tpu.pipeline_mode<synchronous>, transform_indices = @transform_3, window_bounds = array<i64: 32, 32>}, {pipeline_mode = #tpu.pipeline_mode<synchronous>, transform_indices = @transform_4, window_bounds = array<i64: 1, 32>}, {pipeline_mode = #tpu.pipeline_mode<synchronous>, transform_indices = @transform_5, window_bounds = array<i64: 32, 32>}, {pipeline_mode = #tpu.pipeline_mode<synchronous>, transform_indices = @transform_6, window_bounds = array<i64: 1, 32>}, {pipeline_mode = #tpu.pipeline_mode<synchronous>, transform_indices = @transform_7, window_bounds = array<i64: 32, 32>}, {pipeline_mode = #tpu.pipeline_mode<synchronous>, transform_indices = @transform_8, window_bounds = array<i64: 1, 32>}, {pipeline_mode = #tpu.pipeline_mode<synchronous>, transform_indices = @transform_9, window_bounds = array<i64: 32, 32>}, {pipeline_mode = #tpu.pipeline_mode<synchronous>, transform_indices = @transform_10, window_bounds = array<i64: 1, 32>}, {pipeline_mode = #tpu.pipeline_mode<synchronous>, transform_indices = @transform_11, window_bounds = array<i64: 1, 32>}, {pipeline_mode = #tpu.pipeline_mode<synchronous>, transform_indices = @transform_12, window_bounds = array<i64: 1, 32>}, {pipeline_mode = #tpu.pipeline_mode<synchronous>, transform_indices = @transform_13, window_bounds = array<i64: 1, 32>}, {pipeline_mode = #tpu.pipeline_mode<synchronous>, transform_indices = @transform_14, window_bounds = array<i64: 1, 32>}, {pipeline_mode = #tpu.pipeline_mode<synchronous>, transform_indices = @transform_15, window_bounds = array<i64: 32, 128>}, {pipeline_mode = #tpu.pipeline_mode<synchronous>, transform_indices = @transform_16, window_bounds = array<i64: 1, 128>}, {pipeline_mode = #tpu.pipeline_mode<synchronous>, transform_indices = @transform_17, window_bounds = array<i64: 128, 32>}, {pipeline_mode = #tpu.pipeline_mode<synchronous>, transform_indices = @transform_18, window_bounds = array<i64: 1, 32>}, {transform_indices = @transform_19, window_bounds = array<i64: 1, 8, 32>}]} {
    %c0 = arith.constant 0 : index
    %c0_0 = arith.constant 0 : index
    %c0_1 = arith.constant 0 : index
    %0 = vector.load %arg2[%c0, %c0_0, %c0_1] : memref<1x8x32xf32, #tpu.memory_space<vmem>>, vector<1x8x32xf32>
    %1 = vector.shape_cast %0 : vector<1x8x32xf32> to vector<8x32xf32>
    %c0_2 = arith.constant 0 : index
    %c0_3 = arith.constant 0 : index
    %c0_4 = arith.constant 0 : index
    %2 = vector.load %arg4[%c0_2, %c0_3, %c0_4] : memref<1x1x8xf32, #tpu.memory_space<vmem>>, vector<1x1x8xf32>
    %3 = vector.shape_cast %2 : vector<1x1x8xf32> to vector<1x8xf32>
    %c0_5 = arith.constant 0 : index
    %c0_6 = arith.constant 0 : index
    %4 = vector.load %arg13[%c0_5, %c0_6] : memref<1x32xf32, #tpu.memory_space<vmem>>, vector<1x32xf32>
    %5 = vector.shape_cast %4 : vector<1x32xf32> to vector<32xf32>
    %c0_7 = arith.constant 0 : index
    %c0_8 = arith.constant 0 : index
    %6 = vector.load %arg14[%c0_7, %c0_8] : memref<1x32xf32, #tpu.memory_space<vmem>>, vector<1x32xf32>
    %7 = vector.shape_cast %6 : vector<1x32xf32> to vector<32xf32>
    %c0_9 = arith.constant 0 : index
    %c0_10 = arith.constant 0 : index
    %8 = vector.load %arg15[%c0_9, %c0_10] : memref<1x32xf32, #tpu.memory_space<vmem>>, vector<1x32xf32>
    %9 = vector.shape_cast %8 : vector<1x32xf32> to vector<32xf32>
    %c0_11 = arith.constant 0 : index
    %c0_12 = arith.constant 0 : index
    %10 = vector.load %arg16[%c0_11, %c0_12] : memref<1x32xf32, #tpu.memory_space<vmem>>, vector<1x32xf32>
    %11 = vector.shape_cast %10 : vector<1x32xf32> to vector<32xf32>
    %c0_13 = arith.constant 0 : index
    %c0_14 = arith.constant 0 : index
    %12 = vector.load %arg6[%c0_13, %c0_14] : memref<1x32xf32, #tpu.memory_space<vmem>>, vector<1x32xf32>
    %13 = vector.shape_cast %12 : vector<1x32xf32> to vector<32xf32>
    %c0_15 = arith.constant 0 : index
    %c0_16 = arith.constant 0 : index
    %14 = vector.load %arg8[%c0_15, %c0_16] : memref<1x32xf32, #tpu.memory_space<vmem>>, vector<1x32xf32>
    %15 = vector.shape_cast %14 : vector<1x32xf32> to vector<32xf32>
    %c0_17 = arith.constant 0 : index
    %c0_18 = arith.constant 0 : index
    %16 = vector.load %arg10[%c0_17, %c0_18] : memref<1x32xf32, #tpu.memory_space<vmem>>, vector<1x32xf32>
    %17 = vector.shape_cast %16 : vector<1x32xf32> to vector<32xf32>
    %c0_19 = arith.constant 0 : index
    %c0_20 = arith.constant 0 : index
    %18 = vector.load %arg12[%c0_19, %c0_20] : memref<1x32xf32, #tpu.memory_space<vmem>>, vector<1x32xf32>
    %19 = vector.shape_cast %18 : vector<1x32xf32> to vector<32xf32>
    %c0_21 = arith.constant 0 : index
    %c0_22 = arith.constant 0 : index
    %20 = vector.load %arg18[%c0_21, %c0_22] : memref<1x128xf32, #tpu.memory_space<vmem>>, vector<1x128xf32>
    %21 = vector.shape_cast %20 : vector<1x128xf32> to vector<128xf32>
    %c0_23 = arith.constant 0 : index
    %c0_24 = arith.constant 0 : index
    %22 = vector.load %arg20[%c0_23, %c0_24] : memref<1x32xf32, #tpu.memory_space<vmem>>, vector<1x32xf32>
    %23 = vector.shape_cast %22 : vector<1x32xf32> to vector<32xf32>
    %c0_25 = arith.constant 0 : index
    %c0_26 = arith.constant 0 : index
    %24 = vector.load %arg11[%c0_25, %c0_26] : memref<32x32xbf16, #tpu.memory_space<vmem>>, vector<32x32xbf16>
    %cst = arith.constant dense<0.000000e+00> : vector<8xf32>
    %25 = vector.multi_reduction <add>, %1, %cst [1] : vector<8x32xf32> to vector<8xf32>
    %26 = vector.shape_cast %25 : vector<8xf32> to vector<8x1xf32>
    %cst_27 = arith.constant 3.200000e+01 : f32
    %27 = vector.broadcast %cst_27 : f32 to vector<8x1xf32>
    %28 = arith.divf %26, %27 : vector<8x1xf32>
    %29 = vector.broadcast %28 : vector<8x1xf32> to vector<8x32xf32>
    %30 = arith.subf %1, %29 : vector<8x32xf32>
    %31 = arith.mulf %30, %30 : vector<8x32xf32>
    %cst_28 = arith.constant dense<0.000000e+00> : vector<8xf32>
    %32 = vector.multi_reduction <add>, %31, %cst_28 [1] : vector<8x32xf32> to vector<8xf32>
    %33 = vector.shape_cast %32 : vector<8xf32> to vector<8x1xf32>
    %cst_29 = arith.constant 3.200000e+01 : f32
    %34 = vector.broadcast %cst_29 : f32 to vector<8x1xf32>
    %35 = arith.divf %33, %34 : vector<8x1xf32>
    %36 = vector.broadcast %28 : vector<8x1xf32> to vector<8x32xf32>
    %37 = arith.subf %1, %36 : vector<8x32xf32>
    %cst_30 = arith.constant 9.99999974E-6 : f32
    %38 = vector.broadcast %cst_30 : f32 to vector<8x1xf32>
    %39 = arith.addf %35, %38 : vector<8x1xf32>
    %40 = math.rsqrt %39 : vector<8x1xf32>
    %41 = vector.broadcast %40 : vector<8x1xf32> to vector<8x32xf32>
    %42 = arith.mulf %37, %41 : vector<8x32xf32>
    %43 = vector.shape_cast %5 : vector<32xf32> to vector<1x32xf32>
    %44 = vector.broadcast %43 : vector<1x32xf32> to vector<8x32xf32>
    %45 = arith.mulf %42, %44 : vector<8x32xf32>
    %46 = vector.shape_cast %7 : vector<32xf32> to vector<1x32xf32>
    %47 = vector.broadcast %46 : vector<1x32xf32> to vector<8x32xf32>
    %48 = arith.addf %45, %47 : vector<8x32xf32>
    %49 = arith.truncf %48 : vector<8x32xf32> to vector<8x32xbf16>
    %c0_31 = arith.constant 0 : index
    %c0_32 = arith.constant 0 : index
    %50 = vector.load %arg5[%c0_31, %c0_32] : memref<32x32xbf16, #tpu.memory_space<vmem>>, vector<32x32xbf16>
    %cst_33 = arith.constant dense<0.000000e+00> : vector<8x32xf32>
    %51 = tpu.matmul %49, %50, %cst_33 {dimension_numbers = #tpu.dot_dimension_numbers<[1], [0], [0], [1], [0, 0, 1, 1], [], []>} : vector<8x32xbf16>, vector<32x32xbf16>, vector<8x32xf32> -> vector<8x32xf32>
    %52 = vector.shape_cast %13 : vector<32xf32> to vector<1x32xf32>
    %53 = vector.broadcast %52 : vector<1x32xf32> to vector<8x32xf32>
    %54 = arith.addf %51, %53 : vector<8x32xf32>
    %c0_34 = arith.constant 0 : index
    %c0_35 = arith.constant 0 : index
    %55 = vector.load %arg7[%c0_34, %c0_35] : memref<32x32xbf16, #tpu.memory_space<vmem>>, vector<32x32xbf16>
    %cst_36 = arith.constant dense<0.000000e+00> : vector<8x32xf32>
    %56 = tpu.matmul %49, %55, %cst_36 {dimension_numbers = #tpu.dot_dimension_numbers<[1], [0], [0], [1], [0, 0, 1, 1], [], []>} : vector<8x32xbf16>, vector<32x32xbf16>, vector<8x32xf32> -> vector<8x32xf32>
    %57 = vector.shape_cast %15 : vector<32xf32> to vector<1x32xf32>
    %58 = vector.broadcast %57 : vector<1x32xf32> to vector<8x32xf32>
    %59 = arith.addf %56, %58 : vector<8x32xf32>
    %c0_37 = arith.constant 0 : index
    %c0_38 = arith.constant 0 : index
    %60 = vector.load %arg9[%c0_37, %c0_38] : memref<32x32xbf16, #tpu.memory_space<vmem>>, vector<32x32xbf16>
    %cst_39 = arith.constant dense<0.000000e+00> : vector<8x32xf32>
    %61 = tpu.matmul %49, %60, %cst_39 {dimension_numbers = #tpu.dot_dimension_numbers<[1], [0], [0], [1], [0, 0, 1, 1], [], []>} : vector<8x32xbf16>, vector<32x32xbf16>, vector<8x32xf32> -> vector<8x32xf32>
    %62 = vector.shape_cast %17 : vector<32xf32> to vector<1x32xf32>
    %63 = vector.broadcast %62 : vector<1x32xf32> to vector<8x32xf32>
    %64 = arith.addf %61, %63 : vector<8x32xf32>
    %65 = arith.truncf %54 : vector<8x32xf32> to vector<8x32xbf16>
    %66 = arith.truncf %59 : vector<8x32xf32> to vector<8x32xbf16>
    %67 = arith.truncf %64 : vector<8x32xf32> to vector<8x32xbf16>
    %cst_40 = arith.constant 0.000000e+00 : f32
    %68 = vector.broadcast %cst_40 : f32 to vector<8x32xf32>
    %69 = vector.extract_strided_slice %65 {offsets = [0, 0], sizes = [8, 8], strides = [1, 1]} : vector<8x32xbf16> to vector<8x8xbf16>
    %70 = vector.extract_strided_slice %66 {offsets = [0, 0], sizes = [8, 8], strides = [1, 1]} : vector<8x32xbf16> to vector<8x8xbf16>
    %71 = vector.extract_strided_slice %67 {offsets = [0, 0], sizes = [8, 8], strides = [1, 1]} : vector<8x32xbf16> to vector<8x8xbf16>
    %cst_41 = arith.constant dense<0.000000e+00> : vector<8x8xf32>
    %72 = tpu.matmul %69, %70, %cst_41 {dimension_numbers = #tpu.dot_dimension_numbers<[1], [1], [0], [0], [0, 0, 1, 0], [], []>} : vector<8x8xbf16>, vector<8x8xbf16>, vector<8x8xf32> -> vector<8x8xf32>
    %cst_42 = arith.constant 0.353553385 : f32
    %73 = vector.broadcast %cst_42 : f32 to vector<8x8xf32>
    %74 = arith.mulf %72, %73 : vector<8x8xf32>
    %75 = vector.broadcast %3 : vector<1x8xf32> to vector<8x8xf32>
    %76 = arith.addf %74, %75 : vector<8x8xf32>
    %cst_43 = arith.constant dense<0xFF800000> : vector<8xf32>
    %77 = vector.multi_reduction <maximumf>, %76, %cst_43 [1] : vector<8x8xf32> to vector<8xf32>
    %78 = vector.shape_cast %77 : vector<8xf32> to vector<8x1xf32>
    %79 = vector.broadcast %78 : vector<8x1xf32> to vector<8x8xf32>
    %80 = arith.subf %76, %79 : vector<8x8xf32>
    %81 = math.exp %80 : vector<8x8xf32>
    %cst_44 = arith.constant dense<0.000000e+00> : vector<8xf32>
    %82 = vector.multi_reduction <add>, %81, %cst_44 [1] : vector<8x8xf32> to vector<8xf32>
    %83 = vector.shape_cast %82 : vector<8xf32> to vector<8x1xf32>
    %84 = tpu.reciprocal %83 {approx = true} : vector<8x1xf32> -> vector<8x1xf32>
    %85 = vector.broadcast %84 : vector<8x1xf32> to vector<8x8xf32>
    %86 = arith.mulf %81, %85 : vector<8x8xf32>
    %87 = arith.truncf %86 : vector<8x8xf32> to vector<8x8xbf16>
    %cst_45 = arith.constant dense<0.000000e+00> : vector<8x8xf32>
    %88 = tpu.matmul %87, %71, %cst_45 {dimension_numbers = #tpu.dot_dimension_numbers<[1], [0], [0], [1], [0, 0, 1, 1], [], []>} : vector<8x8xbf16>, vector<8x8xbf16>, vector<8x8xf32> -> vector<8x8xf32>
    %89 = arith.truncf %88 : vector<8x8xf32> to vector<8x8xbf16>
    %90 = vector.extract_strided_slice %24 {offsets = [0, 0], sizes = [8, 32], strides = [1, 1]} : vector<32x32xbf16> to vector<8x32xbf16>
    %cst_46 = arith.constant dense<0.000000e+00> : vector<8x32xf32>
    %91 = tpu.matmul %89, %90, %cst_46 {dimension_numbers = #tpu.dot_dimension_numbers<[1], [0], [0], [1], [0, 0, 1, 1], [], []>} : vector<8x8xbf16>, vector<8x32xbf16>, vector<8x32xf32> -> vector<8x32xf32>
    %92 = arith.addf %68, %91 : vector<8x32xf32>
    %93 = vector.extract_strided_slice %65 {offsets = [0, 8], sizes = [8, 8], strides = [1, 1]} : vector<8x32xbf16> to vector<8x8xbf16>
    %94 = vector.extract_strided_slice %66 {offsets = [0, 8], sizes = [8, 8], strides = [1, 1]} : vector<8x32xbf16> to vector<8x8xbf16>
    %95 = vector.extract_strided_slice %67 {offsets = [0, 8], sizes = [8, 8], strides = [1, 1]} : vector<8x32xbf16> to vector<8x8xbf16>
    %cst_47 = arith.constant dense<0.000000e+00> : vector<8x8xf32>
    %96 = tpu.matmul %93, %94, %cst_47 {dimension_numbers = #tpu.dot_dimension_numbers<[1], [1], [0], [0], [0, 0, 1, 0], [], []>} : vector<8x8xbf16>, vector<8x8xbf16>, vector<8x8xf32> -> vector<8x8xf32>
    %cst_48 = arith.constant 0.353553385 : f32
    %97 = vector.broadcast %cst_48 : f32 to vector<8x8xf32>
    %98 = arith.mulf %96, %97 : vector<8x8xf32>
    %99 = vector.broadcast %3 : vector<1x8xf32> to vector<8x8xf32>
    %100 = arith.addf %98, %99 : vector<8x8xf32>
    %cst_49 = arith.constant dense<0xFF800000> : vector<8xf32>
    %101 = vector.multi_reduction <maximumf>, %100, %cst_49 [1] : vector<8x8xf32> to vector<8xf32>
    %102 = vector.shape_cast %101 : vector<8xf32> to vector<8x1xf32>
    %103 = vector.broadcast %102 : vector<8x1xf32> to vector<8x8xf32>
    %104 = arith.subf %100, %103 : vector<8x8xf32>
    %105 = math.exp %104 : vector<8x8xf32>
    %cst_50 = arith.constant dense<0.000000e+00> : vector<8xf32>
    %106 = vector.multi_reduction <add>, %105, %cst_50 [1] : vector<8x8xf32> to vector<8xf32>
    %107 = vector.shape_cast %106 : vector<8xf32> to vector<8x1xf32>
    %108 = tpu.reciprocal %107 {approx = true} : vector<8x1xf32> -> vector<8x1xf32>
    %109 = vector.broadcast %108 : vector<8x1xf32> to vector<8x8xf32>
    %110 = arith.mulf %105, %109 : vector<8x8xf32>
    %111 = arith.truncf %110 : vector<8x8xf32> to vector<8x8xbf16>
    %cst_51 = arith.constant dense<0.000000e+00> : vector<8x8xf32>
    %112 = tpu.matmul %111, %95, %cst_51 {dimension_numbers = #tpu.dot_dimension_numbers<[1], [0], [0], [1], [0, 0, 1, 1], [], []>} : vector<8x8xbf16>, vector<8x8xbf16>, vector<8x8xf32> -> vector<8x8xf32>
    %113 = arith.truncf %112 : vector<8x8xf32> to vector<8x8xbf16>
    %114 = vector.extract_strided_slice %24 {offsets = [8, 0], sizes = [8, 32], strides = [1, 1]} : vector<32x32xbf16> to vector<8x32xbf16>
    %cst_52 = arith.constant dense<0.000000e+00> : vector<8x32xf32>
    %115 = tpu.matmul %113, %114, %cst_52 {dimension_numbers = #tpu.dot_dimension_numbers<[1], [0], [0], [1], [0, 0, 1, 1], [], []>} : vector<8x8xbf16>, vector<8x32xbf16>, vector<8x32xf32> -> vector<8x32xf32>
    %116 = arith.addf %92, %115 : vector<8x32xf32>
    %117 = vector.extract_strided_slice %65 {offsets = [0, 16], sizes = [8, 8], strides = [1, 1]} : vector<8x32xbf16> to vector<8x8xbf16>
    %118 = vector.extract_strided_slice %66 {offsets = [0, 16], sizes = [8, 8], strides = [1, 1]} : vector<8x32xbf16> to vector<8x8xbf16>
    %119 = vector.extract_strided_slice %67 {offsets = [0, 16], sizes = [8, 8], strides = [1, 1]} : vector<8x32xbf16> to vector<8x8xbf16>
    %cst_53 = arith.constant dense<0.000000e+00> : vector<8x8xf32>
    %120 = tpu.matmul %117, %118, %cst_53 {dimension_numbers = #tpu.dot_dimension_numbers<[1], [1], [0], [0], [0, 0, 1, 0], [], []>} : vector<8x8xbf16>, vector<8x8xbf16>, vector<8x8xf32> -> vector<8x8xf32>
    %cst_54 = arith.constant 0.353553385 : f32
    %121 = vector.broadcast %cst_54 : f32 to vector<8x8xf32>
    %122 = arith.mulf %120, %121 : vector<8x8xf32>
    %123 = vector.broadcast %3 : vector<1x8xf32> to vector<8x8xf32>
    %124 = arith.addf %122, %123 : vector<8x8xf32>
    %cst_55 = arith.constant dense<0xFF800000> : vector<8xf32>
    %125 = vector.multi_reduction <maximumf>, %124, %cst_55 [1] : vector<8x8xf32> to vector<8xf32>
    %126 = vector.shape_cast %125 : vector<8xf32> to vector<8x1xf32>
    %127 = vector.broadcast %126 : vector<8x1xf32> to vector<8x8xf32>
    %128 = arith.subf %124, %127 : vector<8x8xf32>
    %129 = math.exp %128 : vector<8x8xf32>
    %cst_56 = arith.constant dense<0.000000e+00> : vector<8xf32>
    %130 = vector.multi_reduction <add>, %129, %cst_56 [1] : vector<8x8xf32> to vector<8xf32>
    %131 = vector.shape_cast %130 : vector<8xf32> to vector<8x1xf32>
    %132 = tpu.reciprocal %131 {approx = true} : vector<8x1xf32> -> vector<8x1xf32>
    %133 = vector.broadcast %132 : vector<8x1xf32> to vector<8x8xf32>
    %134 = arith.mulf %129, %133 : vector<8x8xf32>
    %135 = arith.truncf %134 : vector<8x8xf32> to vector<8x8xbf16>
    %cst_57 = arith.constant dense<0.000000e+00> : vector<8x8xf32>
    %136 = tpu.matmul %135, %119, %cst_57 {dimension_numbers = #tpu.dot_dimension_numbers<[1], [0], [0], [1], [0, 0, 1, 1], [], []>} : vector<8x8xbf16>, vector<8x8xbf16>, vector<8x8xf32> -> vector<8x8xf32>
    %137 = arith.truncf %136 : vector<8x8xf32> to vector<8x8xbf16>
    %138 = vector.extract_strided_slice %24 {offsets = [16, 0], sizes = [8, 32], strides = [1, 1]} : vector<32x32xbf16> to vector<8x32xbf16>
    %cst_58 = arith.constant dense<0.000000e+00> : vector<8x32xf32>
    %139 = tpu.matmul %137, %138, %cst_58 {dimension_numbers = #tpu.dot_dimension_numbers<[1], [0], [0], [1], [0, 0, 1, 1], [], []>} : vector<8x8xbf16>, vector<8x32xbf16>, vector<8x32xf32> -> vector<8x32xf32>
    %140 = arith.addf %116, %139 : vector<8x32xf32>
    %141 = vector.extract_strided_slice %65 {offsets = [0, 24], sizes = [8, 8], strides = [1, 1]} : vector<8x32xbf16> to vector<8x8xbf16>
    %142 = vector.extract_strided_slice %66 {offsets = [0, 24], sizes = [8, 8], strides = [1, 1]} : vector<8x32xbf16> to vector<8x8xbf16>
    %143 = vector.extract_strided_slice %67 {offsets = [0, 24], sizes = [8, 8], strides = [1, 1]} : vector<8x32xbf16> to vector<8x8xbf16>
    %cst_59 = arith.constant dense<0.000000e+00> : vector<8x8xf32>
    %144 = tpu.matmul %141, %142, %cst_59 {dimension_numbers = #tpu.dot_dimension_numbers<[1], [1], [0], [0], [0, 0, 1, 0], [], []>} : vector<8x8xbf16>, vector<8x8xbf16>, vector<8x8xf32> -> vector<8x8xf32>
    %cst_60 = arith.constant 0.353553385 : f32
    %145 = vector.broadcast %cst_60 : f32 to vector<8x8xf32>
    %146 = arith.mulf %144, %145 : vector<8x8xf32>
    %147 = vector.broadcast %3 : vector<1x8xf32> to vector<8x8xf32>
    %148 = arith.addf %146, %147 : vector<8x8xf32>
    %cst_61 = arith.constant dense<0xFF800000> : vector<8xf32>
    %149 = vector.multi_reduction <maximumf>, %148, %cst_61 [1] : vector<8x8xf32> to vector<8xf32>
    %150 = vector.shape_cast %149 : vector<8xf32> to vector<8x1xf32>
    %151 = vector.broadcast %150 : vector<8x1xf32> to vector<8x8xf32>
    %152 = arith.subf %148, %151 : vector<8x8xf32>
    %153 = math.exp %152 : vector<8x8xf32>
    %cst_62 = arith.constant dense<0.000000e+00> : vector<8xf32>
    %154 = vector.multi_reduction <add>, %153, %cst_62 [1] : vector<8x8xf32> to vector<8xf32>
    %155 = vector.shape_cast %154 : vector<8xf32> to vector<8x1xf32>
    %156 = tpu.reciprocal %155 {approx = true} : vector<8x1xf32> -> vector<8x1xf32>
    %157 = vector.broadcast %156 : vector<8x1xf32> to vector<8x8xf32>
    %158 = arith.mulf %153, %157 : vector<8x8xf32>
    %159 = arith.truncf %158 : vector<8x8xf32> to vector<8x8xbf16>
    %cst_63 = arith.constant dense<0.000000e+00> : vector<8x8xf32>
    %160 = tpu.matmul %159, %143, %cst_63 {dimension_numbers = #tpu.dot_dimension_numbers<[1], [0], [0], [1], [0, 0, 1, 1], [], []>} : vector<8x8xbf16>, vector<8x8xbf16>, vector<8x8xf32> -> vector<8x8xf32>
    %161 = arith.truncf %160 : vector<8x8xf32> to vector<8x8xbf16>
    %162 = vector.extract_strided_slice %24 {offsets = [24, 0], sizes = [8, 32], strides = [1, 1]} : vector<32x32xbf16> to vector<8x32xbf16>
    %cst_64 = arith.constant dense<0.000000e+00> : vector<8x32xf32>
    %163 = tpu.matmul %161, %162, %cst_64 {dimension_numbers = #tpu.dot_dimension_numbers<[1], [0], [0], [1], [0, 0, 1, 1], [], []>} : vector<8x8xbf16>, vector<8x32xbf16>, vector<8x32xf32> -> vector<8x32xf32>
    %164 = arith.addf %140, %163 : vector<8x32xf32>
    %165 = arith.addf %1, %164 : vector<8x32xf32>
    %166 = vector.shape_cast %19 : vector<32xf32> to vector<1x32xf32>
    %167 = vector.broadcast %166 : vector<1x32xf32> to vector<8x32xf32>
    %168 = arith.addf %165, %167 : vector<8x32xf32>
    %cst_65 = arith.constant dense<0.000000e+00> : vector<8xf32>
    %169 = vector.multi_reduction <add>, %168, %cst_65 [1] : vector<8x32xf32> to vector<8xf32>
    %170 = vector.shape_cast %169 : vector<8xf32> to vector<8x1xf32>
    %cst_66 = arith.constant 3.200000e+01 : f32
    %171 = vector.broadcast %cst_66 : f32 to vector<8x1xf32>
    %172 = arith.divf %170, %171 : vector<8x1xf32>
    %173 = vector.broadcast %172 : vector<8x1xf32> to vector<8x32xf32>
    %174 = arith.subf %168, %173 : vector<8x32xf32>
    %175 = arith.mulf %174, %174 : vector<8x32xf32>
    %cst_67 = arith.constant dense<0.000000e+00> : vector<8xf32>
    %176 = vector.multi_reduction <add>, %175, %cst_67 [1] : vector<8x32xf32> to vector<8xf32>
    %177 = vector.shape_cast %176 : vector<8xf32> to vector<8x1xf32>
    %cst_68 = arith.constant 3.200000e+01 : f32
    %178 = vector.broadcast %cst_68 : f32 to vector<8x1xf32>
    %179 = arith.divf %177, %178 : vector<8x1xf32>
    %180 = vector.broadcast %172 : vector<8x1xf32> to vector<8x32xf32>
    %181 = arith.subf %168, %180 : vector<8x32xf32>
    %cst_69 = arith.constant 9.99999974E-6 : f32
    %182 = vector.broadcast %cst_69 : f32 to vector<8x1xf32>
    %183 = arith.addf %179, %182 : vector<8x1xf32>
    %184 = math.rsqrt %183 : vector<8x1xf32>
    %185 = vector.broadcast %184 : vector<8x1xf32> to vector<8x32xf32>
    %186 = arith.mulf %181, %185 : vector<8x32xf32>
    %187 = vector.shape_cast %9 : vector<32xf32> to vector<1x32xf32>
    %188 = vector.broadcast %187 : vector<1x32xf32> to vector<8x32xf32>
    %189 = arith.mulf %186, %188 : vector<8x32xf32>
    %190 = vector.shape_cast %11 : vector<32xf32> to vector<1x32xf32>
    %191 = vector.broadcast %190 : vector<1x32xf32> to vector<8x32xf32>
    %192 = arith.addf %189, %191 : vector<8x32xf32>
    %193 = arith.truncf %192 : vector<8x32xf32> to vector<8x32xbf16>
    %c0_70 = arith.constant 0 : index
    %c0_71 = arith.constant 0 : index
    %194 = vector.load %arg17[%c0_70, %c0_71] : memref<32x128xbf16, #tpu.memory_space<vmem>>, vector<32x128xbf16>
    %cst_72 = arith.constant dense<0.000000e+00> : vector<8x128xf32>
    %195 = tpu.matmul %193, %194, %cst_72 {dimension_numbers = #tpu.dot_dimension_numbers<[1], [0], [0], [1], [0, 0, 1, 1], [], []>} : vector<8x32xbf16>, vector<32x128xbf16>, vector<8x128xf32> -> vector<8x128xf32>
    %196 = vector.shape_cast %21 : vector<128xf32> to vector<1x128xf32>
    %197 = vector.broadcast %196 : vector<1x128xf32> to vector<8x128xf32>
    %198 = arith.addf %195, %197 : vector<8x128xf32>
    %cst_73 = arith.constant 5.000000e-01 : f32
    %199 = vector.broadcast %cst_73 : f32 to vector<8x128xf32>
    %200 = arith.mulf %199, %198 : vector<8x128xf32>
    %cst_74 = arith.constant 4.471500e-02 : f32
    %201 = vector.broadcast %cst_74 : f32 to vector<8x128xf32>
    %202 = arith.mulf %201, %198 : vector<8x128xf32>
    %203 = arith.mulf %202, %198 : vector<8x128xf32>
    %204 = arith.mulf %203, %198 : vector<8x128xf32>
    %205 = arith.addf %198, %204 : vector<8x128xf32>
    %cst_75 = arith.constant 0.797884583 : f32
    %206 = vector.broadcast %cst_75 : f32 to vector<8x128xf32>
    %207 = arith.mulf %206, %205 : vector<8x128xf32>
    %208 = math.tanh %207 : vector<8x128xf32>
    %cst_76 = arith.constant 1.000000e+00 : f32
    %209 = vector.broadcast %cst_76 : f32 to vector<8x128xf32>
    %210 = arith.addf %209, %208 : vector<8x128xf32>
    %211 = arith.mulf %200, %210 : vector<8x128xf32>
    %212 = arith.truncf %211 : vector<8x128xf32> to vector<8x128xbf16>
    %c0_77 = arith.constant 0 : index
    %c0_78 = arith.constant 0 : index
    %213 = vector.load %arg19[%c0_77, %c0_78] : memref<128x32xbf16, #tpu.memory_space<vmem>>, vector<128x32xbf16>
    %cst_79 = arith.constant dense<0.000000e+00> : vector<8x32xf32>
    %214 = tpu.matmul %212, %213, %cst_79 {dimension_numbers = #tpu.dot_dimension_numbers<[1], [0], [0], [1], [0, 0, 1, 1], [], []>} : vector<8x128xbf16>, vector<128x32xbf16>, vector<8x32xf32> -> vector<8x32xf32>
    %215 = vector.shape_cast %23 : vector<32xf32> to vector<1x32xf32>
    %216 = vector.broadcast %215 : vector<1x32xf32> to vector<8x32xf32>
    %217 = arith.addf %214, %216 : vector<8x32xf32>
    %218 = arith.addf %168, %217 : vector<8x32xf32>
    %c0_80 = arith.constant 0 : index
    %c0_81 = arith.constant 0 : index
    %c0_82 = arith.constant 0 : index
    %219 = vector.load %arg21[%c0_80, %c0_81, %c0_82] : memref<1x8x32xf32, #tpu.memory_space<vmem>>, vector<1x8x32xf32>
    %220 = vector.shape_cast %219 : vector<1x8x32xf32> to vector<8x32xf32>
    %221 = vector.shape_cast %218 : vector<8x32xf32> to vector<1x8x32xf32>
    tpu.vector_store %arg21[%c0_80, %c0_81, %c0_82], %221 {strides = array<i32>} : memref<1x8x32xf32, #tpu.memory_space<vmem>>, vector<1x8x32xf32>,
    return
  }
  func.func @transform_0(%arg0: i32, %arg1: i32) -> (i32, i32, i32) {
    %c0_i32 = arith.constant 0 : i32
    %c0_i32_0 = arith.constant 0 : i32
    return %arg0, %arg1, %c0_i32 : i32, i32, i32
  }
  func.func @transform_1(%arg0: i32, %arg1: i32) -> (i32, i32, i32) {
    %c0_i32 = arith.constant 0 : i32
    %c0_i32_0 = arith.constant 0 : i32
    %c0_i32_1 = arith.constant 0 : i32
    return %arg0, %c0_i32, %c0_i32_0 : i32, i32, i32
  }
  func.func @transform_2(%arg0: i32, %arg1: i32) -> (i32, i32, i32) {
    %c0_i32 = arith.constant 0 : i32
    %c0_i32_0 = arith.constant 0 : i32
    %c0_i32_1 = arith.constant 0 : i32
    return %arg0, %c0_i32, %c0_i32_0 : i32, i32, i32
  }
  func.func @transform_3(%arg0: i32, %arg1: i32) -> (i32, i32) {
    %c0_i32 = arith.constant 0 : i32
    %c0_i32_0 = arith.constant 0 : i32
    %c0_i32_1 = arith.constant 0 : i32
    return %c0_i32, %c0_i32_0 : i32, i32
  }
  func.func @transform_4(%arg0: i32, %arg1: i32) -> (i32, i32) {
    %c0_i32 = arith.constant 0 : i32
    %c0_i32_0 = arith.constant 0 : i32
    %c0_i32_1 = arith.constant 0 : i32
    return %c0_i32, %c0_i32_0 : i32, i32
  }
  func.func @transform_5(%arg0: i32, %arg1: i32) -> (i32, i32) {
    %c0_i32 = arith.constant 0 : i32
    %c0_i32_0 = arith.constant 0 : i32
    %c0_i32_1 = arith.constant 0 : i32
    return %c0_i32, %c0_i32_0 : i32, i32
  }
  func.func @transform_6(%arg0: i32, %arg1: i32) -> (i32, i32) {
    %c0_i32 = arith.constant 0 : i32
    %c0_i32_0 = arith.constant 0 : i32
    %c0_i32_1 = arith.constant 0 : i32
    return %c0_i32, %c0_i32_0 : i32, i32
  }
  func.func @transform_7(%arg0: i32, %arg1: i32) -> (i32, i32) {
    %c0_i32 = arith.constant 0 : i32
    %c0_i32_0 = arith.constant 0 : i32
    %c0_i32_1 = arith.constant 0 : i32
    return %c0_i32, %c0_i32_0 : i32, i32
  }
  func.func @transform_8(%arg0: i32, %arg1: i32) -> (i32, i32) {
    %c0_i32 = arith.constant 0 : i32
    %c0_i32_0 = arith.constant 0 : i32
    %c0_i32_1 = arith.constant 0 : i32
    return %c0_i32, %c0_i32_0 : i32, i32
  }
  func.func @transform_9(%arg0: i32, %arg1: i32) -> (i32, i32) {
    %c0_i32 = arith.constant 0 : i32
    %c0_i32_0 = arith.constant 0 : i32
    %c0_i32_1 = arith.constant 0 : i32
    return %c0_i32, %c0_i32_0 : i32, i32
  }
  func.func @transform_10(%arg0: i32, %arg1: i32) -> (i32, i32) {
    %c0_i32 = arith.constant 0 : i32
    %c0_i32_0 = arith.constant 0 : i32
    %c0_i32_1 = arith.constant 0 : i32
    return %c0_i32, %c0_i32_0 : i32, i32
  }
  func.func @transform_11(%arg0: i32, %arg1: i32) -> (i32, i32) {
    %c0_i32 = arith.constant 0 : i32
    %c0_i32_0 = arith.constant 0 : i32
    %c0_i32_1 = arith.constant 0 : i32
    return %c0_i32, %c0_i32_0 : i32, i32
  }
  func.func @transform_12(%arg0: i32, %arg1: i32) -> (i32, i32) {
    %c0_i32 = arith.constant 0 : i32
    %c0_i32_0 = arith.constant 0 : i32
    %c0_i32_1 = arith.constant 0 : i32
    return %c0_i32, %c0_i32_0 : i32, i32
  }
  func.func @transform_13(%arg0: i32, %arg1: i32) -> (i32, i32) {
    %c0_i32 = arith.constant 0 : i32
    %c0_i32_0 = arith.constant 0 : i32
    %c0_i32_1 = arith.constant 0 : i32
    return %c0_i32, %c0_i32_0 : i32, i32
  }
  func.func @transform_14(%arg0: i32, %arg1: i32) -> (i32, i32) {
    %c0_i32 = arith.constant 0 : i32
    %c0_i32_0 = arith.constant 0 : i32
    %c0_i32_1 = arith.constant 0 : i32
    return %c0_i32, %c0_i32_0 : i32, i32
  }
  func.func @transform_15(%arg0: i32, %arg1: i32) -> (i32, i32) {
    %c0_i32 = arith.constant 0 : i32
    %c0_i32_0 = arith.constant 0 : i32
    %c0_i32_1 = arith.constant 0 : i32
    return %c0_i32, %c0_i32_0 : i32, i32
  }
  func.func @transform_16(%arg0: i32, %arg1: i32) -> (i32, i32) {
    %c0_i32 = arith.constant 0 : i32
    %c0_i32_0 = arith.constant 0 : i32
    %c0_i32_1 = arith.constant 0 : i32
    return %c0_i32, %c0_i32_0 : i32, i32
  }
  func.func @transform_17(%arg0: i32, %arg1: i32) -> (i32, i32) {
    %c0_i32 = arith.constant 0 : i32
    %c0_i32_0 = arith.constant 0 : i32
    %c0_i32_1 = arith.constant 0 : i32
    return %c0_i32, %c0_i32_0 : i32, i32
  }
  func.func @transform_18(%arg0: i32, %arg1: i32) -> (i32, i32) {
    %c0_i32 = arith.constant 0 : i32
    %c0_i32_0 = arith.constant 0 : i32
    %c0_i32_1 = arith.constant 0 : i32
    return %c0_i32, %c0_i32_0 : i32, i32
  }
  func.func @transform_19(%arg0: i32, %arg1: i32) -> (i32, i32, i32) {
    %c0_i32 = arith.constant 0 : i32
    %c0_i32_0 = arith.constant 0 : i32
    return %arg0, %arg1, %c0_i32 : i32, i32, i32
  }
}

module attributes {stable_mosaic.version = 11 : i64} {
  func.func @transformer_block_kernel(%arg0: i32, %arg1: i32, %arg2: memref<1x8x32xf32, #tpu.memory_space<vmem>>, %arg3: memref<1x8x32xf32, #tpu.memory_space<vmem>>, %arg4: memref<1x1x8xf32, #tpu.memory_space<vmem>>, %arg5: memref<32x32xbf16, #tpu.memory_space<vmem>>, %arg6: memref<1x32xf32, #tpu.memory_space<vmem>>, %arg7: memref<32x32xbf16, #tpu.memory_space<vmem>>, %arg8: memref<1x32xf32, #tpu.memory_space<vmem>>, %arg9: memref<32x32xbf16, #tpu.memory_space<vmem>>, %arg10: memref<1x32xf32, #tpu.memory_space<vmem>>, %arg11: memref<32x32xbf16, #tpu.memory_space<vmem>>, %arg12: memref<1x32xf32, #tpu.memory_space<vmem>>, %arg13: memref<1x32xf32, #tpu.memory_space<vmem>>, %arg14: memref<1x32xf32, #tpu.memory_space<vmem>>, %arg15: memref<1x32xf32, #tpu.memory_space<vmem>>, %arg16: memref<1x32xf32, #tpu.memory_space<vmem>>, %arg17: memref<32x128xbf16, #tpu.memory_space<vmem>>, %arg18: memref<1x128xf32, #tpu.memory_space<vmem>>, %arg19: memref<128x32xbf16, #tpu.memory_space<vmem>>, %arg20: memref<1x32xf32, #tpu.memory_space<vmem>>, %arg21: memref<1x8x32xf32, #tpu.memory_space<vmem>>) attributes {dimension_semantics = [#tpu.dimension_semantics<parallel>, #tpu.dimension_semantics<arbitrary>], iteration_bounds = array<i64: 2, 1>, scalar_prefetch = 0 : i64, scratch_operands = 0 : i64, tpu.core_type = #tpu.core_type<tc>, window_params = [{transform_indices = @transform_0, window_bounds = array<i64: 1, 8, 32>}, {transform_indices = @transform_1, window_bounds = array<i64: 1, 8, 32>}, {transform_indices = @transform_2, window_bounds = array<i64: 1, 1, 8>}, {pipeline_mode = #tpu.pipeline_mode<synchronous>, transform_indices = @transform_3, window_bounds = array<i64: 32, 32>}, {pipeline_mode = #tpu.pipeline_mode<synchronous>, transform_indices = @transform_4, window_bounds = array<i64: 1, 32>}, {pipeline_mode = #tpu.pipeline_mode<synchronous>, transform_indices = @transform_5, window_bounds = array<i64: 32, 32>}, {pipeline_mode = #tpu.pipeline_mode<synchronous>, transform_indices = @transform_6, window_bounds = array<i64: 1, 32>}, {pipeline_mode = #tpu.pipeline_mode<synchronous>, transform_indices = @transform_7, window_bounds = array<i64: 32, 32>}, {pipeline_mode = #tpu.pipeline_mode<synchronous>, transform_indices = @transform_8, window_bounds = array<i64: 1, 32>}, {pipeline_mode = #tpu.pipeline_mode<synchronous>, transform_indices = @transform_9, window_bounds = array<i64: 32, 32>}, {pipeline_mode = #tpu.pipeline_mode<synchronous>, transform_indices = @transform_10, window_bounds = array<i64: 1, 32>}, {pipeline_mode = #tpu.pipeline_mode<synchronous>, transform_indices = @transform_11, window_bounds = array<i64: 1, 32>}, {pipeline_mode = #tpu.pipeline_mode<synchronous>, transform_indices = @transform_12, window_bounds = array<i64: 1, 32>}, {pipeline_mode = #tpu.pipeline_mode<synchronous>, transform_indices = @transform_13, window_bounds = array<i64: 1, 32>}, {pipeline_mode = #tpu.pipeline_mode<synchronous>, transform_indices = @transform_14, window_bounds = array<i64: 1, 32>}, {pipeline_mode = #tpu.pipeline_mode<synchronous>, transform_indices = @transform_15, window_bounds = array<i64: 32, 128>}, {pipeline_mode = #tpu.pipeline_mode<synchronous>, transform_indices = @transform_16, window_bounds = array<i64: 1, 128>}, {pipeline_mode = #tpu.pipeline_mode<synchronous>, transform_indices = @transform_17, window_bounds = array<i64: 128, 32>}, {pipeline_mode = #tpu.pipeline_mode<synchronous>, transform_indices = @transform_18, window_bounds = array<i64: 1, 32>}, {transform_indices = @transform_19, window_bounds = array<i64: 1, 8, 32>}]} {
    %c0 = arith.constant 0 : index
    %c0_0 = arith.constant 0 : index
    %c0_1 = arith.constant 0 : index
    %0 = vector.load %arg2[%c0, %c0_0, %c0_1] : memref<1x8x32xf32, #tpu.memory_space<vmem>>, vector<1x8x32xf32>
    %1 = vector.shape_cast %0 : vector<1x8x32xf32> to vector<8x32xf32>
    %c0_2 = arith.constant 0 : index
    %c0_3 = arith.constant 0 : index
    %c0_4 = arith.constant 0 : index
    %2 = vector.load %arg4[%c0_2, %c0_3, %c0_4] : memref<1x1x8xf32, #tpu.memory_space<vmem>>, vector<1x1x8xf32>
    %3 = vector.shape_cast %2 : vector<1x1x8xf32> to vector<1x8xf32>
    %c0_5 = arith.constant 0 : index
    %c0_6 = arith.constant 0 : index
    %4 = vector.load %arg13[%c0_5, %c0_6] : memref<1x32xf32, #tpu.memory_space<vmem>>, vector<1x32xf32>
    %5 = vector.shape_cast %4 : vector<1x32xf32> to vector<32xf32>
    %c0_7 = arith.constant 0 : index
    %c0_8 = arith.constant 0 : index
    %6 = vector.load %arg14[%c0_7, %c0_8] : memref<1x32xf32, #tpu.memory_space<vmem>>, vector<1x32xf32>
    %7 = vector.shape_cast %6 : vector<1x32xf32> to vector<32xf32>
    %c0_9 = arith.constant 0 : index
    %c0_10 = arith.constant 0 : index
    %8 = vector.load %arg15[%c0_9, %c0_10] : memref<1x32xf32, #tpu.memory_space<vmem>>, vector<1x32xf32>
    %9 = vector.shape_cast %8 : vector<1x32xf32> to vector<32xf32>
    %c0_11 = arith.constant 0 : index
    %c0_12 = arith.constant 0 : index
    %10 = vector.load %arg16[%c0_11, %c0_12] : memref<1x32xf32, #tpu.memory_space<vmem>>, vector<1x32xf32>
    %11 = vector.shape_cast %10 : vector<1x32xf32> to vector<32xf32>
    %c0_13 = arith.constant 0 : index
    %c0_14 = arith.constant 0 : index
    %12 = vector.load %arg6[%c0_13, %c0_14] : memref<1x32xf32, #tpu.memory_space<vmem>>, vector<1x32xf32>
    %13 = vector.shape_cast %12 : vector<1x32xf32> to vector<32xf32>
    %c0_15 = arith.constant 0 : index
    %c0_16 = arith.constant 0 : index
    %14 = vector.load %arg8[%c0_15, %c0_16] : memref<1x32xf32, #tpu.memory_space<vmem>>, vector<1x32xf32>
    %15 = vector.shape_cast %14 : vector<1x32xf32> to vector<32xf32>
    %c0_17 = arith.constant 0 : index
    %c0_18 = arith.constant 0 : index
    %16 = vector.load %arg10[%c0_17, %c0_18] : memref<1x32xf32, #tpu.memory_space<vmem>>, vector<1x32xf32>
    %17 = vector.shape_cast %16 : vector<1x32xf32> to vector<32xf32>
    %c0_19 = arith.constant 0 : index
    %c0_20 = arith.constant 0 : index
    %18 = vector.load %arg12[%c0_19, %c0_20] : memref<1x32xf32, #tpu.memory_space<vmem>>, vector<1x32xf32>
    %19 = vector.shape_cast %18 : vector<1x32xf32> to vector<32xf32>
    %c0_21 = arith.constant 0 : index
    %c0_22 = arith.constant 0 : index
    %20 = vector.load %arg18[%c0_21, %c0_22] : memref<1x128xf32, #tpu.memory_space<vmem>>, vector<1x128xf32>
    %21 = vector.shape_cast %20 : vector<1x128xf32> to vector<128xf32>
    %c0_23 = arith.constant 0 : index
    %c0_24 = arith.constant 0 : index
    %22 = vector.load %arg20[%c0_23, %c0_24] : memref<1x32xf32, #tpu.memory_space<vmem>>, vector<1x32xf32>
    %23 = vector.shape_cast %22 : vector<1x32xf32> to vector<32xf32>
    %c0_25 = arith.constant 0 : index
    %c0_26 = arith.constant 0 : index
    %24 = vector.load %arg11[%c0_25, %c0_26] : memref<32x32xbf16, #tpu.memory_space<vmem>>, vector<32x32xbf16>
    %cst = arith.constant dense<0.000000e+00> : vector<8xf32>
    %25 = vector.multi_reduction <add>, %1, %cst [1] : vector<8x32xf32> to vector<8xf32>
    %26 = vector.shape_cast %25 : vector<8xf32> to vector<8x1xf32>
    %cst_27 = arith.constant 3.200000e+01 : f32
    %27 = vector.broadcast %cst_27 : f32 to vector<8x1xf32>
    %28 = arith.divf %26, %27 : vector<8x1xf32>
    %29 = vector.broadcast %28 : vector<8x1xf32> to vector<8x32xf32>
    %30 = arith.subf %1, %29 : vector<8x32xf32>
    %31 = arith.mulf %30, %30 : vector<8x32xf32>
    %cst_28 = arith.constant dense<0.000000e+00> : vector<8xf32>
    %32 = vector.multi_reduction <add>, %31, %cst_28 [1] : vector<8x32xf32> to vector<8xf32>
    %33 = vector.shape_cast %32 : vector<8xf32> to vector<8x1xf32>
    %cst_29 = arith.constant 3.200000e+01 : f32
    %34 = vector.broadcast %cst_29 : f32 to vector<8x1xf32>
    %35 = arith.divf %33, %34 : vector<8x1xf32>
    %36 = vector.broadcast %28 : vector<8x1xf32> to vector<8x32xf32>
    %37 = arith.subf %1, %36 : vector<8x32xf32>
    %cst_30 = arith.constant 9.99999974E-6 : f32
    %38 = vector.broadcast %cst_30 : f32 to vector<8x1xf32>
    %39 = arith.addf %35, %38 : vector<8x1xf32>
    %40 = math.rsqrt %39 : vector<8x1xf32>
    %41 = vector.broadcast %40 : vector<8x1xf32> to vector<8x32xf32>
    %42 = arith.mulf %37, %41 : vector<8x32xf32>
    %43 = vector.shape_cast %5 : vector<32xf32> to vector<1x32xf32>
    %44 = vector.broadcast %43 : vector<1x32xf32> to vector<8x32xf32>
    %45 = arith.mulf %42, %44 : vector<8x32xf32>
    %46 = vector.shape_cast %7 : vector<32xf32> to vector<1x32xf32>
    %47 = vector.broadcast %46 : vector<1x32xf32> to vector<8x32xf32>
    %48 = arith.addf %45, %47 : vector<8x32xf32>
    %49 = arith.truncf %48 : vector<8x32xf32> to vector<8x32xbf16>
    %c0_31 = arith.constant 0 : index
    %c0_32 = arith.constant 0 : index
    %50 = vector.load %arg5[%c0_31, %c0_32] : memref<32x32xbf16, #tpu.memory_space<vmem>>, vector<32x32xbf16>
    %cst_33 = arith.constant dense<0.000000e+00> : vector<8x32xf32>
    %51 = tpu.matmul %49, %50, %cst_33 {dimension_numbers = #tpu.dot_dimension_numbers<[1], [0], [0], [1], [0, 0, 1, 1], [], []>} : vector<8x32xbf16>, vector<32x32xbf16>, vector<8x32xf32> -> vector<8x32xf32>
    %52 = vector.shape_cast %13 : vector<32xf32> to vector<1x32xf32>
    %53 = vector.broadcast %52 : vector<1x32xf32> to vector<8x32xf32>
    %54 = arith.addf %51, %53 : vector<8x32xf32>
    %c0_34 = arith.constant 0 : index
    %c0_35 = arith.constant 0 : index
    %55 = vector.load %arg7[%c0_34, %c0_35] : memref<32x32xbf16, #tpu.memory_space<vmem>>, vector<32x32xbf16>
    %cst_36 = arith.constant dense<0.000000e+00> : vector<8x32xf32>
    %56 = tpu.matmul %49, %55, %cst_36 {dimension_numbers = #tpu.dot_dimension_numbers<[1], [0], [0], [1], [0, 0, 1, 1], [], []>} : vector<8x32xbf16>, vector<32x32xbf16>, vector<8x32xf32> -> vector<8x32xf32>
    %57 = vector.shape_cast %15 : vector<32xf32> to vector<1x32xf32>
    %58 = vector.broadcast %57 : vector<1x32xf32> to vector<8x32xf32>
    %59 = arith.addf %56, %58 : vector<8x32xf32>
    %c0_37 = arith.constant 0 : index
    %c0_38 = arith.constant 0 : index
    %60 = vector.load %arg9[%c0_37, %c0_38] : memref<32x32xbf16, #tpu.memory_space<vmem>>, vector<32x32xbf16>
    %cst_39 = arith.constant dense<0.000000e+00> : vector<8x32xf32>
    %61 = tpu.matmul %49, %60, %cst_39 {dimension_numbers = #tpu.dot_dimension_numbers<[1], [0], [0], [1], [0, 0, 1, 1], [], []>} : vector<8x32xbf16>, vector<32x32xbf16>, vector<8x32xf32> -> vector<8x32xf32>
    %62 = vector.shape_cast %17 : vector<32xf32> to vector<1x32xf32>
    %63 = vector.broadcast %62 : vector<1x32xf32> to vector<8x32xf32>
    %64 = arith.addf %61, %63 : vector<8x32xf32>
    %65 = arith.truncf %54 : vector<8x32xf32> to vector<8x32xbf16>
    %66 = arith.truncf %59 : vector<8x32xf32> to vector<8x32xbf16>
    %67 = arith.truncf %64 : vector<8x32xf32> to vector<8x32xbf16>
    %cst_40 = arith.constant 0.000000e+00 : f32
    %68 = vector.broadcast %cst_40 : f32 to vector<8x32xf32>
    %69 = vector.extract_strided_slice %65 {offsets = [0, 0], sizes = [8, 8], strides = [1, 1]} : vector<8x32xbf16> to vector<8x8xbf16>
    %70 = vector.extract_strided_slice %66 {offsets = [0, 0], sizes = [8, 8], strides = [1, 1]} : vector<8x32xbf16> to vector<8x8xbf16>
    %71 = vector.extract_strided_slice %67 {offsets = [0, 0], sizes = [8, 8], strides = [1, 1]} : vector<8x32xbf16> to vector<8x8xbf16>
    %cst_41 = arith.constant dense<0.000000e+00> : vector<8x8xf32>
    %72 = tpu.matmul %69, %70, %cst_41 {dimension_numbers = #tpu.dot_dimension_numbers<[1], [1], [0], [0], [0, 0, 1, 0], [], []>} : vector<8x8xbf16>, vector<8x8xbf16>, vector<8x8xf32> -> vector<8x8xf32>
    %cst_42 = arith.constant 0.353553385 : f32
    %73 = vector.broadcast %cst_42 : f32 to vector<8x8xf32>
    %74 = arith.mulf %72, %73 : vector<8x8xf32>
    %75 = vector.broadcast %3 : vector<1x8xf32> to vector<8x8xf32>
    %76 = arith.addf %74, %75 : vector<8x8xf32>
    %cst_43 = arith.constant dense<0xFF800000> : vector<8xf32>
    %77 = vector.multi_reduction <maximumf>, %76, %cst_43 [1] : vector<8x8xf32> to vector<8xf32>
    %78 = vector.shape_cast %77 : vector<8xf32> to vector<8x1xf32>
    %79 = vector.broadcast %78 : vector<8x1xf32> to vector<8x8xf32>
    %80 = arith.subf %76, %79 : vector<8x8xf32>
    %81 = math.exp %80 : vector<8x8xf32>
    %cst_44 = arith.constant dense<0.000000e+00> : vector<8xf32>
    %82 = vector.multi_reduction <add>, %81, %cst_44 [1] : vector<8x8xf32> to vector<8xf32>
    %83 = vector.shape_cast %82 : vector<8xf32> to vector<8x1xf32>
    %84 = tpu.reciprocal %83 {approx = true} : vector<8x1xf32> -> vector<8x1xf32>
    %85 = vector.broadcast %84 : vector<8x1xf32> to vector<8x8xf32>
    %86 = arith.mulf %81, %85 : vector<8x8xf32>
    %87 = arith.truncf %86 : vector<8x8xf32> to vector<8x8xbf16>
    %cst_45 = arith.constant dense<0.000000e+00> : vector<8x8xf32>
    %88 = tpu.matmul %87, %71, %cst_45 {dimension_numbers = #tpu.dot_dimension_numbers<[1], [0], [0], [1], [0, 0, 1, 1], [], []>} : vector<8x8xbf16>, vector<8x8xbf16>, vector<8x8xf32> -> vector<8x8xf32>
    %89 = arith.truncf %88 : vector<8x8xf32> to vector<8x8xbf16>
    %90 = vector.extract_strided_slice %24 {offsets = [0, 0], sizes = [8, 32], strides = [1, 1]} : vector<32x32xbf16> to vector<8x32xbf16>
    %cst_46 = arith.constant dense<0.000000e+00> : vector<8x32xf32>
    %91 = tpu.matmul %89, %90, %cst_46 {dimension_numbers = #tpu.dot_dimension_numbers<[1], [0], [0], [1], [0, 0, 1, 1], [], []>} : vector<8x8xbf16>, vector<8x32xbf16>, vector<8x32xf32> -> vector<8x32xf32>
    %92 = arith.addf %68, %91 : vector<8x32xf32>
    %93 = vector.extract_strided_slice %65 {offsets = [0, 8], sizes = [8, 8], strides = [1, 1]} : vector<8x32xbf16> to vector<8x8xbf16>
    %94 = vector.extract_strided_slice %66 {offsets = [0, 8], sizes = [8, 8], strides = [1, 1]} : vector<8x32xbf16> to vector<8x8xbf16>
    %95 = vector.extract_strided_slice %67 {offsets = [0, 8], sizes = [8, 8], strides = [1, 1]} : vector<8x32xbf16> to vector<8x8xbf16>
    %cst_47 = arith.constant dense<0.000000e+00> : vector<8x8xf32>
    %96 = tpu.matmul %93, %94, %cst_47 {dimension_numbers = #tpu.dot_dimension_numbers<[1], [1], [0], [0], [0, 0, 1, 0], [], []>} : vector<8x8xbf16>, vector<8x8xbf16>, vector<8x8xf32> -> vector<8x8xf32>
    %cst_48 = arith.constant 0.353553385 : f32
    %97 = vector.broadcast %cst_48 : f32 to vector<8x8xf32>
    %98 = arith.mulf %96, %97 : vector<8x8xf32>
    %99 = vector.broadcast %3 : vector<1x8xf32> to vector<8x8xf32>
    %100 = arith.addf %98, %99 : vector<8x8xf32>
    %cst_49 = arith.constant dense<0xFF800000> : vector<8xf32>
    %101 = vector.multi_reduction <maximumf>, %100, %cst_49 [1] : vector<8x8xf32> to vector<8xf32>
    %102 = vector.shape_cast %101 : vector<8xf32> to vector<8x1xf32>
    %103 = vector.broadcast %102 : vector<8x1xf32> to vector<8x8xf32>
    %104 = arith.subf %100, %103 : vector<8x8xf32>
    %105 = math.exp %104 : vector<8x8xf32>
    %cst_50 = arith.constant dense<0.000000e+00> : vector<8xf32>
    %106 = vector.multi_reduction <add>, %105, %cst_50 [1] : vector<8x8xf32> to vector<8xf32>
    %107 = vector.shape_cast %106 : vector<8xf32> to vector<8x1xf32>
    %108 = tpu.reciprocal %107 {approx = true} : vector<8x1xf32> -> vector<8x1xf32>
    %109 = vector.broadcast %108 : vector<8x1xf32> to vector<8x8xf32>
    %110 = arith.mulf %105, %109 : vector<8x8xf32>
    %111 = arith.truncf %110 : vector<8x8xf32> to vector<8x8xbf16>
    %cst_51 = arith.constant dense<0.000000e+00> : vector<8x8xf32>
    %112 = tpu.matmul %111, %95, %cst_51 {dimension_numbers = #tpu.dot_dimension_numbers<[1], [0], [0], [1], [0, 0, 1, 1], [], []>} : vector<8x8xbf16>, vector<8x8xbf16>, vector<8x8xf32> -> vector<8x8xf32>
    %113 = arith.truncf %112 : vector<8x8xf32> to vector<8x8xbf16>
    %114 = vector.extract_strided_slice %24 {offsets = [8, 0], sizes = [8, 32], strides = [1, 1]} : vector<32x32xbf16> to vector<8x32xbf16>
    %cst_52 = arith.constant dense<0.000000e+00> : vector<8x32xf32>
    %115 = tpu.matmul %113, %114, %cst_52 {dimension_numbers = #tpu.dot_dimension_numbers<[1], [0], [0], [1], [0, 0, 1, 1], [], []>} : vector<8x8xbf16>, vector<8x32xbf16>, vector<8x32xf32> -> vector<8x32xf32>
    %116 = arith.addf %92, %115 : vector<8x32xf32>
    %117 = vector.extract_strided_slice %65 {offsets = [0, 16], sizes = [8, 8], strides = [1, 1]} : vector<8x32xbf16> to vector<8x8xbf16>
    %118 = vector.extract_strided_slice %66 {offsets = [0, 16], sizes = [8, 8], strides = [1, 1]} : vector<8x32xbf16> to vector<8x8xbf16>
    %119 = vector.extract_strided_slice %67 {offsets = [0, 16], sizes = [8, 8], strides = [1, 1]} : vector<8x32xbf16> to vector<8x8xbf16>
    %cst_53 = arith.constant dense<0.000000e+00> : vector<8x8xf32>
    %120 = tpu.matmul %117, %118, %cst_53 {dimension_numbers = #tpu.dot_dimension_numbers<[1], [1], [0], [0], [0, 0, 1, 0], [], []>} : vector<8x8xbf16>, vector<8x8xbf16>, vector<8x8xf32> -> vector<8x8xf32>
    %cst_54 = arith.constant 0.353553385 : f32
    %121 = vector.broadcast %cst_54 : f32 to vector<8x8xf32>
    %122 = arith.mulf %120, %121 : vector<8x8xf32>
    %123 = vector.broadcast %3 : vector<1x8xf32> to vector<8x8xf32>
    %124 = arith.addf %122, %123 : vector<8x8xf32>
    %cst_55 = arith.constant dense<0xFF800000> : vector<8xf32>
    %125 = vector.multi_reduction <maximumf>, %124, %cst_55 [1] : vector<8x8xf32> to vector<8xf32>
    %126 = vector.shape_cast %125 : vector<8xf32> to vector<8x1xf32>
    %127 = vector.broadcast %126 : vector<8x1xf32> to vector<8x8xf32>
    %128 = arith.subf %124, %127 : vector<8x8xf32>
    %129 = math.exp %128 : vector<8x8xf32>
    %cst_56 = arith.constant dense<0.000000e+00> : vector<8xf32>
    %130 = vector.multi_reduction <add>, %129, %cst_56 [1] : vector<8x8xf32> to vector<8xf32>
    %131 = vector.shape_cast %130 : vector<8xf32> to vector<8x1xf32>
    %132 = tpu.reciprocal %131 {approx = true} : vector<8x1xf32> -> vector<8x1xf32>
    %133 = vector.broadcast %132 : vector<8x1xf32> to vector<8x8xf32>
    %134 = arith.mulf %129, %133 : vector<8x8xf32>
    %135 = arith.truncf %134 : vector<8x8xf32> to vector<8x8xbf16>
    %cst_57 = arith.constant dense<0.000000e+00> : vector<8x8xf32>
    %136 = tpu.matmul %135, %119, %cst_57 {dimension_numbers = #tpu.dot_dimension_numbers<[1], [0], [0], [1], [0, 0, 1, 1], [], []>} : vector<8x8xbf16>, vector<8x8xbf16>, vector<8x8xf32> -> vector<8x8xf32>
    %137 = arith.truncf %136 : vector<8x8xf32> to vector<8x8xbf16>
    %138 = vector.extract_strided_slice %24 {offsets = [16, 0], sizes = [8, 32], strides = [1, 1]} : vector<32x32xbf16> to vector<8x32xbf16>
    %cst_58 = arith.constant dense<0.000000e+00> : vector<8x32xf32>
    %139 = tpu.matmul %137, %138, %cst_58 {dimension_numbers = #tpu.dot_dimension_numbers<[1], [0], [0], [1], [0, 0, 1, 1], [], []>} : vector<8x8xbf16>, vector<8x32xbf16>, vector<8x32xf32> -> vector<8x32xf32>
    %140 = arith.addf %116, %139 : vector<8x32xf32>
    %141 = vector.extract_strided_slice %65 {offsets = [0, 24], sizes = [8, 8], strides = [1, 1]} : vector<8x32xbf16> to vector<8x8xbf16>
    %142 = vector.extract_strided_slice %66 {offsets = [0, 24], sizes = [8, 8], strides = [1, 1]} : vector<8x32xbf16> to vector<8x8xbf16>
    %143 = vector.extract_strided_slice %67 {offsets = [0, 24], sizes = [8, 8], strides = [1, 1]} : vector<8x32xbf16> to vector<8x8xbf16>
    %cst_59 = arith.constant dense<0.000000e+00> : vector<8x8xf32>
    %144 = tpu.matmul %141, %142, %cst_59 {dimension_numbers = #tpu.dot_dimension_numbers<[1], [1], [0], [0], [0, 0, 1, 0], [], []>} : vector<8x8xbf16>, vector<8x8xbf16>, vector<8x8xf32> -> vector<8x8xf32>
    %cst_60 = arith.constant 0.353553385 : f32
    %145 = vector.broadcast %cst_60 : f32 to vector<8x8xf32>
    %146 = arith.mulf %144, %145 : vector<8x8xf32>
    %147 = vector.broadcast %3 : vector<1x8xf32> to vector<8x8xf32>
    %148 = arith.addf %146, %147 : vector<8x8xf32>
    %cst_61 = arith.constant dense<0xFF800000> : vector<8xf32>
    %149 = vector.multi_reduction <maximumf>, %148, %cst_61 [1] : vector<8x8xf32> to vector<8xf32>
    %150 = vector.shape_cast %149 : vector<8xf32> to vector<8x1xf32>
    %151 = vector.broadcast %150 : vector<8x1xf32> to vector<8x8xf32>
    %152 = arith.subf %148, %151 : vector<8x8xf32>
    %153 = math.exp %152 : vector<8x8xf32>
    %cst_62 = arith.constant dense<0.000000e+00> : vector<8xf32>
    %154 = vector.multi_reduction <add>, %153, %cst_62 [1] : vector<8x8xf32> to vector<8xf32>
    %155 = vector.shape_cast %154 : vector<8xf32> to vector<8x1xf32>
    %156 = tpu.reciprocal %155 {approx = true} : vector<8x1xf32> -> vector<8x1xf32>
    %157 = vector.broadcast %156 : vector<8x1xf32> to vector<8x8xf32>
    %158 = arith.mulf %153, %157 : vector<8x8xf32>
    %159 = arith.truncf %158 : vector<8x8xf32> to vector<8x8xbf16>
    %cst_63 = arith.constant dense<0.000000e+00> : vector<8x8xf32>
    %160 = tpu.matmul %159, %143, %cst_63 {dimension_numbers = #tpu.dot_dimension_numbers<[1], [0], [0], [1], [0, 0, 1, 1], [], []>} : vector<8x8xbf16>, vector<8x8xbf16>, vector<8x8xf32> -> vector<8x8xf32>
    %161 = arith.truncf %160 : vector<8x8xf32> to vector<8x8xbf16>
    %162 = vector.extract_strided_slice %24 {offsets = [24, 0], sizes = [8, 32], strides = [1, 1]} : vector<32x32xbf16> to vector<8x32xbf16>
    %cst_64 = arith.constant dense<0.000000e+00> : vector<8x32xf32>
    %163 = tpu.matmul %161, %162, %cst_64 {dimension_numbers = #tpu.dot_dimension_numbers<[1], [0], [0], [1], [0, 0, 1, 1], [], []>} : vector<8x8xbf16>, vector<8x32xbf16>, vector<8x32xf32> -> vector<8x32xf32>
    %164 = arith.addf %140, %163 : vector<8x32xf32>
    %165 = arith.addf %1, %164 : vector<8x32xf32>
    %166 = vector.shape_cast %19 : vector<32xf32> to vector<1x32xf32>
    %167 = vector.broadcast %166 : vector<1x32xf32> to vector<8x32xf32>
    %168 = arith.addf %165, %167 : vector<8x32xf32>
    %cst_65 = arith.constant dense<0.000000e+00> : vector<8xf32>
    %169 = vector.multi_reduction <add>, %168, %cst_65 [1] : vector<8x32xf32> to vector<8xf32>
    %170 = vector.shape_cast %169 : vector<8xf32> to vector<8x1xf32>
    %cst_66 = arith.constant 3.200000e+01 : f32
    %171 = vector.broadcast %cst_66 : f32 to vector<8x1xf32>
    %172 = arith.divf %170, %171 : vector<8x1xf32>
    %173 = vector.broadcast %172 : vector<8x1xf32> to vector<8x32xf32>
    %174 = arith.subf %168, %173 : vector<8x32xf32>
    %175 = arith.mulf %174, %174 : vector<8x32xf32>
    %cst_67 = arith.constant dense<0.000000e+00> : vector<8xf32>
    %176 = vector.multi_reduction <add>, %175, %cst_67 [1] : vector<8x32xf32> to vector<8xf32>
    %177 = vector.shape_cast %176 : vector<8xf32> to vector<8x1xf32>
    %cst_68 = arith.constant 3.200000e+01 : f32
    %178 = vector.broadcast %cst_68 : f32 to vector<8x1xf32>
    %179 = arith.divf %177, %178 : vector<8x1xf32>
    %180 = vector.broadcast %172 : vector<8x1xf32> to vector<8x32xf32>
    %181 = arith.subf %168, %180 : vector<8x32xf32>
    %cst_69 = arith.constant 9.99999974E-6 : f32
    %182 = vector.broadcast %cst_69 : f32 to vector<8x1xf32>
    %183 = arith.addf %179, %182 : vector<8x1xf32>
    %184 = math.rsqrt %183 : vector<8x1xf32>
    %185 = vector.broadcast %184 : vector<8x1xf32> to vector<8x32xf32>
    %186 = arith.mulf %181, %185 : vector<8x32xf32>
    %187 = vector.shape_cast %9 : vector<32xf32> to vector<1x32xf32>
    %188 = vector.broadcast %187 : vector<1x32xf32> to vector<8x32xf32>
    %189 = arith.mulf %186, %188 : vector<8x32xf32>
    %190 = vector.shape_cast %11 : vector<32xf32> to vector<1x32xf32>
    %191 = vector.broadcast %190 : vector<1x32xf32> to vector<8x32xf32>
    %192 = arith.addf %189, %191 : vector<8x32xf32>
    %193 = arith.truncf %192 : vector<8x32xf32> to vector<8x32xbf16>
    %c0_70 = arith.constant 0 : index
    %c0_71 = arith.constant 0 : index
    %194 = vector.load %arg17[%c0_70, %c0_71] : memref<32x128xbf16, #tpu.memory_space<vmem>>, vector<32x128xbf16>
    %cst_72 = arith.constant dense<0.000000e+00> : vector<8x128xf32>
    %195 = tpu.matmul %193, %194, %cst_72 {dimension_numbers = #tpu.dot_dimension_numbers<[1], [0], [0], [1], [0, 0, 1, 1], [], []>} : vector<8x32xbf16>, vector<32x128xbf16>, vector<8x128xf32> -> vector<8x128xf32>
    %196 = vector.shape_cast %21 : vector<128xf32> to vector<1x128xf32>
    %197 = vector.broadcast %196 : vector<1x128xf32> to vector<8x128xf32>
    %198 = arith.addf %195, %197 : vector<8x128xf32>
    %cst_73 = arith.constant 5.000000e-01 : f32
    %199 = vector.broadcast %cst_73 : f32 to vector<8x128xf32>
    %200 = arith.mulf %199, %198 : vector<8x128xf32>
    %cst_74 = arith.constant 4.471500e-02 : f32
    %201 = vector.broadcast %cst_74 : f32 to vector<8x128xf32>
    %202 = arith.mulf %201, %198 : vector<8x128xf32>
    %203 = arith.mulf %202, %198 : vector<8x128xf32>
    %204 = arith.mulf %203, %198 : vector<8x128xf32>
    %205 = arith.addf %198, %204 : vector<8x128xf32>
    %cst_75 = arith.constant 0.797884583 : f32
    %206 = vector.broadcast %cst_75 : f32 to vector<8x128xf32>
    %207 = arith.mulf %206, %205 : vector<8x128xf32>
    %208 = math.tanh %207 : vector<8x128xf32>
    %cst_76 = arith.constant 1.000000e+00 : f32
    %209 = vector.broadcast %cst_76 : f32 to vector<8x128xf32>
    %210 = arith.addf %209, %208 : vector<8x128xf32>
    %211 = arith.mulf %200, %210 : vector<8x128xf32>
    %212 = arith.truncf %211 : vector<8x128xf32> to vector<8x128xbf16>
    %c0_77 = arith.constant 0 : index
    %c0_78 = arith.constant 0 : index
    %213 = vector.load %arg19[%c0_77, %c0_78] : memref<128x32xbf16, #tpu.memory_space<vmem>>, vector<128x32xbf16>
    %cst_79 = arith.constant dense<0.000000e+00> : vector<8x32xf32>
    %214 = tpu.matmul %212, %213, %cst_79 {dimension_numbers = #tpu.dot_dimension_numbers<[1], [0], [0], [1], [0, 0, 1, 1], [], []>} : vector<8x128xbf16>, vector<128x32xbf16>, vector<8x32xf32> -> vector<8x32xf32>
    %215 = vector.shape_cast %23 : vector<32xf32> to vector<1x32xf32>
    %216 = vector.broadcast %215 : vector<1x32xf32> to vector<8x32xf32>
    %217 = arith.addf %214, %216 : vector<8x32xf32>
    %218 = arith.addf %168, %217 : vector<8x32xf32>
    %c0_80 = arith.constant 0 : index
    %c0_81 = arith.constant 0 : index
    %c0_82 = arith.constant 0 : index
    %219 = vector.load %arg21[%c0_80, %c0_81, %c0_82] : memref<1x8x32xf32, #tpu.memory_space<vmem>>, vector<1x8x32xf32>
    %220 = vector.shape_cast %219 : vector<1x8x32xf32> to vector<8x32xf32>
    %221 = vector.shape_cast %218 : vector<8x32xf32> to vector<1x8x32xf32>
    tpu.vector_store %arg21[%c0_80, %c0_81, %c0_82], %221 {strides = array<i32>} : memref<1x8x32xf32, #tpu.memory_space<vmem>>, vector<1x8x32xf32>,
    return
  }
  func.func @transform_0(%arg0: i32, %arg1: i32) -> (i32, i32, i32) {
    %c0_i32 = arith.constant 0 : i32
    %c0_i32_0 = arith.constant 0 : i32
    return %arg0, %arg1, %c0_i32 : i32, i32, i32
  }
  func.func @transform_1(%arg0: i32, %arg1: i32) -> (i32, i32, i32) {
    %c0_i32 = arith.constant 0 : i32
    %c0_i32_0 = arith.constant 0 : i32
    %c0_i32_1 = arith.constant 0 : i32
    return %arg0, %c0_i32, %c0_i32_0 : i32, i32, i32
  }
  func.func @transform_2(%arg0: i32, %arg1: i32) -> (i32, i32, i32) {
    %c0_i32 = arith.constant 0 : i32
    %c0_i32_0 = arith.constant 0 : i32
    %c0_i32_1 = arith.constant 0 : i32
    return %arg0, %c0_i32, %c0_i32_0 : i32, i32, i32
  }
  func.func @transform_3(%arg0: i32, %arg1: i32) -> (i32, i32) {
    %c0_i32 = arith.constant 0 : i32
    %c0_i32_0 = arith.constant 0 : i32
    %c0_i32_1 = arith.constant 0 : i32
    return %c0_i32, %c0_i32_0 : i32, i32
  }
  func.func @transform_4(%arg0: i32, %arg1: i32) -> (i32, i32) {
    %c0_i32 = arith.constant 0 : i32
    %c0_i32_0 = arith.constant 0 : i32
    %c0_i32_1 = arith.constant 0 : i32
    return %c0_i32, %c0_i32_0 : i32, i32
  }
  func.func @transform_5(%arg0: i32, %arg1: i32) -> (i32, i32) {
    %c0_i32 = arith.constant 0 : i32
    %c0_i32_0 = arith.constant 0 : i32
    %c0_i32_1 = arith.constant 0 : i32
    return %c0_i32, %c0_i32_0 : i32, i32
  }
  func.func @transform_6(%arg0: i32, %arg1: i32) -> (i32, i32) {
    %c0_i32 = arith.constant 0 : i32
    %c0_i32_0 = arith.constant 0 : i32
    %c0_i32_1 = arith.constant 0 : i32
    return %c0_i32, %c0_i32_0 : i32, i32
  }
  func.func @transform_7(%arg0: i32, %arg1: i32) -> (i32, i32) {
    %c0_i32 = arith.constant 0 : i32
    %c0_i32_0 = arith.constant 0 : i32
    %c0_i32_1 = arith.constant 0 : i32
    return %c0_i32, %c0_i32_0 : i32, i32
  }
  func.func @transform_8(%arg0: i32, %arg1: i32) -> (i32, i32) {
    %c0_i32 = arith.constant 0 : i32
    %c0_i32_0 = arith.constant 0 : i32
    %c0_i32_1 = arith.constant 0 : i32
    return %c0_i32, %c0_i32_0 : i32, i32
  }
  func.func @transform_9(%arg0: i32, %arg1: i32) -> (i32, i32) {
    %c0_i32 = arith.constant 0 : i32
    %c0_i32_0 = arith.constant 0 : i32
    %c0_i32_1 = arith.constant 0 : i32
    return %c0_i32, %c0_i32_0 : i32, i32
  }
  func.func @transform_10(%arg0: i32, %arg1: i32) -> (i32, i32) {
    %c0_i32 = arith.constant 0 : i32
    %c0_i32_0 = arith.constant 0 : i32
    %c0_i32_1 = arith.constant 0 : i32
    return %c0_i32, %c0_i32_0 : i32, i32
  }
  func.func @transform_11(%arg0: i32, %arg1: i32) -> (i32, i32) {
    %c0_i32 = arith.constant 0 : i32
    %c0_i32_0 = arith.constant 0 : i32
    %c0_i32_1 = arith.constant 0 : i32
    return %c0_i32, %c0_i32_0 : i32, i32
  }
  func.func @transform_12(%arg0: i32, %arg1: i32) -> (i32, i32) {
    %c0_i32 = arith.constant 0 : i32
    %c0_i32_0 = arith.constant 0 : i32
    %c0_i32_1 = arith.constant 0 : i32
    return %c0_i32, %c0_i32_0 : i32, i32
  }
  func.func @transform_13(%arg0: i32, %arg1: i32) -> (i32, i32) {
    %c0_i32 = arith.constant 0 : i32
    %c0_i32_0 = arith.constant 0 : i32
    %c0_i32_1 = arith.constant 0 : i32
    return %c0_i32, %c0_i32_0 : i32, i32
  }
  func.func @transform_14(%arg0: i32, %arg1: i32) -> (i32, i32) {
    %c0_i32 = arith.constant 0 : i32
    %c0_i32_0 = arith.constant 0 : i32
    %c0_i32_1 = arith.constant 0 : i32
    return %c0_i32, %c0_i32_0 : i32, i32
  }
  func.func @transform_15(%arg0: i32, %arg1: i32) -> (i32, i32) {
    %c0_i32 = arith.constant 0 : i32
    %c0_i32_0 = arith.constant 0 : i32
    %c0_i32_1 = arith.constant 0 : i32
    return %c0_i32, %c0_i32_0 : i32, i32
  }
  func.func @transform_16(%arg0: i32, %arg1: i32) -> (i32, i32) {
    %c0_i32 = arith.constant 0 : i32
    %c0_i32_0 = arith.constant 0 : i32
    %c0_i32_1 = arith.constant 0 : i32
    return %c0_i32, %c0_i32_0 : i32, i32
  }
  func.func @transform_17(%arg0: i32, %arg1: i32) -> (i32, i32) {
    %c0_i32 = arith.constant 0 : i32
    %c0_i32_0 = arith.constant 0 : i32
    %c0_i32_1 = arith.constant 0 : i32
    return %c0_i32, %c0_i32_0 : i32, i32
  }
  func.func @transform_18(%arg0: i32, %arg1: i32) -> (i32, i32) {
    %c0_i32 = arith.constant 0 : i32
    %c0_i32_0 = arith.constant 0 : i32
    %c0_i32_1 = arith.constant 0 : i32
    return %c0_i32, %c0_i32_0 : i32, i32
  }
  func.func @transform_19(%arg0: i32, %arg1: i32) -> (i32, i32, i32) {
    %c0_i32 = arith.constant 0 : i32
    %c0_i32_0 = arith.constant 0 : i32
    return %arg0, %arg1, %c0_i32 : i32, i32, i32
  }
}

</mosaic_0001>

<llo_original>
// kernel: bert_forward.3
$region0: #{bert_forward.3}
  #allocation0 [shape = 'u32[]', space=smem, size = 0x4, offset = 0x4, fixed_abs, tag = 'smem constant byte address 0x4 - core index']
  #allocation1 [shape = 'u32[144,128]{1,0:T(1,128)}', space=vmem, size = 0x12000, scoped, tag = 'internal scratch']
  %s0 = inlined_call_operand.hbm [shape: f32[2,8,32], index: 0, kind: input, shape index: {}, may-alias: {0,19}]
  %s1 = inlined_call_operand.vmem [shape: f32[2,8,32], index: 1, kind: input, shape index: {}]
  %s2 = inlined_call_operand.vmem [shape: f32[2,1,8], index: 2, kind: input, shape index: {}]
  %s3 = inlined_call_operand.vmem [shape: bf16[32,32], index: 3, kind: input, shape index: {}]
  %s4 = inlined_call_operand.vmem [shape: f32[1,32], index: 4, kind: input, shape index: {}]
  %s5 = inlined_call_operand.vmem [shape: bf16[32,32], index: 5, kind: input, shape index: {}]
  %s6 = inlined_call_operand.vmem [shape: f32[1,32], index: 6, kind: input, shape index: {}]
  %s7 = inlined_call_operand.vmem [shape: bf16[32,32], index: 7, kind: input, shape index: {}]
  %s8 = inlined_call_operand.vmem [shape: f32[1,32], index: 8, kind: input, shape index: {}]
  %s9 = inlined_call_operand.vmem [shape: bf16[32,32], index: 9, kind: input, shape index: {}]
  %s10 = inlined_call_operand.vmem [shape: f32[1,32], index: 10, kind: input, shape index: {}]
  %s11 = inlined_call_operand.vmem [shape: f32[1,32], index: 11, kind: input, shape index: {}]
  %s12 = inlined_call_operand.vmem [shape: f32[1,32], index: 12, kind: input, shape index: {}]
  %s13 = inlined_call_operand.vmem [shape: f32[1,32], index: 13, kind: input, shape index: {}]
  %s14 = inlined_call_operand.vmem [shape: f32[1,32], index: 14, kind: input, shape index: {}]
  %s15 = inlined_call_operand.vmem [shape: bf16[32,128], index: 15, kind: input, shape index: {}]
  %s16 = inlined_call_operand.vmem [shape: f32[1,128], index: 16, kind: input, shape index: {}]
  %s17 = inlined_call_operand.vmem [shape: bf16[128,32], index: 17, kind: input, shape index: {}]
  %s18 = inlined_call_operand.vmem [shape: f32[1,32], index: 18, kind: input, shape index: {}]
  %s19 = inlined_call_operand.hbm [shape: f32[2,8,32], index: 19, kind: output, shape index: {}, may-alias: {0,19}]
  %s20 = sld [smem:[#allocation0]]
  $region113: #{bert_forward.3} parent=0
    _
  %s22 = ssub.s32 1, %s20
  %s23 = scalar_select 0, %s22, %s20
  $region1: #{bert_forward.3} parent=0
    #allocation2 [shape = 'u8[8192]{0}', space=vmem, size = 0x2000, scoped, tag = 'input window, operand 0']
    #allocation3 [shape = 's32[2]{0}', space=sflag, size = 0x8, scoped, tag = 'scoped memory for bert_forward.3']
    #allocation4 [shape = 's32[2]{0}', space=sflag, size = 0x8, scoped, tag = 'scoped memory for bert_forward.3']
    #allocation5 [shape = 'u8[8192]{0}', space=vmem, size = 0x2000, scoped, tag = 'output window, operand 0']
    %24 = vsyncpa [#allocation3], 0
    %s25 = scalar_lea.sflag [#allocation3], 1
    %26 = vsyncpa %s25, 0
    %27 = vsyncpa [#allocation4], 0
    %s28 = scalar_lea.sflag [#allocation4], 1
    %29 = vsyncpa %s28, 0
    loop: start=0, step=1, limit=4
    $region2: #{bert_forward.3} parent=1 // loop_pre_header
      _
    $region3: #{bert_forward.3} parent=1 // loop_header
      %s31 = sphi 0, %s35
      %p32 = scmp.ge.s32.totalorder %s31, 4
      %s38 = sphi 0, %s50
      %s39 = sphi 0, %s46
      %s40 = sphi 0, %s38
      %s41 = sphi 0, %s39
      %s42 = sphi 0, %s40
      %s43 = sphi 0, %s41
      %s55 = sphi 0, %s57
      %s58 = sphi 0, %s55
      %s59 = sphi 0, %s58
      %s75 = sphi 0, %s59
      %s81 = sphi 0, %s83
      %s84 = sphi 0, %s81
      %s85 = sphi 0, %s84
      %s101 = sphi 0, %s85
      %s107 = sphi 0, %s109
      %s110 = sphi 0, %s107
      %s111 = sphi 0, %s110
      %s127 = sphi 0, %s111
      %s131 = sphi 0, %s131
      %s133 = sphi 0, %s131
      %s134 = sphi 0, %s133
      %s148 = sphi 0, %s134
      %s152 = sphi 0, %s152
      %s154 = sphi 0, %s152
      %s155 = sphi 0, %s154
      %s169 = sphi 0, %s155
      %s173 = sphi 0, %s173
      %s175 = sphi 0, %s173
      %s176 = sphi 0, %s175
      %s190 = sphi 0, %s176
      %s194 = sphi 0, %s194
      %s196 = sphi 0, %s194
      %s197 = sphi 0, %s196
      %s211 = sphi 0, %s197
      %s215 = sphi 0, %s215
      %s217 = sphi 0, %s215
      %s218 = sphi 0, %s217
      %s232 = sphi 0, %s218
      %s236 = sphi 0, %s236
      %s238 = sphi 0, %s236
      %s239 = sphi 0, %s238
      %s253 = sphi 0, %s239
      %s257 = sphi 0, %s257
      %s259 = sphi 0, %s257
      %s260 = sphi 0, %s259
      %s274 = sphi 0, %s260
      %s278 = sphi 0, %s278
      %s280 = sphi 0, %s278
      %s281 = sphi 0, %s280
      %s295 = sphi 0, %s281
      %s299 = sphi 0, %s299
      %s301 = sphi 0, %s299
      %s302 = sphi 0, %s301
      %s316 = sphi 0, %s302
      %s320 = sphi 0, %s320
      %s322 = sphi 0, %s320
      %s323 = sphi 0, %s322
      %s337 = sphi 0, %s323
      %s341 = sphi 0, %s341
      %s343 = sphi 0, %s341
      %s344 = sphi 0, %s343
      %s358 = sphi 0, %s344
      %s362 = sphi 0, %s362
      %s364 = sphi 0, %s362
      %s365 = sphi 0, %s364
      %s379 = sphi 0, %s365
      %s383 = sphi 0, %s383
      %s385 = sphi 0, %s383
      %s386 = sphi 0, %s385
      %s400 = sphi 0, %s386
      %s404 = sphi 0, %s404
      %s406 = sphi 0, %s404
      %s407 = sphi 0, %s406
      %s421 = sphi 0, %s407
      %s425 = sphi 0, %s425
      %s427 = sphi 0, %s425
      %s428 = sphi 0, %s427
      %s442 = sphi 0, %s428
      %s446 = sphi 0, %s446
      %s448 = sphi 0, %s446
      %s449 = sphi 0, %s448
      %s463 = sphi 0, %s449
      %s471 = sphi 0, %s473
      %s474 = sphi 0, %s471
      %s475 = sphi 0, %s474
      %s491 = sphi 0, %s475
    $region4: #{bert_forward.3} parent=1 // loop_header_branch
      %34 = sbr.rel (%p32) target = $region8
    $region5: #{bert_forward.3} parent=1 // loop_body
      %s36 = ssub.s32 %s31, 1
      %s37 = ssub.s32 %s31, 2
      %s44 = sadd.s32 1, %s39
      %p45 = scmp.ge.s32.totalorder %s44, 1
      %s46 = scalar_select %p45, 0, %s44
      %s47 = sadd.s32 1, %s38
      %s48 = scalar_select %p45, %s47, %s38
      %p49 = scmp.ge.s32.totalorder %s48, 2
      %s50 = scalar_select %p49, 0, %s48
      %s51 = ssub.s32 %s38, %s50
      %s52 = ssub.s32 %s39, %s46
      %s53 = sor.u32 %s51, %s52
      %p54 = scmp.eq.s32.totalorder %s53, 0
      %s56 = sadd.s32 %s55, 1
      %s57 = scalar_select %p54, %s55, %s56
      %p60 = pneg %p54
      %p61 = scmp.eq.s32.totalorder %s31, 1
      %p62 = por %p60, %p61
      %p63 = scmp.ne.s32.totalorder %s55, %s58
      %p64 = scmp.eq.s32.totalorder %s31, 0
      %p65 = por %p63, %p64
      %p66 = scmp.ne.s32.totalorder %s55, %s58
      %p67 = scmp.eq.s32.totalorder %s36, 1
      %p68 = por %p66, %p67
      %p69 = scmp.ne.s32.totalorder %s58, %s59
      %p70 = scmp.eq.s32.totalorder %s36, 0
      %p71 = por %p69, %p70
      %p72 = scmp.ne.s32.totalorder %s58, %s59
      %p73 = scmp.eq.s32.totalorder %s37, 1
      %p74 = por %p72, %p73
      %p76 = scmp.ne.s32.totalorder %s59, %s75
      %p77 = scmp.eq.s32.totalorder %s37, 0
      %p78 = por %p76, %p77
      %s79 = ssub.s32 %s38, %s50
      %p80 = scmp.eq.s32.totalorder %s79, 0
      %s82 = sadd.s32 %s81, 1
      %s83 = scalar_select %p80, %s81, %s82
      %p86 = pneg %p80
      %p87 = scmp.eq.s32.totalorder %s31, 1
      %p88 = por %p86, %p87
      %p89 = scmp.ne.s32.totalorder %s81, %s84
      %p90 = scmp.eq.s32.totalorder %s31, 0
      %p91 = por %p89, %p90
      %p92 = scmp.ne.s32.totalorder %s81, %s84
      %p93 = scmp.eq.s32.totalorder %s36, 1
      %p94 = por %p92, %p93
      %p95 = scmp.ne.s32.totalorder %s84, %s85
      %p96 = scmp.eq.s32.totalorder %s36, 0
      %p97 = por %p95, %p96
      %p98 = scmp.ne.s32.totalorder %s84, %s85
      %p99 = scmp.eq.s32.totalorder %s37, 1
      %p100 = por %p98, %p99
      %p102 = scmp.ne.s32.totalorder %s85, %s101
      %p103 = scmp.eq.s32.totalorder %s37, 0
      %p104 = por %p102, %p103
      %s105 = ssub.s32 %s38, %s50
      %p106 = scmp.eq.s32.totalorder %s105, 0
      %s108 = sadd.s32 %s107, 1
      %s109 = scalar_select %p106, %s107, %s108
      %p112 = pneg %p106
      %p113 = scmp.eq.s32.totalorder %s31, 1
      %p114 = por %p112, %p113
      %p115 = scmp.ne.s32.totalorder %s107, %s110
      %p116 = scmp.eq.s32.totalorder %s31, 0
      %p117 = por %p115, %p116
      %p118 = scmp.ne.s32.totalorder %s107, %s110
      %p119 = scmp.eq.s32.totalorder %s36, 1
      %p120 = por %p118, %p119
      %p121 = scmp.ne.s32.totalorder %s110, %s111
      %p122 = scmp.eq.s32.totalorder %s36, 0
      %p123 = por %p121, %p122
      %p124 = scmp.ne.s32.totalorder %s110, %s111
      %p125 = scmp.eq.s32.totalorder %s37, 1
      %p126 = por %p124, %p125
      %p128 = scmp.ne.s32.totalorder %s111, %s127
      %p129 = scmp.eq.s32.totalorder %s37, 0
      %p130 = por %p128, %p129
      %s132 = sadd.s32 %s131, 1
      %p135 = scmp.eq.s32.totalorder %s31, 1
      %p136 = scmp.ne.s32.totalorder %s131, %s133
      %p137 = scmp.eq.s32.totalorder %s31, 0
      %p138 = por %p136, %p137
      %p139 = scmp.ne.s32.totalorder %s131, %s133
      %p140 = scmp.eq.s32.totalorder %s36, 1
      %p141 = por %p139, %p140
      %p142 = scmp.ne.s32.totalorder %s133, %s134
      %p143 = scmp.eq.s32.totalorder %s36, 0
      %p144 = por %p142, %p143
      %p145 = scmp.ne.s32.totalorder %s133, %s134
      %p146 = scmp.eq.s32.totalorder %s37, 1
      %p147 = por %p145, %p146
      %p149 = scmp.ne.s32.totalorder %s134, %s148
      %p150 = scmp.eq.s32.totalorder %s37, 0
      %p151 = por %p149, %p150
      %s153 = sadd.s32 %s152, 1
      %p156 = scmp.eq.s32.totalorder %s31, 1
      %p157 = scmp.ne.s32.totalorder %s152, %s154
      %p158 = scmp.eq.s32.totalorder %s31, 0
      %p159 = por %p157, %p158
      %p160 = scmp.ne.s32.totalorder %s152, %s154
      %p161 = scmp.eq.s32.totalorder %s36, 1
      %p162 = por %p160, %p161
      %p163 = scmp.ne.s32.totalorder %s154, %s155
      %p164 = scmp.eq.s32.totalorder %s36, 0
      %p165 = por %p163, %p164
      %p166 = scmp.ne.s32.totalorder %s154, %s155
      %p167 = scmp.eq.s32.totalorder %s37, 1
      %p168 = por %p166, %p167
      %p170 = scmp.ne.s32.totalorder %s155, %s169
      %p171 = scmp.eq.s32.totalorder %s37, 0
      %p172 = por %p170, %p171
      %s174 = sadd.s32 %s173, 1
      %p177 = scmp.eq.s32.totalorder %s31, 1
      %p178 = scmp.ne.s32.totalorder %s173, %s175
      %p179 = scmp.eq.s32.totalorder %s31, 0
      %p180 = por %p178, %p179
      %p181 = scmp.ne.s32.totalorder %s173, %s175
      %p182 = scmp.eq.s32.totalorder %s36, 1
      %p183 = por %p181, %p182
      %p184 = scmp.ne.s32.totalorder %s175, %s176
      %p185 = scmp.eq.s32.totalorder %s36, 0
      %p186 = por %p184, %p185
      %p187 = scmp.ne.s32.totalorder %s175, %s176
      %p188 = scmp.eq.s32.totalorder %s37, 1
      %p189 = por %p187, %p188
      %p191 = scmp.ne.s32.totalorder %s176, %s190
      %p192 = scmp.eq.s32.totalorder %s37, 0
      %p193 = por %p191, %p192
      %s195 = sadd.s32 %s194, 1
      %p198 = scmp.eq.s32.totalorder %s31, 1
      %p199 = scmp.ne.s32.totalorder %s194, %s196
      %p200 = scmp.eq.s32.totalorder %s31, 0
      %p201 = por %p199, %p200
      %p202 = scmp.ne.s32.totalorder %s194, %s196
      %p203 = scmp.eq.s32.totalorder %s36, 1
      %p204 = por %p202, %p203
      %p205 = scmp.ne.s32.totalorder %s196, %s197
      %p206 = scmp.eq.s32.totalorder %s36, 0
      %p207 = por %p205, %p206
      %p208 = scmp.ne.s32.totalorder %s196, %s197
      %p209 = scmp.eq.s32.totalorder %s37, 1
      %p210 = por %p208, %p209
      %p212 = scmp.ne.s32.totalorder %s197, %s211
      %p213 = scmp.eq.s32.totalorder %s37, 0
      %p214 = por %p212, %p213
      %s216 = sadd.s32 %s215, 1
      %p219 = scmp.eq.s32.totalorder %s31, 1
      %p220 = scmp.ne.s32.totalorder %s215, %s217
      %p221 = scmp.eq.s32.totalorder %s31, 0
      %p222 = por %p220, %p221
      %p223 = scmp.ne.s32.totalorder %s215, %s217
      %p224 = scmp.eq.s32.totalorder %s36, 1
      %p225 = por %p223, %p224
      %p226 = scmp.ne.s32.totalorder %s217, %s218
      %p227 = scmp.eq.s32.totalorder %s36, 0
      %p228 = por %p226, %p227
      %p229 = scmp.ne.s32.totalorder %s217, %s218
      %p230 = scmp.eq.s32.totalorder %s37, 1
      %p231 = por %p229, %p230
      %p233 = scmp.ne.s32.totalorder %s218, %s232
      %p234 = scmp.eq.s32.totalorder %s37, 0
      %p235 = por %p233, %p234
      %s237 = sadd.s32 %s236, 1
      %p240 = scmp.eq.s32.totalorder %s31, 1
      %p241 = scmp.ne.s32.totalorder %s236, %s238
      %p242 = scmp.eq.s32.totalorder %s31, 0
      %p243 = por %p241, %p242
      %p244 = scmp.ne.s32.totalorder %s236, %s238
      %p245 = scmp.eq.s32.totalorder %s36, 1
      %p246 = por %p244, %p245
      %p247 = scmp.ne.s32.totalorder %s238, %s239
      %p248 = scmp.eq.s32.totalorder %s36, 0
      %p249 = por %p247, %p248
      %p250 = scmp.ne.s32.totalorder %s238, %s239
      %p251 = scmp.eq.s32.totalorder %s37, 1
      %p252 = por %p250, %p251
      %p254 = scmp.ne.s32.totalorder %s239, %s253
      %p255 = scmp.eq.s32.totalorder %s37, 0
      %p256 = por %p254, %p255
      %s258 = sadd.s32 %s257, 1
      %p261 = scmp.eq.s32.totalorder %s31, 1
      %p262 = scmp.ne.s32.totalorder %s257, %s259
      %p263 = scmp.eq.s32.totalorder %s31, 0
      %p264 = por %p262, %p263
      %p265 = scmp.ne.s32.totalorder %s257, %s259
      %p266 = scmp.eq.s32.totalorder %s36, 1
      %p267 = por %p265, %p266
      %p268 = scmp.ne.s32.totalorder %s259, %s260
      %p269 = scmp.eq.s32.totalorder %s36, 0
      %p270 = por %p268, %p269
      %p271 = scmp.ne.s32.totalorder %s259, %s260
      %p272 = scmp.eq.s32.totalorder %s37, 1
      %p273 = por %p271, %p272
      %p275 = scmp.ne.s32.totalorder %s260, %s274
      %p276 = scmp.eq.s32.totalorder %s37, 0
      %p277 = por %p275, %p276
      %s279 = sadd.s32 %s278, 1
      %p282 = scmp.eq.s32.totalorder %s31, 1
      %p283 = scmp.ne.s32.totalorder %s278, %s280
      %p284 = scmp.eq.s32.totalorder %s31, 0
      %p285 = por %p283, %p284
      %p286 = scmp.ne.s32.totalorder %s278, %s280
      %p287 = scmp.eq.s32.totalorder %s36, 1
      %p288 = por %p286, %p287
      %p289 = scmp.ne.s32.totalorder %s280, %s281
      %p290 = scmp.eq.s32.totalorder %s36, 0
      %p291 = por %p289, %p290
      %p292 = scmp.ne.s32.totalorder %s280, %s281
      %p293 = scmp.eq.s32.totalorder %s37, 1
      %p294 = por %p292, %p293
      %p296 = scmp.ne.s32.totalorder %s281, %s295
      %p297 = scmp.eq.s32.totalorder %s37, 0
      %p298 = por %p296, %p297
      %s300 = sadd.s32 %s299, 1
      %p303 = scmp.eq.s32.totalorder %s31, 1
      %p304 = scmp.ne.s32.totalorder %s299, %s301
      %p305 = scmp.eq.s32.totalorder %s31, 0
      %p306 = por %p304, %p305
      %p307 = scmp.ne.s32.totalorder %s299, %s301
      %p308 = scmp.eq.s32.totalorder %s36, 1
      %p309 = por %p307, %p308
      %p310 = scmp.ne.s32.totalorder %s301, %s302
      %p311 = scmp.eq.s32.totalorder %s36, 0
      %p312 = por %p310, %p311
      %p313 = scmp.ne.s32.totalorder %s301, %s302
      %p314 = scmp.eq.s32.totalorder %s37, 1
      %p315 = por %p313, %p314
      %p317 = scmp.ne.s32.totalorder %s302, %s316
      %p318 = scmp.eq.s32.totalorder %s37, 0
      %p319 = por %p317, %p318
      %s321 = sadd.s32 %s320, 1
      %p324 = scmp.eq.s32.totalorder %s31, 1
      %p325 = scmp.ne.s32.totalorder %s320, %s322
      %p326 = scmp.eq.s32.totalorder %s31, 0
      %p327 = por %p325, %p326
      %p328 = scmp.ne.s32.totalorder %s320, %s322
      %p329 = scmp.eq.s32.totalorder %s36, 1
      %p330 = por %p328, %p329
      %p331 = scmp.ne.s32.totalorder %s322, %s323
      %p332 = scmp.eq.s32.totalorder %s36, 0
      %p333 = por %p331, %p332
      %p334 = scmp.ne.s32.totalorder %s322, %s323
      %p335 = scmp.eq.s32.totalorder %s37, 1
      %p336 = por %p334, %p335
      %p338 = scmp.ne.s32.totalorder %s323, %s337
      %p339 = scmp.eq.s32.totalorder %s37, 0
      %p340 = por %p338, %p339
      %s342 = sadd.s32 %s341, 1
      %p345 = scmp.eq.s32.totalorder %s31, 1
      %p346 = scmp.ne.s32.totalorder %s341, %s343
      %p347 = scmp.eq.s32.totalorder %s31, 0
      %p348 = por %p346, %p347
      %p349 = scmp.ne.s32.totalorder %s341, %s343
      %p350 = scmp.eq.s32.totalorder %s36, 1
      %p351 = por %p349, %p350
      %p352 = scmp.ne.s32.totalorder %s343, %s344
      %p353 = scmp.eq.s32.totalorder %s36, 0
      %p354 = por %p352, %p353
      %p355 = scmp.ne.s32.totalorder %s343, %s344
      %p356 = scmp.eq.s32.totalorder %s37, 1
      %p357 = por %p355, %p356
      %p359 = scmp.ne.s32.totalorder %s344, %s358
      %p360 = scmp.eq.s32.totalorder %s37, 0
      %p361 = por %p359, %p360
      %s363 = sadd.s32 %s362, 1
      %p366 = scmp.eq.s32.totalorder %s31, 1
      %p367 = scmp.ne.s32.totalorder %s362, %s364
      %p368 = scmp.eq.s32.totalorder %s31, 0
      %p369 = por %p367, %p368
      %p370 = scmp.ne.s32.totalorder %s362, %s364
      %p371 = scmp.eq.s32.totalorder %s36, 1
      %p372 = por %p370, %p371
      %p373 = scmp.ne.s32.totalorder %s364, %s365
      %p374 = scmp.eq.s32.totalorder %s36, 0
      %p375 = por %p373, %p374
      %p376 = scmp.ne.s32.totalorder %s364, %s365
      %p377 = scmp.eq.s32.totalorder %s37, 1
      %p378 = por %p376, %p377
      %p380 = scmp.ne.s32.totalorder %s365, %s379
      %p381 = scmp.eq.s32.totalorder %s37, 0
      %p382 = por %p380, %p381
      %s384 = sadd.s32 %s383, 1
      %p387 = scmp.eq.s32.totalorder %s31, 1
      %p388 = scmp.ne.s32.totalorder %s383, %s385
      %p389 = scmp.eq.s32.totalorder %s31, 0
      %p390 = por %p388, %p389
      %p391 = scmp.ne.s32.totalorder %s383, %s385
      %p392 = scmp.eq.s32.totalorder %s36, 1
      %p393 = por %p391, %p392
      %p394 = scmp.ne.s32.totalorder %s385, %s386
      %p395 = scmp.eq.s32.totalorder %s36, 0
      %p396 = por %p394, %p395
      %p397 = scmp.ne.s32.totalorder %s385, %s386
      %p398 = scmp.eq.s32.totalorder %s37, 1
      %p399 = por %p397, %p398
      %p401 = scmp.ne.s32.totalorder %s386, %s400
      %p402 = scmp.eq.s32.totalorder %s37, 0
      %p403 = por %p401, %p402
      %s405 = sadd.s32 %s404, 1
      %p408 = scmp.eq.s32.totalorder %s31, 1
      %p409 = scmp.ne.s32.totalorder %s404, %s406
      %p410 = scmp.eq.s32.totalorder %s31, 0
      %p411 = por %p409, %p410
      %p412 = scmp.ne.s32.totalorder %s404, %s406
      %p413 = scmp.eq.s32.totalorder %s36, 1
      %p414 = por %p412, %p413
      %p415 = scmp.ne.s32.totalorder %s406, %s407
      %p416 = scmp.eq.s32.totalorder %s36, 0
      %p417 = por %p415, %p416
      %p418 = scmp.ne.s32.totalorder %s406, %s407
      %p419 = scmp.eq.s32.totalorder %s37, 1
      %p420 = por %p418, %p419
      %p422 = scmp.ne.s32.totalorder %s407, %s421
      %p423 = scmp.eq.s32.totalorder %s37, 0
      %p424 = por %p422, %p423
      %s426 = sadd.s32 %s425, 1
      %p429 = scmp.eq.s32.totalorder %s31, 1
      %p430 = scmp.ne.s32.totalorder %s425, %s427
      %p431 = scmp.eq.s32.totalorder %s31, 0
      %p432 = por %p430, %p431
      %p433 = scmp.ne.s32.totalorder %s425, %s427
      %p434 = scmp.eq.s32.totalorder %s36, 1
      %p435 = por %p433, %p434
      %p436 = scmp.ne.s32.totalorder %s427, %s428
      %p437 = scmp.eq.s32.totalorder %s36, 0
      %p438 = por %p436, %p437
      %p439 = scmp.ne.s32.totalorder %s427, %s428
      %p440 = scmp.eq.s32.totalorder %s37, 1
      %p441 = por %p439, %p440
      %p443 = scmp.ne.s32.totalorder %s428, %s442
      %p444 = scmp.eq.s32.totalorder %s37, 0
      %p445 = por %p443, %p444
      %s447 = sadd.s32 %s446, 1
      %p450 = scmp.eq.s32.totalorder %s31, 1
      %p451 = scmp.ne.s32.totalorder %s446, %s448
      %p452 = scmp.eq.s32.totalorder %s31, 0
      %p453 = por %p451, %p452
      %p454 = scmp.ne.s32.totalorder %s446, %s448
      %p455 = scmp.eq.s32.totalorder %s36, 1
      %p456 = por %p454, %p455
      %p457 = scmp.ne.s32.totalorder %s448, %s449
      %p458 = scmp.eq.s32.totalorder %s36, 0
      %p459 = por %p457, %p458
      %p460 = scmp.ne.s32.totalorder %s448, %s449
      %p461 = scmp.eq.s32.totalorder %s37, 1
      %p462 = por %p460, %p461
      %p464 = scmp.ne.s32.totalorder %s449, %s463
      %p465 = scmp.eq.s32.totalorder %s37, 0
      %p466 = por %p464, %p465
      %s467 = ssub.s32 %s38, %s50
      %s468 = ssub.s32 %s39, %s46
      %s469 = sor.u32 %s467, %s468
      %p470 = scmp.eq.s32.totalorder %s469, 0
      %s472 = sadd.s32 %s471, 1
      %s473 = scalar_select %p470, %s471, %s472
      %p476 = pneg %p470
      %p477 = scmp.eq.s32.totalorder %s31, 1
      %p478 = por %p476, %p477
      %p479 = scmp.ne.s32.totalorder %s471, %s474
      %p480 = scmp.eq.s32.totalorder %s31, 0
      %p481 = por %p479, %p480
      %p482 = scmp.ne.s32.totalorder %s471, %s474
      %p483 = scmp.eq.s32.totalorder %s36, 1
      %p484 = por %p482, %p483
      %p485 = scmp.ne.s32.totalorder %s474, %s475
      %p486 = scmp.eq.s32.totalorder %s36, 0
      %p487 = por %p485, %p486
      %p488 = scmp.ne.s32.totalorder %s474, %s475
      %p489 = scmp.eq.s32.totalorder %s37, 1
      %p490 = por %p488, %p489
      %p492 = scmp.ne.s32.totalorder %s475, %s491
      %p493 = scmp.eq.s32.totalorder %s37, 0
      %p494 = por %p492, %p493
      %p495 = scmp.le.s32.totalorder 1, %s31
      %p496 = scmp.lt.s32.totalorder %s31, 3
      %p497 = pnand %p495, %p496
      %p498 = pneg %p497
      // Predicated region
      $region9: #{bert_forward.3} parent=5 // pred_check
        _
      $region10: #{bert_forward.3} parent=5 // pred_check_branch
        %500 = sbr.rel (%p497) target = $region12
      $region11: #{bert_forward.3} parent=5 // pred_region
        %s501 = ssub.s32 %s31, 1
        // Predicated region
        $region13: #{bert_forward.3} parent=11 // pred_check
          %p502 = pneg %p144
        $region14: #{bert_forward.3} parent=11 // pred_check_branch
          %504 = sbr.rel (%p502) target = $region16
        $region15: #{bert_forward.3} parent=11 // pred_region
          _
        $region16: #{bert_forward.3} parent=11 // pred_fallthru
          _
        // Predicated region
        $region17: #{bert_forward.3} parent=11 // pred_check
          %p505 = pneg %p165
        $region18: #{bert_forward.3} parent=11 // pred_check_branch
          %507 = sbr.rel (%p505) target = $region20
        $region19: #{bert_forward.3} parent=11 // pred_region
          _
        $region20: #{bert_forward.3} parent=11 // pred_fallthru
          _
        // Predicated region
        $region21: #{bert_forward.3} parent=11 // pred_check
          %p508 = pneg %p186
        $region22: #{bert_forward.3} parent=11 // pred_check_branch
          %510 = sbr.rel (%p508) target = $region24
        $region23: #{bert_forward.3} parent=11 // pred_region
          _
        $region24: #{bert_forward.3} parent=11 // pred_fallthru
          _
        // Predicated region
        $region25: #{bert_forward.3} parent=11 // pred_check
          %p511 = pneg %p207
        $region26: #{bert_forward.3} parent=11 // pred_check_branch
          %513 = sbr.rel (%p511) target = $region28
        $region27: #{bert_forward.3} parent=11 // pred_region
          _
        $region28: #{bert_forward.3} parent=11 // pred_fallthru
          _
        // Predicated region
        $region29: #{bert_forward.3} parent=11 // pred_check
          %p514 = pneg %p228
        $region30: #{bert_forward.3} parent=11 // pred_check_branch
          %516 = sbr.rel (%p514) target = $region32
        $region31: #{bert_forward.3} parent=11 // pred_region
          _
        $region32: #{bert_forward.3} parent=11 // pred_fallthru
          _
        // Predicated region
        $region33: #{bert_forward.3} parent=11 // pred_check
          %p517 = pneg %p249
        $region34: #{bert_forward.3} parent=11 // pred_check_branch
          %519 = sbr.rel (%p517) target = $region36
        $region35: #{bert_forward.3} parent=11 // pred_region
          _
        $region36: #{bert_forward.3} parent=11 // pred_fallthru
          _
        // Predicated region
        $region37: #{bert_forward.3} parent=11 // pred_check
          %p520 = pneg %p270
        $region38: #{bert_forward.3} parent=11 // pred_check_branch
          %522 = sbr.rel (%p520) target = $region40
        $region39: #{bert_forward.3} parent=11 // pred_region
          _
        $region40: #{bert_forward.3} parent=11 // pred_fallthru
          _
        // Predicated region
        $region41: #{bert_forward.3} parent=11 // pred_check
          %p523 = pneg %p291
        $region42: #{bert_forward.3} parent=11 // pred_check_branch
          %525 = sbr.rel (%p523) target = $region44
        $region43: #{bert_forward.3} parent=11 // pred_region
          _
        $region44: #{bert_forward.3} parent=11 // pred_fallthru
          _
        // Predicated region
        $region45: #{bert_forward.3} parent=11 // pred_check
          %p526 = pneg %p312
        $region46: #{bert_forward.3} parent=11 // pred_check_branch
          %528 = sbr.rel (%p526) target = $region48
        $region47: #{bert_forward.3} parent=11 // pred_region
          _
        $region48: #{bert_forward.3} parent=11 // pred_fallthru
          _
        // Predicated region
        $region49: #{bert_forward.3} parent=11 // pred_check
          %p529 = pneg %p333
        $region50: #{bert_forward.3} parent=11 // pred_check_branch
          %531 = sbr.rel (%p529) target = $region52
        $region51: #{bert_forward.3} parent=11 // pred_region
          _
        $region52: #{bert_forward.3} parent=11 // pred_fallthru
          _
        // Predicated region
        $region53: #{bert_forward.3} parent=11 // pred_check
          %p532 = pneg %p354
        $region54: #{bert_forward.3} parent=11 // pred_check_branch
          %534 = sbr.rel (%p532) target = $region56
        $region55: #{bert_forward.3} parent=11 // pred_region
          _
        $region56: #{bert_forward.3} parent=11 // pred_fallthru
          _
        // Predicated region
        $region57: #{bert_forward.3} parent=11 // pred_check
          %p535 = pneg %p375
        $region58: #{bert_forward.3} parent=11 // pred_check_branch
          %537 = sbr.rel (%p535) target = $region60
        $region59: #{bert_forward.3} parent=11 // pred_region
          _
        $region60: #{bert_forward.3} parent=11 // pred_fallthru
          _
        // Predicated region
        $region61: #{bert_forward.3} parent=11 // pred_check
          %p538 = pneg %p396
        $region62: #{bert_forward.3} parent=11 // pred_check_branch
          %540 = sbr.rel (%p538) target = $region64
        $region63: #{bert_forward.3} parent=11 // pred_region
          _
        $region64: #{bert_forward.3} parent=11 // pred_fallthru
          _
        // Predicated region
        $region65: #{bert_forward.3} parent=11 // pred_check
          %p541 = pneg %p417
        $region66: #{bert_forward.3} parent=11 // pred_check_branch
          %543 = sbr.rel (%p541) target = $region68
        $region67: #{bert_forward.3} parent=11 // pred_region
          _
        $region68: #{bert_forward.3} parent=11 // pred_fallthru
          _
        // Predicated region
        $region69: #{bert_forward.3} parent=11 // pred_check
          %p544 = pneg %p438
        $region70: #{bert_forward.3} parent=11 // pred_check_branch
          %546 = sbr.rel (%p544) target = $region72
        $region71: #{bert_forward.3} parent=11 // pred_region
          _
        $region72: #{bert_forward.3} parent=11 // pred_fallthru
          _
        // Predicated region
        $region73: #{bert_forward.3} parent=11 // pred_check
          %p547 = pneg %p459
        $region74: #{bert_forward.3} parent=11 // pred_check_branch
          %549 = sbr.rel (%p547) target = $region76
        $region75: #{bert_forward.3} parent=11 // pred_region
          _
        $region76: #{bert_forward.3} parent=11 // pred_fallthru
          _
      $region12: #{bert_forward.3} parent=5 // pred_fallthru
        _
      %p550 = scmp.lt.s32.totalorder %s31, 2
      // Predicated region
      $region77: #{bert_forward.3} parent=5 // pred_check
        %p551 = pneg %p550
      $region78: #{bert_forward.3} parent=5 // pred_check_branch
        %553 = sbr.rel (%p551) target = $region80
      $region79: #{bert_forward.3} parent=5 // pred_region
        // Predicated region
        $region81: #{bert_forward.3} parent=79 // pred_check
          %p554 = pneg %p65
        $region82: #{bert_forward.3} parent=79 // pred_check_branch
          %556 = sbr.rel (%p554) target = $region84
        $region83: #{bert_forward.3} parent=79 // pred_region
          %s557 = sand.u32 %s55, 1
          %s558 = scalar_lea.sflag [#allocation3], %s557
          %s559 = sand.u32 %s55, 1
          %s560 = smul.addr %s559, 8
          %s561 = scalar_lea.vmem [#allocation2], %s560
          %s563 = ssub.s32 128, 128
          %564 = vsyncadd %s558, %s563
          %s565 = sadd.s32 %s39, %s38
          %s566 = smul.addr %s565, 128
          %s567 = scalar_lea.hbm %s0, %s566
          %s569 = sshll.u32 %s561, 4
          %s570 = int_to_ptr.vmem [resolvable:$true] %s569
          %572 = dma.hbm_to_vmem [thread:$0]  %s567, 128, %s570, %s558
        $region84: #{bert_forward.3} parent=79 // pred_fallthru
          _
        // Predicated region
        $region85: #{bert_forward.3} parent=79 // pred_check
          %p573 = pneg %p91
        $region86: #{bert_forward.3} parent=79 // pred_check_branch
          %575 = sbr.rel (%p573) target = $region88
        $region87: #{bert_forward.3} parent=79 // pred_region
          %p576 = scmp.lt.s32.totalorder %s38, 1
          %s577 = scalar_select %p576, %s38, 1
          %s578 = smul.addr %s577, 8
          %s579 = scalar_lea.vmem %s1, %s578
        $region88: #{bert_forward.3} parent=79 // pred_fallthru
          _
        // Predicated region
        $region89: #{bert_forward.3} parent=79 // pred_check
          %p580 = pneg %p117
        $region90: #{bert_forward.3} parent=79 // pred_check_branch
          %582 = sbr.rel (%p580) target = $region92
        $region91: #{bert_forward.3} parent=79 // pred_region
          %p583 = scmp.lt.s32.totalorder %s38, 1
          %s584 = scalar_select %p583, %s38, 1
          %s585 = scalar_lea.vmem %s2, %s584
        $region92: #{bert_forward.3} parent=79 // pred_fallthru
          _
      $region80: #{bert_forward.3} parent=5 // pred_fallthru
        _
      %p586 = scmp.le.s32.totalorder 1, %s31
      %p587 = scmp.lt.s32.totalorder %s31, 3
      %p588 = pnand %p586, %p587
      %p589 = pneg %p588
      // Predicated region
      $region93: #{bert_forward.3} parent=5 // pred_check
        _
      $region94: #{bert_forward.3} parent=5 // pred_check_branch
        %591 = sbr.rel (%p588) target = $region96
      $region95: #{bert_forward.3} parent=5 // pred_region
        %s592 = ssub.s32 %s31, 1
        %s593 = sand.u32 %s58, 1
        %s594 = scalar_lea.sflag [#allocation3], %s593
        %s595 = sand.u32 %s58, 1
        %s596 = smul.addr %s595, 8
        %s597 = scalar_lea.vmem [#allocation2], %s596
        // Predicated region
        $region97: #{bert_forward.3} parent=95 // pred_check
          %p598 = pneg %p71
        $region98: #{bert_forward.3} parent=95 // pred_check_branch
          %600 = sbr.rel (%p598) target = $region100
        $region99: #{bert_forward.3} parent=95 // pred_region
          %601 = dma.done %s594, 128
        $region100: #{bert_forward.3} parent=95 // pred_fallthru
          _
        %s602 = sand.u32 %s58, 1
        %s603 = scalar_lea.sflag [#allocation3], %s602
        %s604 = sand.u32 %s58, 1
        %s605 = smul.addr %s604, 8
        %s606 = scalar_lea.vmem [#allocation2], %s605
        %p607 = pneg %p71
        %p608 = pneg %p68
        %p609 = scmp.lt.s32.totalorder %s40, 1
        %s610 = scalar_select %p609, %s40, 1
        %s611 = smul.addr %s610, 8
        %s612 = scalar_lea.vmem %s1, %s611
        %p613 = pneg %p97
        %p614 = pneg %p94
        %p615 = scmp.lt.s32.totalorder %s40, 1
        %s616 = scalar_select %p615, %s40, 1
        %s617 = scalar_lea.vmem %s2, %s616
        %p618 = pneg %p123
        %p619 = pneg %p120
        %p620 = pneg %p144
        %p621 = pneg %p141
        %p622 = pneg %p165
        %p623 = pneg %p162
        %p624 = pneg %p186
        %p625 = pneg %p183
        %p626 = pneg %p207
        %p627 = pneg %p204
        %p628 = pneg %p228
        %p629 = pneg %p225
        %p630 = pneg %p249
        %p631 = pneg %p246
        %p632 = pneg %p270
        %p633 = pneg %p267
        %p634 = pneg %p291
        %p635 = pneg %p288
        %p636 = pneg %p312
        %p637 = pneg %p309
        %p638 = pneg %p333
        %p639 = pneg %p330
        %p640 = pneg %p354
        %p641 = pneg %p351
        %p642 = pneg %p375
        %p643 = pneg %p372
        %p644 = pneg %p396
        %p645 = pneg %p393
        %p646 = pneg %p417
        %p647 = pneg %p414
        %p648 = pneg %p438
        %p649 = pneg %p435
        %p650 = pneg %p459
        %p651 = pneg %p456
        %p652 = pneg %p487
        %p653 = pneg %p484
        %s654 = sand.u32 %s474, 1
        %s655 = scalar_lea.sflag [#allocation4], %s654
        %s656 = sand.u32 %s474, 1
        %s657 = smul.addr %s656, 8
        %s658 = scalar_lea.vmem [#allocation5], %s657
        %p659 = scmp.lt.s32.totalorder %s40, 1
        %s660 = scalar_select %p659, %s40, 1
        %s661 = smul.addr %s660, 8
        %s662 = scalar_lea.vmem %s1, %s661
        %p663 = scmp.lt.s32.totalorder %s40, 1
        %s664 = scalar_select %p663, %s40, 1
        %s665 = scalar_lea.vmem %s2, %s664
        %v667 = vld [vmem:[%s597] sm:$0xff]
        %v668 = vld [vmem:[%s665] sm:$0x1]
        %v669 = vld [vmem:[%s11] sm:$0x1]
        %v670 = vld [vmem:[%s12] sm:$0x1]
        %v671 = vld [vmem:[%s13] sm:$0x1]
        %v672 = vld [vmem:[%s14] sm:$0x1]
        %v673 = vld [vmem:[%s4] sm:$0x1]
        %v674 = vld [vmem:[%s6] sm:$0x1]
        %v675 = vld [vmem:[%s8] sm:$0x1]
        %v676 = vld [vmem:[%s10] sm:$0x1]
        %v677 = vld [vmem:[%s16] sm:$0x1]
        %v678 = vld [vmem:[%s18] sm:$0x1]
        %v679 = vld [vmem:[%s9] sm:$0xf]
        %v680 = vld [vmem:[%s9 + $0x4] sm:$0xf]
        %v681 = vld [vmem:[%s9 + $0x8] sm:$0xf]
        %v682 = vld [vmem:[%s9 + $0xc] sm:$0xf]
        %vm683 = vcmask 261120
        %v684 = vsel %vm683, %v667, 0.0
        %685 = vadd.xlane.f32.xlu0 %v684
        %v686 = vpop.xlane.xlu0 %685
        %v687 = vrcp.pop 32.0
        %v688 = vmul.f32 %v686, %v687
        %v689 = vsub.f32 %v667, %v688
        %v690 = vmul.f32 %v689, %v689
        %v691 = vsel %vm683, %v690, 0.0
        %692 = vadd.xlane.f32.xlu0 %v691
        %v693 = vpop.xlane.xlu0 %692
        %v694 = vmul.f32 %v693, %v687
        %v695 = vadd.f32 %v694, 1e-05
        %v696 = vrsqrt.pop %v695
        %v697 = vmul.f32 %v689, %v696
        %v699 = vlaneseq
        %v700 = vshrl.u32 %v699, 7
        %v701 = vsub.s32 0, %v700
        %v702 = vrot.slane %v669, %v701
        %v704 = vmul.f32 %v697, %v702
        %v706 = vlaneseq
        %v707 = vshrl.u32 %v706, 7
        %v708 = vsub.s32 0, %v707
        %v709 = vrot.slane %v670, %v708
        %v711 = vadd.f32 %v704, %v709
        %v712 = vpack.c.bf16 %v711, %v711
        %v713 = vld [vmem:[%s3] sm:$0xf]
        %v714 = vld [vmem:[%s3 + $0x4] sm:$0xf]
        %v715 = vld [vmem:[%s3 + $0x8] sm:$0xf]
        %v716 = vld [vmem:[%s3 + $0xc] sm:$0xf]
        %v718 = vlaneseq
        %v719 = vshrl.u32 %v718, 7
        %v720 = vsub.s32 0, %v719
        %v721 = vrot.slane %v673, %v720
        %v727 = vunpack.c.l.b16 %v713
        %v728 = vunpack.c.l.b16 %v714
        %v729 = vunpack.c.l.b16 %v715
        %v730 = vunpack.c.l.b16 %v716
        %v731 = vpack.c.b16 %v728, %v727
        %v732 = vpack.c.b16 %v730, %v729
        %v736 = vsel %vm683, %v712, 0
        %738 = vmatprep.subr.bf16.mxu0 0
        %739 = vmatpush1.bf16.msra.mxu0 0
        %740 = vmatprep.subr.bf16.mxu0 0
        %741 = vmatpush1.bf16.msra.mxu0 0
        %742 = vmatprep.subr.bf16.mxu0 0
        %743 = vmatpush1.bf16.msra.mxu0 0
        %744 = vmatprep.subr.bf16.mxu0 0
        %745 = vmatpush1.bf16.msra.mxu0 0
        %746 = vmatprep.subr.bf16.mxu0 0
        %747 = vmatpush1.bf16.msra.mxu0 0
        %748 = vmatprep.subr.bf16.mxu0 0
        %749 = vmatpush1.bf16.msra.mxu0 0
        %750 = vmatprep.subr.bf16.mxu0 0
        %751 = vmatpush1.bf16.msra.mxu0 %v732
        %752 = vmatprep.subr.bf16.mxu0 0
        %753 = vmatpush1.bf16.msra.mxu0 %v731
        %754 = vmatprep.subr.bf16.mxu0 0
        %755 = vmatpush2.bf16.msra.mxu0 0
        %756 = vmatprep.subr.bf16.mxu0 0
        %757 = vmatpush2.bf16.msra.mxu0 0
        %758 = vmatprep.subr.bf16.mxu0 0
        %759 = vmatpush2.bf16.msra.mxu0 0
        %760 = vmatprep.subr.bf16.mxu0 0
        %761 = vmatpush2.bf16.msra.mxu0 0
        %762 = vmatprep.subr.bf16.mxu0 0
        %763 = vmatpush2.bf16.msra.mxu0 0
        %764 = vmatprep.subr.bf16.mxu0 0
        %765 = vmatpush2.bf16.msra.mxu0 0
        %766 = vmatprep.subr.bf16.mxu0 0
        %767 = vmatpush2.bf16.msra.mxu0 0
        %768 = vmatprep.subr.bf16.mxu0 0
        %769 = vmatpush2.bf16.msra.mxu0 0
        %770 = vmatprep.mubr.bf16.mxu0 0
        %771 = vmatmul.mubr.bf16.gmra.mxu0 %v736
        %v772 = vpop.f32.mrf.mxu0
        %v773 = vadd.f32 %v721, %v772
        %v774 = vpop.f32.mrf.mxu0
        %v775 = vpop.f32.mrf.mxu0
        %v776 = vpop.f32.mrf.mxu0
        %777 = vdwg.mxu0
        %v778 = vld [vmem:[%s5] sm:$0xf]
        %v779 = vld [vmem:[%s5 + $0x4] sm:$0xf]
        %v780 = vld [vmem:[%s5 + $0x8] sm:$0xf]
        %v781 = vld [vmem:[%s5 + $0xc] sm:$0xf]
        %v783 = vlaneseq
        %v784 = vshrl.u32 %v783, 7
        %v785 = vsub.s32 0, %v784
        %v786 = vrot.slane %v674, %v785
        %v792 = vunpack.c.l.b16 %v778
        %v793 = vunpack.c.l.b16 %v779
        %v794 = vunpack.c.l.b16 %v780
        %v795 = vunpack.c.l.b16 %v781
        %v796 = vpack.c.b16 %v793, %v792
        %v797 = vpack.c.b16 %v795, %v794
        %800 = vmatprep.subr.bf16.mxu0 0
        %801 = vmatpush1.bf16.msra.mxu0 0
        %802 = vmatprep.subr.bf16.mxu0 0
        %803 = vmatpush1.bf16.msra.mxu0 0
        %804 = vmatprep.subr.bf16.mxu0 0
        %805 = vmatpush1.bf16.msra.mxu0 0
        %806 = vmatprep.subr.bf16.mxu0 0
        %807 = vmatpush1.bf16.msra.mxu0 0
        %808 = vmatprep.subr.bf16.mxu0 0
        %809 = vmatpush1.bf16.msra.mxu0 0
        %810 = vmatprep.subr.bf16.mxu0 0
        %811 = vmatpush1.bf16.msra.mxu0 0
        %812 = vmatprep.subr.bf16.mxu0 0
        %813 = vmatpush1.bf16.msra.mxu0 %v797
        %814 = vmatprep.subr.bf16.mxu0 0
        %815 = vmatpush1.bf16.msra.mxu0 %v796
        %816 = vmatprep.subr.bf16.mxu0 0
        %817 = vmatpush2.bf16.msra.mxu0 0
        %818 = vmatprep.subr.bf16.mxu0 0
        %819 = vmatpush2.bf16.msra.mxu0 0
        %820 = vmatprep.subr.bf16.mxu0 0
        %821 = vmatpush2.bf16.msra.mxu0 0
        %822 = vmatprep.subr.bf16.mxu0 0
        %823 = vmatpush2.bf16.msra.mxu0 0
        %824 = vmatprep.subr.bf16.mxu0 0
        %825 = vmatpush2.bf16.msra.mxu0 0
        %826 = vmatprep.subr.bf16.mxu0 0
        %827 = vmatpush2.bf16.msra.mxu0 0
        %828 = vmatprep.subr.bf16.mxu0 0
        %829 = vmatpush2.bf16.msra.mxu0 0
        %830 = vmatprep.subr.bf16.mxu0 0
        %831 = vmatpush2.bf16.msra.mxu0 0
        %832 = vmatprep.mubr.bf16.mxu0 0
        %833 = vmatmul.mubr.bf16.gmra.mxu0 %v736
        %v834 = vpop.f32.mrf.mxu0
        %v835 = vadd.f32 %v786, %v834
        %v836 = vpop.f32.mrf.mxu0
        %v837 = vpop.f32.mrf.mxu0
        %v838 = vpop.f32.mrf.mxu0
        %839 = vdwg.mxu0
        %v840 = vld [vmem:[%s7] sm:$0xf]
        %v841 = vld [vmem:[%s7 + $0x4] sm:$0xf]
        %v842 = vld [vmem:[%s7 + $0x8] sm:$0xf]
        %v843 = vld [vmem:[%s7 + $0xc] sm:$0xf]
        %v845 = vlaneseq
        %v846 = vshrl.u32 %v845, 7
        %v847 = vsub.s32 0, %v846
        %v848 = vrot.slane %v675, %v847
        %v854 = vunpack.c.l.b16 %v840
        %v855 = vunpack.c.l.b16 %v841
        %v856 = vunpack.c.l.b16 %v842
        %v857 = vunpack.c.l.b16 %v843
        %v858 = vpack.c.b16 %v855, %v854
        %v859 = vpack.c.b16 %v857, %v856
        %862 = vmatprep.subr.bf16.mxu0 0
        %863 = vmatpush1.bf16.msra.mxu0 0
        %864 = vmatprep.subr.bf16.mxu0 0
        %865 = vmatpush1.bf16.msra.mxu0 0
        %866 = vmatprep.subr.bf16.mxu0 0
        %867 = vmatpush1.bf16.msra.mxu0 0
        %868 = vmatprep.subr.bf16.mxu0 0
        %869 = vmatpush1.bf16.msra.mxu0 0
        %870 = vmatprep.subr.bf16.mxu0 0
        %871 = vmatpush1.bf16.msra.mxu0 0
        %872 = vmatprep.subr.bf16.mxu0 0
        %873 = vmatpush1.bf16.msra.mxu0 0
        %874 = vmatprep.subr.bf16.mxu0 0
        %875 = vmatpush1.bf16.msra.mxu0 %v859
        %876 = vmatprep.subr.bf16.mxu0 0
        %877 = vmatpush1.bf16.msra.mxu0 %v858
        %878 = vmatprep.subr.bf16.mxu0 0
        %879 = vmatpush2.bf16.msra.mxu0 0
        %880 = vmatprep.subr.bf16.mxu0 0
        %881 = vmatpush2.bf16.msra.mxu0 0
        %882 = vmatprep.subr.bf16.mxu0 0
        %883 = vmatpush2.bf16.msra.mxu0 0
        %884 = vmatprep.subr.bf16.mxu0 0
        %885 = vmatpush2.bf16.msra.mxu0 0
        %886 = vmatprep.subr.bf16.mxu0 0
        %887 = vmatpush2.bf16.msra.mxu0 0
        %888 = vmatprep.subr.bf16.mxu0 0
        %889 = vmatpush2.bf16.msra.mxu0 0
        %890 = vmatprep.subr.bf16.mxu0 0
        %891 = vmatpush2.bf16.msra.mxu0 0
        %892 = vmatprep.subr.bf16.mxu0 0
        %893 = vmatpush2.bf16.msra.mxu0 0
        %894 = vmatprep.mubr.bf16.mxu0 0
        %895 = vmatmul.mubr.bf16.gmra.mxu0 %v736
        %v896 = vpop.f32.mrf.mxu0
        %v897 = vadd.f32 %v848, %v896
        %v898 = vpop.f32.mrf.mxu0
        %v899 = vpop.f32.mrf.mxu0
        %v900 = vpop.f32.mrf.mxu0
        %901 = vdwg.mxu0
        %v902 = vpack.c.bf16 %v773, %v773
        %v903 = vpack.c.bf16 %v835, %v835
        %v904 = vpack.c.bf16 %v897, %v897
        %vm905 = vcmask 64512
        %v907 = vsel %vm905, %v902, 0
        %v910 = vsel %vm905, %v903, 0
        %912 = vmatprep.subr.bf16.mxu0 0
        %913 = vmatpush1.bf16.xpose.msra.mxu0 0
        %914 = vmatprep.subr.bf16.mxu0 0
        %915 = vmatpush1.bf16.xpose.msra.mxu0 0
        %916 = vmatprep.subr.bf16.mxu0 0
        %917 = vmatpush1.bf16.xpose.msra.mxu0 0
        %918 = vmatprep.subr.bf16.mxu0 0
        %919 = vmatpush1.bf16.xpose.msra.mxu0 0
        %920 = vmatprep.subr.bf16.mxu0 0
        %921 = vmatpush1.bf16.xpose.msra.mxu0 0
        %922 = vmatprep.subr.bf16.mxu0 0
        %923 = vmatpush1.bf16.xpose.msra.mxu0 0
        %924 = vmatprep.subr.bf16.mxu0 0
        %925 = vmatpush1.bf16.xpose.msra.mxu0 0
        %926 = vmatprep.subr.bf16.mxu0 0
        %927 = vmatpush1.bf16.xpose.msra.mxu0 %v910
        %928 = vmatprep.subr.bf16.mxu0 0
        %929 = vmatpush2.bf16.xpose.msra.mxu0 0
        %930 = vmatprep.subr.bf16.mxu0 0
        %931 = vmatpush2.bf16.xpose.msra.mxu0 0
        %932 = vmatprep.subr.bf16.mxu0 0
        %933 = vmatpush2.bf16.xpose.msra.mxu0 0
        %934 = vmatprep.subr.bf16.mxu0 0
        %935 = vmatpush2.bf16.xpose.msra.mxu0 0
        %936 = vmatprep.subr.bf16.mxu0 0
        %937 = vmatpush2.bf16.xpose.msra.mxu0 0
        %938 = vmatprep.subr.bf16.mxu0 0
        %939 = vmatpush2.bf16.xpose.msra.mxu0 0
        %940 = vmatprep.subr.bf16.mxu0 0
        %941 = vmatpush2.bf16.xpose.msra.mxu0 0
        %942 = vmatprep.subr.bf16.mxu0 0
        %943 = vmatpush2.bf16.xpose.msra.mxu0 0
        %944 = vmatprep.mubr.bf16.mxu0 0
        %945 = vmatmul.mubr.bf16.gmra.mxu0 %v907
        %v946 = vpop.f32.mrf.mxu0
        %v947 = vadd.f32 0.0, %v946
        %v948 = vpop.f32.mrf.mxu0
        %v949 = vpop.f32.mrf.mxu0
        %v950 = vpop.f32.mrf.mxu0
        %951 = vdwg.mxu0
        %v952 = vmul.f32 %v947, 0.35355338
        %v954 = vlaneseq
        %v955 = vshrl.u32 %v954, 7
        %v956 = vsub.s32 0, %v955
        %v957 = vrot.slane %v668, %v956
        %v959 = vadd.f32 %v952, %v957
        %v960 = vsel %vm905, %v959, -inf
        %961 = vmax.xlane.f32.xlu0 %v960
        %v962 = vpop.xlane.xlu0 %961
        %v963 = vsub.f32 %v959, %v962
        %v964 = vmul.f32 %v963, 1.442695
        %v965 = vpow.pop %v964
        %v966 = vsel %vm905, %v965, 0.0
        %967 = vadd.xlane.f32.xlu0 %v966
        %v968 = vpop.xlane.xlu0 %967
        %v969 = vrcp.pop %v968
        %v970 = vmul.f32 %v965, %v969
        %v971 = vpack.c.bf16 %v970, %v970
        %v973 = vsel %vm905, %v971, 0
        %vm975 = vcmask 1043456
        %v977 = vsel %vm975, %v904, 0
        %979 = vmatprep.subr.bf16.mxu0 0
        %980 = vmatpush1.bf16.msra.mxu0 0
        %981 = vmatprep.subr.bf16.mxu0 0
        %982 = vmatpush1.bf16.msra.mxu0 0
        %983 = vmatprep.subr.bf16.mxu0 0
        %984 = vmatpush1.bf16.msra.mxu0 0
        %985 = vmatprep.subr.bf16.mxu0 0
        %986 = vmatpush1.bf16.msra.mxu0 0
        %987 = vmatprep.subr.bf16.mxu0 0
        %988 = vmatpush1.bf16.msra.mxu0 0
        %989 = vmatprep.subr.bf16.mxu0 0
        %990 = vmatpush1.bf16.msra.mxu0 0
        %991 = vmatprep.subr.bf16.mxu0 0
        %992 = vmatpush1.bf16.msra.mxu0 0
        %993 = vmatprep.subr.bf16.mxu0 0
        %994 = vmatpush1.bf16.msra.mxu0 %v977
        %995 = vmatprep.subr.bf16.mxu0 0
        %996 = vmatpush2.bf16.msra.mxu0 0
        %997 = vmatprep.subr.bf16.mxu0 0
        %998 = vmatpush2.bf16.msra.mxu0 0
        %999 = vmatprep.subr.bf16.mxu0 0
        %1000 = vmatpush2.bf16.msra.mxu0 0
        %1001 = vmatprep.subr.bf16.mxu0 0
        %1002 = vmatpush2.bf16.msra.mxu0 0
        %1003 = vmatprep.subr.bf16.mxu0 0
        %1004 = vmatpush2.bf16.msra.mxu0 0
        %1005 = vmatprep.subr.bf16.mxu0 0
        %1006 = vmatpush2.bf16.msra.mxu0 0
        %1007 = vmatprep.subr.bf16.mxu0 0
        %1008 = vmatpush2.bf16.msra.mxu0 0
        %1009 = vmatprep.subr.bf16.mxu0 0
        %1010 = vmatpush2.bf16.msra.mxu0 0
        %1011 = vmatprep.mubr.bf16.mxu0 0
        %1012 = vmatmul.mubr.bf16.gmra.mxu0 %v973
        %v1013 = vpop.f32.mrf.mxu0
        %v1014 = vadd.f32 0.0, %v1013
        %v1015 = vpop.f32.mrf.mxu0
        %v1016 = vpop.f32.mrf.mxu0
        %v1017 = vpop.f32.mrf.mxu0
        %1018 = vdwg.mxu0
        %v1019 = vpack.c.bf16 %v1014, %v1014
        %1021 = vrot.lane.b32.xlu0 %v902, 120
        %v1022 = vpop.permute.xlu0 %1021
        %1024 = vrot.lane.b32.xlu0 %v903, 120
        %v1025 = vpop.permute.xlu0 %1024
        %v1027 = vsel %vm905, %v1022, 0
        %v1030 = vsel %vm905, %v1025, 0
        %1032 = vmatprep.subr.bf16.mxu0 0
        %1033 = vmatpush1.bf16.xpose.msra.mxu0 0
        %1034 = vmatprep.subr.bf16.mxu0 0
        %1035 = vmatpush1.bf16.xpose.msra.mxu0 0
        %1036 = vmatprep.subr.bf16.mxu0 0
        %1037 = vmatpush1.bf16.xpose.msra.mxu0 0
        %1038 = vmatprep.subr.bf16.mxu0 0
        %1039 = vmatpush1.bf16.xpose.msra.mxu0 0
        %1040 = vmatprep.subr.bf16.mxu0 0
        %1041 = vmatpush1.bf16.xpose.msra.mxu0 0
        %1042 = vmatprep.subr.bf16.mxu0 0
        %1043 = vmatpush1.bf16.xpose.msra.mxu0 0
        %1044 = vmatprep.subr.bf16.mxu0 0
        %1045 = vmatpush1.bf16.xpose.msra.mxu0 0
        %1046 = vmatprep.subr.bf16.mxu0 0
        %1047 = vmatpush1.bf16.xpose.msra.mxu0 %v1030
        %1048 = vmatprep.subr.bf16.mxu0 0
        %1049 = vmatpush2.bf16.xpose.msra.mxu0 0
        %1050 = vmatprep.subr.bf16.mxu0 0
        %1051 = vmatpush2.bf16.xpose.msra.mxu0 0
        %1052 = vmatprep.subr.bf16.mxu0 0
        %1053 = vmatpush2.bf16.xpose.msra.mxu0 0
        %1054 = vmatprep.subr.bf16.mxu0 0
        %1055 = vmatpush2.bf16.xpose.msra.mxu0 0
        %1056 = vmatprep.subr.bf16.mxu0 0
        %1057 = vmatpush2.bf16.xpose.msra.mxu0 0
        %1058 = vmatprep.subr.bf16.mxu0 0
        %1059 = vmatpush2.bf16.xpose.msra.mxu0 0
        %1060 = vmatprep.subr.bf16.mxu0 0
        %1061 = vmatpush2.bf16.xpose.msra.mxu0 0
        %1062 = vmatprep.subr.bf16.mxu0 0
        %1063 = vmatpush2.bf16.xpose.msra.mxu0 0
        %1064 = vmatprep.mubr.bf16.mxu0 0
        %1065 = vmatmul.mubr.bf16.gmra.mxu0 %v1027
        %v1066 = vpop.f32.mrf.mxu0
        %v1067 = vadd.f32 0.0, %v1066
        %v1068 = vpop.f32.mrf.mxu0
        %v1069 = vpop.f32.mrf.mxu0
        %v1070 = vpop.f32.mrf.mxu0
        %1071 = vdwg.mxu0
        %v1072 = vmul.f32 %v1067, 0.35355338
        %v1073 = vadd.f32 %v1072, %v957
        %v1074 = vsel %vm905, %v1073, -inf
        %1075 = vmax.xlane.f32.xlu0 %v1074
        %v1076 = vpop.xlane.xlu0 %1075
        %v1077 = vsub.f32 %v1073, %v1076
        %v1078 = vmul.f32 %v1077, 1.442695
        %v1079 = vpow.pop %v1078
        %v1080 = vsel %vm905, %v1079, 0.0
        %1081 = vadd.xlane.f32.xlu0 %v1080
        %v1082 = vpop.xlane.xlu0 %1081
        %v1083 = vrcp.pop %v1082
        %v1084 = vmul.f32 %v1079, %v1083
        %v1085 = vpack.c.bf16 %v1084, %v1084
        %1087 = vrot.lane.b32.xlu0 %v904, 120
        %v1088 = vpop.permute.xlu0 %1087
        %v1090 = vsel %vm905, %v1085, 0
        %v1093 = vsel %vm975, %v1088, 0
        %1095 = vmatprep.subr.bf16.mxu0 0
        %1096 = vmatpush1.bf16.msra.mxu0 0
        %1097 = vmatprep.subr.bf16.mxu0 0
        %1098 = vmatpush1.bf16.msra.mxu0 0
        %1099 = vmatprep.subr.bf16.mxu0 0
        %1100 = vmatpush1.bf16.msra.mxu0 0
        %1101 = vmatprep.subr.bf16.mxu0 0
        %1102 = vmatpush1.bf16.msra.mxu0 0
        %1103 = vmatprep.subr.bf16.mxu0 0
        %1104 = vmatpush1.bf16.msra.mxu0 0
        %1105 = vmatprep.subr.bf16.mxu0 0
        %1106 = vmatpush1.bf16.msra.mxu0 0
        %1107 = vmatprep.subr.bf16.mxu0 0
        %1108 = vmatpush1.bf16.msra.mxu0 0
        %1109 = vmatprep.subr.bf16.mxu0 0
        %1110 = vmatpush1.bf16.msra.mxu0 %v1093
        %1111 = vmatprep.subr.bf16.mxu0 0
        %1112 = vmatpush2.bf16.msra.mxu0 0
        %1113 = vmatprep.subr.bf16.mxu0 0
        %1114 = vmatpush2.bf16.msra.mxu0 0
        %1115 = vmatprep.subr.bf16.mxu0 0
        %1116 = vmatpush2.bf16.msra.mxu0 0
        %1117 = vmatprep.subr.bf16.mxu0 0
        %1118 = vmatpush2.bf16.msra.mxu0 0
        %1119 = vmatprep.subr.bf16.mxu0 0
        %1120 = vmatpush2.bf16.msra.mxu0 0
        %1121 = vmatprep.subr.bf16.mxu0 0
        %1122 = vmatpush2.bf16.msra.mxu0 0
        %1123 = vmatprep.subr.bf16.mxu0 0
        %1124 = vmatpush2.bf16.msra.mxu0 0
        %1125 = vmatprep.subr.bf16.mxu0 0
        %1126 = vmatpush2.bf16.msra.mxu0 0
        %1127 = vmatprep.mubr.bf16.mxu0 0
        %1128 = vmatmul.mubr.bf16.gmra.mxu0 %v1090
        %v1129 = vpop.f32.mrf.mxu0
        %v1130 = vadd.f32 0.0, %v1129
        %v1131 = vpop.f32.mrf.mxu0
        %v1132 = vpop.f32.mrf.mxu0
        %v1133 = vpop.f32.mrf.mxu0
        %1134 = vdwg.mxu0
        %v1135 = vpack.c.bf16 %v1130, %v1130
        %v1137 = vsel %vm905, %v1135, 0
        %v1140 = vsel %vm975, %v680, 0
        %1142 = vmatprep.subr.bf16.mxu0 0
        %1143 = vmatpush1.bf16.msra.mxu0 0
        %1144 = vmatprep.subr.bf16.mxu0 0
        %1145 = vmatpush1.bf16.msra.mxu0 0
        %1146 = vmatprep.subr.bf16.mxu0 0
        %1147 = vmatpush1.bf16.msra.mxu0 0
        %1148 = vmatprep.subr.bf16.mxu0 0
        %1149 = vmatpush1.bf16.msra.mxu0 0
        %1150 = vmatprep.subr.bf16.mxu0 0
        %1151 = vmatpush1.bf16.msra.mxu0 0
        %1152 = vmatprep.subr.bf16.mxu0 0
        %1153 = vmatpush1.bf16.msra.mxu0 0
        %1154 = vmatprep.subr.bf16.mxu0 0
        %1155 = vmatpush1.bf16.msra.mxu0 0
        %1156 = vmatprep.subr.bf16.mxu0 0
        %1157 = vmatpush1.bf16.msra.mxu0 %v1140
        %1158 = vmatprep.subr.bf16.mxu0 0
        %1159 = vmatpush2.bf16.msra.mxu0 0
        %1160 = vmatprep.subr.bf16.mxu0 0
        %1161 = vmatpush2.bf16.msra.mxu0 0
        %1162 = vmatprep.subr.bf16.mxu0 0
        %1163 = vmatpush2.bf16.msra.mxu0 0
        %1164 = vmatprep.subr.bf16.mxu0 0
        %1165 = vmatpush2.bf16.msra.mxu0 0
        %1166 = vmatprep.subr.bf16.mxu0 0
        %1167 = vmatpush2.bf16.msra.mxu0 0
        %1168 = vmatprep.subr.bf16.mxu0 0
        %1169 = vmatpush2.bf16.msra.mxu0 0
        %1170 = vmatprep.subr.bf16.mxu0 0
        %1171 = vmatpush2.bf16.msra.mxu0 0
        %1172 = vmatprep.subr.bf16.mxu0 0
        %1173 = vmatpush2.bf16.msra.mxu0 0
        %1174 = vmatprep.mubr.bf16.mxu0 0
        %1175 = vmatmul.mubr.bf16.gmra.mxu0 %v1137
        %v1176 = vpop.f32.mrf.mxu0
        %v1177 = vadd.f32 0.0, %v1176
        %v1178 = vpop.f32.mrf.mxu0
        %v1179 = vpop.f32.mrf.mxu0
        %v1180 = vpop.f32.mrf.mxu0
        %1181 = vdwg.mxu0
        %v1183 = vsel %vm905, %v1019, 0
        %v1186 = vsel %vm975, %v679, 0
        %1188 = vmatprep.subr.bf16.mxu0 0
        %1189 = vmatpush1.bf16.msra.mxu0 0
        %1190 = vmatprep.subr.bf16.mxu0 0
        %1191 = vmatpush1.bf16.msra.mxu0 0
        %1192 = vmatprep.subr.bf16.mxu0 0
        %1193 = vmatpush1.bf16.msra.mxu0 0
        %1194 = vmatprep.subr.bf16.mxu0 0
        %1195 = vmatpush1.bf16.msra.mxu0 0
        %1196 = vmatprep.subr.bf16.mxu0 0
        %1197 = vmatpush1.bf16.msra.mxu0 0
        %1198 = vmatprep.subr.bf16.mxu0 0
        %1199 = vmatpush1.bf16.msra.mxu0 0
        %1200 = vmatprep.subr.bf16.mxu0 0
        %1201 = vmatpush1.bf16.msra.mxu0 0
        %1202 = vmatprep.subr.bf16.mxu0 0
        %1203 = vmatpush1.bf16.msra.mxu0 %v1186
        %1204 = vmatprep.subr.bf16.mxu0 0
        %1205 = vmatpush2.bf16.msra.mxu0 0
        %1206 = vmatprep.subr.bf16.mxu0 0
        %1207 = vmatpush2.bf16.msra.mxu0 0
        %1208 = vmatprep.subr.bf16.mxu0 0
        %1209 = vmatpush2.bf16.msra.mxu0 0
        %1210 = vmatprep.subr.bf16.mxu0 0
        %1211 = vmatpush2.bf16.msra.mxu0 0
        %1212 = vmatprep.subr.bf16.mxu0 0
        %1213 = vmatpush2.bf16.msra.mxu0 0
        %1214 = vmatprep.subr.bf16.mxu0 0
        %1215 = vmatpush2.bf16.msra.mxu0 0
        %1216 = vmatprep.subr.bf16.mxu0 0
        %1217 = vmatpush2.bf16.msra.mxu0 0
        %1218 = vmatprep.subr.bf16.mxu0 0
        %1219 = vmatpush2.bf16.msra.mxu0 0
        %1220 = vmatprep.mubr.bf16.mxu0 0
        %1221 = vmatmul.mubr.bf16.gmra.mxu0 %v1183
        %v1222 = vpop.f32.mrf.mxu0
        %v1223 = vadd.f32 %v1177, %v1222
        %v1224 = vpop.f32.mrf.mxu0
        %v1225 = vpop.f32.mrf.mxu0
        %v1226 = vpop.f32.mrf.mxu0
        %1227 = vdwg.mxu0
        %1228 = vrot.lane.b32.xlu0 %v902, 112
        %v1229 = vpop.permute.xlu0 %1228
        %1230 = vrot.lane.b32.xlu0 %v903, 112
        %v1231 = vpop.permute.xlu0 %1230
        %v1233 = vsel %vm905, %v1229, 0
        %v1236 = vsel %vm905, %v1231, 0
        %1238 = vmatprep.subr.bf16.mxu0 0
        %1239 = vmatpush1.bf16.xpose.msra.mxu0 0
        %1240 = vmatprep.subr.bf16.mxu0 0
        %1241 = vmatpush1.bf16.xpose.msra.mxu0 0
        %1242 = vmatprep.subr.bf16.mxu0 0
        %1243 = vmatpush1.bf16.xpose.msra.mxu0 0
        %1244 = vmatprep.subr.bf16.mxu0 0
        %1245 = vmatpush1.bf16.xpose.msra.mxu0 0
        %1246 = vmatprep.subr.bf16.mxu0 0
        %1247 = vmatpush1.bf16.xpose.msra.mxu0 0
        %1248 = vmatprep.subr.bf16.mxu0 0
        %1249 = vmatpush1.bf16.xpose.msra.mxu0 0
        %1250 = vmatprep.subr.bf16.mxu0 0
        %1251 = vmatpush1.bf16.xpose.msra.mxu0 0
        %1252 = vmatprep.subr.bf16.mxu0 0
        %1253 = vmatpush1.bf16.xpose.msra.mxu0 %v1236
        %1254 = vmatprep.subr.bf16.mxu0 0
        %1255 = vmatpush2.bf16.xpose.msra.mxu0 0
        %1256 = vmatprep.subr.bf16.mxu0 0
        %1257 = vmatpush2.bf16.xpose.msra.mxu0 0
        %1258 = vmatprep.subr.bf16.mxu0 0
        %1259 = vmatpush2.bf16.xpose.msra.mxu0 0
        %1260 = vmatprep.subr.bf16.mxu0 0
        %1261 = vmatpush2.bf16.xpose.msra.mxu0 0
        %1262 = vmatprep.subr.bf16.mxu0 0
        %1263 = vmatpush2.bf16.xpose.msra.mxu0 0
        %1264 = vmatprep.subr.bf16.mxu0 0
        %1265 = vmatpush2.bf16.xpose.msra.mxu0 0
        %1266 = vmatprep.subr.bf16.mxu0 0
        %1267 = vmatpush2.bf16.xpose.msra.mxu0 0
        %1268 = vmatprep.subr.bf16.mxu0 0
        %1269 = vmatpush2.bf16.xpose.msra.mxu0 0
        %1270 = vmatprep.mubr.bf16.mxu0 0
        %1271 = vmatmul.mubr.bf16.gmra.mxu0 %v1233
        %v1272 = vpop.f32.mrf.mxu0
        %v1273 = vadd.f32 0.0, %v1272
        %v1274 = vpop.f32.mrf.mxu0
        %v1275 = vpop.f32.mrf.mxu0
        %v1276 = vpop.f32.mrf.mxu0
        %1277 = vdwg.mxu0
        %v1278 = vmul.f32 %v1273, 0.35355338
        %v1279 = vadd.f32 %v1278, %v957
        %v1280 = vsel %vm905, %v1279, -inf
        %1281 = vmax.xlane.f32.xlu0 %v1280
        %v1282 = vpop.xlane.xlu0 %1281
        %v1283 = vsub.f32 %v1279, %v1282
        %v1284 = vmul.f32 %v1283, 1.442695
        %v1285 = vpow.pop %v1284
        %v1286 = vsel %vm905, %v1285, 0.0
        %1287 = vadd.xlane.f32.xlu0 %v1286
        %v1288 = vpop.xlane.xlu0 %1287
        %v1289 = vrcp.pop %v1288
        %v1290 = vmul.f32 %v1285, %v1289
        %v1291 = vpack.c.bf16 %v1290, %v1290
        %1292 = vrot.lane.b32.xlu0 %v904, 112
        %v1293 = vpop.permute.xlu0 %1292
        %v1295 = vsel %vm905, %v1291, 0
        %v1298 = vsel %vm975, %v1293, 0
        %1300 = vmatprep.subr.bf16.mxu0 0
        %1301 = vmatpush1.bf16.msra.mxu0 0
        %1302 = vmatprep.subr.bf16.mxu0 0
        %1303 = vmatpush1.bf16.msra.mxu0 0
        %1304 = vmatprep.subr.bf16.mxu0 0
        %1305 = vmatpush1.bf16.msra.mxu0 0
        %1306 = vmatprep.subr.bf16.mxu0 0
        %1307 = vmatpush1.bf16.msra.mxu0 0
        %1308 = vmatprep.subr.bf16.mxu0 0
        %1309 = vmatpush1.bf16.msra.mxu0 0
        %1310 = vmatprep.subr.bf16.mxu0 0
        %1311 = vmatpush1.bf16.msra.mxu0 0
        %1312 = vmatprep.subr.bf16.mxu0 0
        %1313 = vmatpush1.bf16.msra.mxu0 0
        %1314 = vmatprep.subr.bf16.mxu0 0
        %1315 = vmatpush1.bf16.msra.mxu0 %v1298
        %1316 = vmatprep.subr.bf16.mxu0 0
        %1317 = vmatpush2.bf16.msra.mxu0 0
        %1318 = vmatprep.subr.bf16.mxu0 0
        %1319 = vmatpush2.bf16.msra.mxu0 0
        %1320 = vmatprep.subr.bf16.mxu0 0
        %1321 = vmatpush2.bf16.msra.mxu0 0
        %1322 = vmatprep.subr.bf16.mxu0 0
        %1323 = vmatpush2.bf16.msra.mxu0 0
        %1324 = vmatprep.subr.bf16.mxu0 0
        %1325 = vmatpush2.bf16.msra.mxu0 0
        %1326 = vmatprep.subr.bf16.mxu0 0
        %1327 = vmatpush2.bf16.msra.mxu0 0
        %1328 = vmatprep.subr.bf16.mxu0 0
        %1329 = vmatpush2.bf16.msra.mxu0 0
        %1330 = vmatprep.subr.bf16.mxu0 0
        %1331 = vmatpush2.bf16.msra.mxu0 0
        %1332 = vmatprep.mubr.bf16.mxu0 0
        %1333 = vmatmul.mubr.bf16.gmra.mxu0 %v1295
        %v1334 = vpop.f32.mrf.mxu0
        %v1335 = vadd.f32 0.0, %v1334
        %v1336 = vpop.f32.mrf.mxu0
        %v1337 = vpop.f32.mrf.mxu0
        %v1338 = vpop.f32.mrf.mxu0
        %1339 = vdwg.mxu0
        %v1340 = vpack.c.bf16 %v1335, %v1335
        %v1342 = vsel %vm905, %v1340, 0
        %v1345 = vsel %vm975, %v681, 0
        %1347 = vmatprep.subr.bf16.mxu0 0
        %1348 = vmatpush1.bf16.msra.mxu0 0
        %1349 = vmatprep.subr.bf16.mxu0 0
        %1350 = vmatpush1.bf16.msra.mxu0 0
        %1351 = vmatprep.subr.bf16.mxu0 0
        %1352 = vmatpush1.bf16.msra.mxu0 0
        %1353 = vmatprep.subr.bf16.mxu0 0
        %1354 = vmatpush1.bf16.msra.mxu0 0
        %1355 = vmatprep.subr.bf16.mxu0 0
        %1356 = vmatpush1.bf16.msra.mxu0 0
        %1357 = vmatprep.subr.bf16.mxu0 0
        %1358 = vmatpush1.bf16.msra.mxu0 0
        %1359 = vmatprep.subr.bf16.mxu0 0
        %1360 = vmatpush1.bf16.msra.mxu0 0
        %1361 = vmatprep.subr.bf16.mxu0 0
        %1362 = vmatpush1.bf16.msra.mxu0 %v1345
        %1363 = vmatprep.subr.bf16.mxu0 0
        %1364 = vmatpush2.bf16.msra.mxu0 0
        %1365 = vmatprep.subr.bf16.mxu0 0
        %1366 = vmatpush2.bf16.msra.mxu0 0
        %1367 = vmatprep.subr.bf16.mxu0 0
        %1368 = vmatpush2.bf16.msra.mxu0 0
        %1369 = vmatprep.subr.bf16.mxu0 0
        %1370 = vmatpush2.bf16.msra.mxu0 0
        %1371 = vmatprep.subr.bf16.mxu0 0
        %1372 = vmatpush2.bf16.msra.mxu0 0
        %1373 = vmatprep.subr.bf16.mxu0 0
        %1374 = vmatpush2.bf16.msra.mxu0 0
        %1375 = vmatprep.subr.bf16.mxu0 0
        %1376 = vmatpush2.bf16.msra.mxu0 0
        %1377 = vmatprep.subr.bf16.mxu0 0
        %1378 = vmatpush2.bf16.msra.mxu0 0
        %1379 = vmatprep.mubr.bf16.mxu0 0
        %1380 = vmatmul.mubr.bf16.gmra.mxu0 %v1342
        %v1381 = vpop.f32.mrf.mxu0
        %v1382 = vadd.f32 0.0, %v1381
        %v1383 = vpop.f32.mrf.mxu0
        %v1384 = vpop.f32.mrf.mxu0
        %v1385 = vpop.f32.mrf.mxu0
        %1386 = vdwg.mxu0
        %v1387 = vadd.f32 %v1223, %v1382
        %1388 = vrot.lane.b32.xlu0 %v902, 104
        %v1389 = vpop.permute.xlu0 %1388
        %1390 = vrot.lane.b32.xlu0 %v903, 104
        %v1391 = vpop.permute.xlu0 %1390
        %v1393 = vsel %vm905, %v1389, 0
        %v1396 = vsel %vm905, %v1391, 0
        %1398 = vmatprep.subr.bf16.mxu0 0
        %1399 = vmatpush1.bf16.xpose.msra.mxu0 0
        %1400 = vmatprep.subr.bf16.mxu0 0
        %1401 = vmatpush1.bf16.xpose.msra.mxu0 0
        %1402 = vmatprep.subr.bf16.mxu0 0
        %1403 = vmatpush1.bf16.xpose.msra.mxu0 0
        %1404 = vmatprep.subr.bf16.mxu0 0
        %1405 = vmatpush1.bf16.xpose.msra.mxu0 0
        %1406 = vmatprep.subr.bf16.mxu0 0
        %1407 = vmatpush1.bf16.xpose.msra.mxu0 0
        %1408 = vmatprep.subr.bf16.mxu0 0
        %1409 = vmatpush1.bf16.xpose.msra.mxu0 0
        %1410 = vmatprep.subr.bf16.mxu0 0
        %1411 = vmatpush1.bf16.xpose.msra.mxu0 0
        %1412 = vmatprep.subr.bf16.mxu0 0
        %1413 = vmatpush1.bf16.xpose.msra.mxu0 %v1396
        %1414 = vmatprep.subr.bf16.mxu0 0
        %1415 = vmatpush2.bf16.xpose.msra.mxu0 0
        %1416 = vmatprep.subr.bf16.mxu0 0
        %1417 = vmatpush2.bf16.xpose.msra.mxu0 0
        %1418 = vmatprep.subr.bf16.mxu0 0
        %1419 = vmatpush2.bf16.xpose.msra.mxu0 0
        %1420 = vmatprep.subr.bf16.mxu0 0
        %1421 = vmatpush2.bf16.xpose.msra.mxu0 0
        %1422 = vmatprep.subr.bf16.mxu0 0
        %1423 = vmatpush2.bf16.xpose.msra.mxu0 0
        %1424 = vmatprep.subr.bf16.mxu0 0
        %1425 = vmatpush2.bf16.xpose.msra.mxu0 0
        %1426 = vmatprep.subr.bf16.mxu0 0
        %1427 = vmatpush2.bf16.xpose.msra.mxu0 0
        %1428 = vmatprep.subr.bf16.mxu0 0
        %1429 = vmatpush2.bf16.xpose.msra.mxu0 0
        %1430 = vmatprep.mubr.bf16.mxu0 0
        %1431 = vmatmul.mubr.bf16.gmra.mxu0 %v1393
        %v1432 = vpop.f32.mrf.mxu0
        %v1433 = vadd.f32 0.0, %v1432
        %v1434 = vpop.f32.mrf.mxu0
        %v1435 = vpop.f32.mrf.mxu0
        %v1436 = vpop.f32.mrf.mxu0
        %1437 = vdwg.mxu0
        %v1438 = vmul.f32 %v1433, 0.35355338
        %v1439 = vadd.f32 %v1438, %v957
        %v1440 = vsel %vm905, %v1439, -inf
        %1441 = vmax.xlane.f32.xlu0 %v1440
        %v1442 = vpop.xlane.xlu0 %1441
        %v1443 = vsub.f32 %v1439, %v1442
        %v1444 = vmul.f32 %v1443, 1.442695
        %v1445 = vpow.pop %v1444
        %v1446 = vsel %vm905, %v1445, 0.0
        %1447 = vadd.xlane.f32.xlu0 %v1446
        %v1448 = vpop.xlane.xlu0 %1447
        %v1449 = vrcp.pop %v1448
        %v1450 = vmul.f32 %v1445, %v1449
        %v1451 = vpack.c.bf16 %v1450, %v1450
        %1452 = vrot.lane.b32.xlu0 %v904, 104
        %v1453 = vpop.permute.xlu0 %1452
        %v1455 = vsel %vm905, %v1451, 0
        %v1458 = vsel %vm975, %v1453, 0
        %1460 = vmatprep.subr.bf16.mxu0 0
        %1461 = vmatpush1.bf16.msra.mxu0 0
        %1462 = vmatprep.subr.bf16.mxu0 0
        %1463 = vmatpush1.bf16.msra.mxu0 0
        %1464 = vmatprep.subr.bf16.mxu0 0
        %1465 = vmatpush1.bf16.msra.mxu0 0
        %1466 = vmatprep.subr.bf16.mxu0 0
        %1467 = vmatpush1.bf16.msra.mxu0 0
        %1468 = vmatprep.subr.bf16.mxu0 0
        %1469 = vmatpush1.bf16.msra.mxu0 0
        %1470 = vmatprep.subr.bf16.mxu0 0
        %1471 = vmatpush1.bf16.msra.mxu0 0
        %1472 = vmatprep.subr.bf16.mxu0 0
        %1473 = vmatpush1.bf16.msra.mxu0 0
        %1474 = vmatprep.subr.bf16.mxu0 0
        %1475 = vmatpush1.bf16.msra.mxu0 %v1458
        %1476 = vmatprep.subr.bf16.mxu0 0
        %1477 = vmatpush2.bf16.msra.mxu0 0
        %1478 = vmatprep.subr.bf16.mxu0 0
        %1479 = vmatpush2.bf16.msra.mxu0 0
        %1480 = vmatprep.subr.bf16.mxu0 0
        %1481 = vmatpush2.bf16.msra.mxu0 0
        %1482 = vmatprep.subr.bf16.mxu0 0
        %1483 = vmatpush2.bf16.msra.mxu0 0
        %1484 = vmatprep.subr.bf16.mxu0 0
        %1485 = vmatpush2.bf16.msra.mxu0 0
        %1486 = vmatprep.subr.bf16.mxu0 0
        %1487 = vmatpush2.bf16.msra.mxu0 0
        %1488 = vmatprep.subr.bf16.mxu0 0
        %1489 = vmatpush2.bf16.msra.mxu0 0
        %1490 = vmatprep.subr.bf16.mxu0 0
        %1491 = vmatpush2.bf16.msra.mxu0 0
        %1492 = vmatprep.mubr.bf16.mxu0 0
        %1493 = vmatmul.mubr.bf16.gmra.mxu0 %v1455
        %v1494 = vpop.f32.mrf.mxu0
        %v1495 = vadd.f32 0.0, %v1494
        %v1496 = vpop.f32.mrf.mxu0
        %v1497 = vpop.f32.mrf.mxu0
        %v1498 = vpop.f32.mrf.mxu0
        %1499 = vdwg.mxu0
        %v1500 = vpack.c.bf16 %v1495, %v1495
        %v1502 = vsel %vm905, %v1500, 0
        %v1505 = vsel %vm975, %v682, 0
        %1507 = vmatprep.subr.bf16.mxu0 0
        %1508 = vmatpush1.bf16.msra.mxu0 0
        %1509 = vmatprep.subr.bf16.mxu0 0
        %1510 = vmatpush1.bf16.msra.mxu0 0
        %1511 = vmatprep.subr.bf16.mxu0 0
        %1512 = vmatpush1.bf16.msra.mxu0 0
        %1513 = vmatprep.subr.bf16.mxu0 0
        %1514 = vmatpush1.bf16.msra.mxu0 0
        %1515 = vmatprep.subr.bf16.mxu0 0
        %1516 = vmatpush1.bf16.msra.mxu0 0
        %1517 = vmatprep.subr.bf16.mxu0 0
        %1518 = vmatpush1.bf16.msra.mxu0 0
        %1519 = vmatprep.subr.bf16.mxu0 0
        %1520 = vmatpush1.bf16.msra.mxu0 0
        %1521 = vmatprep.subr.bf16.mxu0 0
        %1522 = vmatpush1.bf16.msra.mxu0 %v1505
        %1523 = vmatprep.subr.bf16.mxu0 0
        %1524 = vmatpush2.bf16.msra.mxu0 0
        %1525 = vmatprep.subr.bf16.mxu0 0
        %1526 = vmatpush2.bf16.msra.mxu0 0
        %1527 = vmatprep.subr.bf16.mxu0 0
        %1528 = vmatpush2.bf16.msra.mxu0 0
        %1529 = vmatprep.subr.bf16.mxu0 0
        %1530 = vmatpush2.bf16.msra.mxu0 0
        %1531 = vmatprep.subr.bf16.mxu0 0
        %1532 = vmatpush2.bf16.msra.mxu0 0
        %1533 = vmatprep.subr.bf16.mxu0 0
        %1534 = vmatpush2.bf16.msra.mxu0 0
        %1535 = vmatprep.subr.bf16.mxu0 0
        %1536 = vmatpush2.bf16.msra.mxu0 0
        %1537 = vmatprep.subr.bf16.mxu0 0
        %1538 = vmatpush2.bf16.msra.mxu0 0
        %1539 = vmatprep.mubr.bf16.mxu0 0
        %1540 = vmatmul.mubr.bf16.gmra.mxu0 %v1502
        %v1541 = vpop.f32.mrf.mxu0
        %v1542 = vadd.f32 0.0, %v1541
        %v1543 = vpop.f32.mrf.mxu0
        %v1544 = vpop.f32.mrf.mxu0
        %v1545 = vpop.f32.mrf.mxu0
        %1546 = vdwg.mxu0
        %v1547 = vadd.f32 %v1387, %v1542
        %v1548 = vadd.f32 %v667, %v1547
        %v1550 = vlaneseq
        %v1551 = vshrl.u32 %v1550, 7
        %v1552 = vsub.s32 0, %v1551
        %v1553 = vrot.slane %v676, %v1552
        %v1555 = vadd.f32 %v1548, %v1553
        %v1556 = vsel %vm683, %v1555, 0.0
        %1557 = vadd.xlane.f32.xlu0 %v1556
        %v1558 = vpop.xlane.xlu0 %1557
        %v1559 = vmul.f32 %v1558, %v687
        %v1560 = vsub.f32 %v1555, %v1559
        %v1561 = vmul.f32 %v1560, %v1560
        %v1562 = vsel %vm683, %v1561, 0.0
        %1563 = vadd.xlane.f32.xlu0 %v1562
        %v1564 = vpop.xlane.xlu0 %1563
        %v1565 = vmul.f32 %v1564, %v687
        %v1566 = vadd.f32 %v1565, 1e-05
        %v1567 = vrsqrt.pop %v1566
        %v1568 = vmul.f32 %v1560, %v1567
        %v1570 = vlaneseq
        %v1571 = vshrl.u32 %v1570, 7
        %v1572 = vsub.s32 0, %v1571
        %v1573 = vrot.slane %v671, %v1572
        %v1575 = vmul.f32 %v1568, %v1573
        %v1577 = vlaneseq
        %v1578 = vshrl.u32 %v1577, 7
        %v1579 = vsub.s32 0, %v1578
        %v1580 = vrot.slane %v672, %v1579
        %v1582 = vadd.f32 %v1575, %v1580
        %v1583 = vpack.c.bf16 %v1582, %v1582
        %v1584 = vld [vmem:[%s15] sm:$0xf]
        %v1585 = vld [vmem:[%s15 + $0x4] sm:$0xf]
        %v1586 = vld [vmem:[%s15 + $0x8] sm:$0xf]
        %v1587 = vld [vmem:[%s15 + $0xc] sm:$0xf]
        %v1589 = vlaneseq
        %v1590 = vshrl.u32 %v1589, 7
        %v1591 = vsub.s32 0, %v1590
        %v1592 = vrot.slane %v677, %v1591
        %v1598 = vunpack.c.l.b16 %v1584
        %v1599 = vunpack.c.l.b16 %v1585
        %v1600 = vunpack.c.l.b16 %v1586
        %v1601 = vunpack.c.l.b16 %v1587
        %v1602 = vpack.c.b16 %v1599, %v1598
        %v1603 = vpack.c.b16 %v1601, %v1600
        %v1607 = vsel %vm683, %v1583, 0
        %1609 = vmatprep.subr.bf16.mxu0 0
        %1610 = vmatpush1.bf16.msra.mxu0 0
        %1611 = vmatprep.subr.bf16.mxu0 0
        %1612 = vmatpush1.bf16.msra.mxu0 0
        %1613 = vmatprep.subr.bf16.mxu0 0
        %1614 = vmatpush1.bf16.msra.mxu0 0
        %1615 = vmatprep.subr.bf16.mxu0 0
        %1616 = vmatpush1.bf16.msra.mxu0 0
        %1617 = vmatprep.subr.bf16.mxu0 0
        %1618 = vmatpush1.bf16.msra.mxu0 0
        %1619 = vmatprep.subr.bf16.mxu0 0
        %1620 = vmatpush1.bf16.msra.mxu0 0
        %1621 = vmatprep.subr.bf16.mxu0 0
        %1622 = vmatpush1.bf16.msra.mxu0 %v1603
        %1623 = vmatprep.subr.bf16.mxu0 0
        %1624 = vmatpush1.bf16.msra.mxu0 %v1602
        %1625 = vmatprep.subr.bf16.mxu0 0
        %1626 = vmatpush2.bf16.msra.mxu0 0
        %1627 = vmatprep.subr.bf16.mxu0 0
        %1628 = vmatpush2.bf16.msra.mxu0 0
        %1629 = vmatprep.subr.bf16.mxu0 0
        %1630 = vmatpush2.bf16.msra.mxu0 0
        %1631 = vmatprep.subr.bf16.mxu0 0
        %1632 = vmatpush2.bf16.msra.mxu0 0
        %1633 = vmatprep.subr.bf16.mxu0 0
        %1634 = vmatpush2.bf16.msra.mxu0 0
        %1635 = vmatprep.subr.bf16.mxu0 0
        %1636 = vmatpush2.bf16.msra.mxu0 0
        %1637 = vmatprep.subr.bf16.mxu0 0
        %1638 = vmatpush2.bf16.msra.mxu0 0
        %1639 = vmatprep.subr.bf16.mxu0 0
        %1640 = vmatpush2.bf16.msra.mxu0 0
        %1641 = vmatprep.mubr.bf16.mxu0 0
        %1642 = vmatmul.mubr.bf16.gmra.mxu0 %v1607
        %v1643 = vpop.f32.mrf.mxu0
        %v1644 = vadd.f32 %v1592, %v1643
        %v1645 = vpop.f32.mrf.mxu0
        %v1646 = vpop.f32.mrf.mxu0
        %v1647 = vpop.f32.mrf.mxu0
        %1648 = vdwg.mxu0
        %v1649 = vmul.f32 %v1644, 0.5
        %v1650 = vmul.f32 %v1644, 0.044715
        %v1651 = vmul.f32 %v1650, %v1644
        %v1652 = vmul.f32 %v1651, %v1644
        %v1653 = vadd.f32 %v1644, %v1652
        %v1654 = vmul.f32 %v1653, 0.7978846
        %v1655 = vtanh.pop %v1654
        %v1656 = vadd.f32 %v1655, 1.0
        %v1657 = vmul.f32 %v1649, %v1656
        %v1658 = vpack.c.bf16 %v1657, %v1657
        %v1659 = vld [vmem:[%s17] sm:$0xf]
        %v1660 = vld [vmem:[%s17 + $0x4] sm:$0xf]
        %v1661 = vld [vmem:[%s17 + $0x8] sm:$0xf]
        %v1662 = vld [vmem:[%s17 + $0xc] sm:$0xf]
        %v1663 = vld [vmem:[%s17 + $0x10] sm:$0xf]
        %v1664 = vld [vmem:[%s17 + $0x14] sm:$0xf]
        %v1665 = vld [vmem:[%s17 + $0x18] sm:$0xf]
        %v1666 = vld [vmem:[%s17 + $0x1c] sm:$0xf]
        %v1667 = vld [vmem:[%s17 + $0x20] sm:$0xf]
        %v1668 = vld [vmem:[%s17 + $0x24] sm:$0xf]
        %v1669 = vld [vmem:[%s17 + $0x28] sm:$0xf]
        %v1670 = vld [vmem:[%s17 + $0x2c] sm:$0xf]
        %v1671 = vld [vmem:[%s17 + $0x30] sm:$0xf]
        %v1672 = vld [vmem:[%s17 + $0x34] sm:$0xf]
        %v1673 = vld [vmem:[%s17 + $0x38] sm:$0xf]
        %v1674 = vld [vmem:[%s17 + $0x3c] sm:$0xf]
        %v1676 = vlaneseq
        %v1677 = vshrl.u32 %v1676, 7
        %v1678 = vsub.s32 0, %v1677
        %v1679 = vrot.slane %v678, %v1678
        %v1697 = vunpack.c.l.b16 %v1659
        %v1698 = vunpack.c.l.b16 %v1660
        %v1699 = vunpack.c.l.b16 %v1661
        %v1700 = vunpack.c.l.b16 %v1662
        %v1701 = vunpack.c.l.b16 %v1663
        %v1702 = vunpack.c.l.b16 %v1664
        %v1703 = vunpack.c.l.b16 %v1665
        %v1704 = vunpack.c.l.b16 %v1666
        %v1705 = vunpack.c.l.b16 %v1667
        %v1706 = vunpack.c.l.b16 %v1668
        %v1707 = vunpack.c.l.b16 %v1669
        %v1708 = vunpack.c.l.b16 %v1670
        %v1709 = vunpack.c.l.b16 %v1671
        %v1710 = vunpack.c.l.b16 %v1672
        %v1711 = vunpack.c.l.b16 %v1673
        %v1712 = vunpack.c.l.b16 %v1674
        %v1713 = vpack.c.b16 %v1698, %v1697
        %v1714 = vpack.c.b16 %v1700, %v1699
        %v1715 = vpack.c.b16 %v1702, %v1701
        %v1716 = vpack.c.b16 %v1704, %v1703
        %v1717 = vpack.c.b16 %v1706, %v1705
        %v1718 = vpack.c.b16 %v1708, %v1707
        %v1719 = vpack.c.b16 %v1710, %v1709
        %v1720 = vpack.c.b16 %v1712, %v1711
        %1729 = vmatprep.subr.bf16.mxu0 0
        %1730 = vmatpush1.bf16.msra.mxu0 %v1720
        %1731 = vmatprep.subr.bf16.mxu0 0
        %1732 = vmatpush1.bf16.msra.mxu0 %v1719
        %1733 = vmatprep.subr.bf16.mxu0 0
        %1734 = vmatpush1.bf16.msra.mxu0 %v1718
        %1735 = vmatprep.subr.bf16.mxu0 0
        %1736 = vmatpush1.bf16.msra.mxu0 %v1717
        %1737 = vmatprep.subr.bf16.mxu0 0
        %1738 = vmatpush1.bf16.msra.mxu0 %v1716
        %1739 = vmatprep.subr.bf16.mxu0 0
        %1740 = vmatpush1.bf16.msra.mxu0 %v1715
        %1741 = vmatprep.subr.bf16.mxu0 0
        %1742 = vmatpush1.bf16.msra.mxu0 %v1714
        %1743 = vmatprep.subr.bf16.mxu0 0
        %1744 = vmatpush1.bf16.msra.mxu0 %v1713
        %1745 = vmatprep.subr.bf16.mxu0 0
        %1746 = vmatpush2.bf16.msra.mxu0 0
        %1747 = vmatprep.subr.bf16.mxu0 0
        %1748 = vmatpush2.bf16.msra.mxu0 0
        %1749 = vmatprep.subr.bf16.mxu0 0
        %1750 = vmatpush2.bf16.msra.mxu0 0
        %1751 = vmatprep.subr.bf16.mxu0 0
        %1752 = vmatpush2.bf16.msra.mxu0 0
        %1753 = vmatprep.subr.bf16.mxu0 0
        %1754 = vmatpush2.bf16.msra.mxu0 0
        %1755 = vmatprep.subr.bf16.mxu0 0
        %1756 = vmatpush2.bf16.msra.mxu0 0
        %1757 = vmatprep.subr.bf16.mxu0 0
        %1758 = vmatpush2.bf16.msra.mxu0 0
        %1759 = vmatprep.subr.bf16.mxu0 0
        %1760 = vmatpush2.bf16.msra.mxu0 0
        %1761 = vmatprep.mubr.bf16.mxu0 0
        %1762 = vmatmul.mubr.bf16.gmra.mxu0 %v1658
        %v1763 = vpop.f32.mrf.mxu0
        %v1764 = vadd.f32 %v1679, %v1763
        %v1765 = vpop.f32.mrf.mxu0
        %v1766 = vpop.f32.mrf.mxu0
        %v1767 = vpop.f32.mrf.mxu0
        %1768 = vdwg.mxu0
        %v1769 = vadd.f32 %v1555, %v1764
        %1770 = vst.msk [vmem:[%s658] sm:$0xff] %vm683, %v1769
        %s1771 = sand.u32 %s474, 1
        %s1772 = scalar_lea.sflag [#allocation4], %s1771
        %s1773 = sand.u32 %s474, 1
        %s1774 = smul.addr %s1773, 8
        %s1775 = scalar_lea.vmem [#allocation5], %s1774
        // Predicated region
        $region101: #{bert_forward.3} parent=95 // pred_check
          %p1776 = pneg %p484
        $region102: #{bert_forward.3} parent=95 // pred_check_branch
          %1778 = sbr.rel (%p1776) target = $region104
        $region103: #{bert_forward.3} parent=95 // pred_region
          %s1780 = ssub.s32 128, 128
          %1781 = vsyncadd %s1772, %s1780
          %s1782 = sadd.s32 %s41, %s40
          %s1783 = smul.addr %s1782, 128
          %s1784 = scalar_lea.hbm %s19, %s1783
          %s1786 = sshll.u32 %s1775, 4
          %s1787 = int_to_ptr.vmem [resolvable:$true] %s1786
          %1789 = dma.vmem_to_hbm [thread:$0]  %s1787, 128, %s1784, %s1772
        $region104: #{bert_forward.3} parent=95 // pred_fallthru
          _
      $region96: #{bert_forward.3} parent=5 // pred_fallthru
        _
      %p1790 = scmp.le.s32.totalorder 2, %s31
      // Predicated region
      $region105: #{bert_forward.3} parent=5 // pred_check
        %p1791 = pneg %p1790
      $region106: #{bert_forward.3} parent=5 // pred_check_branch
        %1793 = sbr.rel (%p1791) target = $region108
      $region107: #{bert_forward.3} parent=5 // pred_region
        %s1794 = ssub.s32 %s31, 2
        // Predicated region
        $region109: #{bert_forward.3} parent=107 // pred_check
          %p1795 = pneg %p490
        $region110: #{bert_forward.3} parent=107 // pred_check_branch
          %1797 = sbr.rel (%p1795) target = $region112
        $region111: #{bert_forward.3} parent=107 // pred_region
          %s1798 = sand.u32 %s475, 1
          %s1799 = scalar_lea.sflag [#allocation4], %s1798
          %s1800 = sand.u32 %s475, 1
          %s1801 = smul.addr %s1800, 8
          %s1802 = scalar_lea.vmem [#allocation5], %s1801
          %1803 = dma.done %s1799, 128
        $region112: #{bert_forward.3} parent=107 // pred_fallthru
          _
      $region108: #{bert_forward.3} parent=5 // pred_fallthru
        _
    $region6: #{bert_forward.3} parent=1 // loop_footer
      %s35 = sadd.s32 1, %s31
    $region7: #{bert_forward.3} parent=1 // loop_footer_branch
      %30 = sbr.rel target = $region3
    $region8: #{bert_forward.3} parent=1 // loop_exit
      _
    %1804 = vsyncpa [#allocation3], 1
    %s1805 = scalar_lea.sflag [#allocation3], 1
    %1806 = vsyncpa %s1805, 1
    %1807 = vsyncpa [#allocation4], 1
    %s1808 = scalar_lea.sflag [#allocation4], 1
    %1809 = vsyncpa %s1808, 1

// kernel: bert_forward.2
$region0: #{bert_forward.2}
  #allocation0 [shape = 'u32[]', space=smem, size = 0x4, offset = 0x4, fixed_abs, tag = 'smem constant byte address 0x4 - core index']
  #allocation1 [shape = 'u32[144,128]{1,0:T(1,128)}', space=vmem, size = 0x12000, scoped, tag = 'internal scratch']
  %s0 = inlined_call_operand.vmem [shape: f32[2,8,32], index: 0, kind: input, shape index: {}, may-alias: {0,19}]
  %s1 = inlined_call_operand.vmem [shape: f32[2,8,32], index: 1, kind: input, shape index: {}]
  %s2 = inlined_call_operand.vmem [shape: f32[2,1,8], index: 2, kind: input, shape index: {}]
  %s3 = inlined_call_operand.vmem [shape: bf16[32,32], index: 3, kind: input, shape index: {}]
  %s4 = inlined_call_operand.vmem [shape: f32[1,32], index: 4, kind: input, shape index: {}]
  %s5 = inlined_call_operand.vmem [shape: bf16[32,32], index: 5, kind: input, shape index: {}]
  %s6 = inlined_call_operand.vmem [shape: f32[1,32], index: 6, kind: input, shape index: {}]
  %s7 = inlined_call_operand.vmem [shape: bf16[32,32], index: 7, kind: input, shape index: {}]
  %s8 = inlined_call_operand.vmem [shape: f32[1,32], index: 8, kind: input, shape index: {}]
  %s9 = inlined_call_operand.vmem [shape: bf16[32,32], index: 9, kind: input, shape index: {}]
  %s10 = inlined_call_operand.vmem [shape: f32[1,32], index: 10, kind: input, shape index: {}]
  %s11 = inlined_call_operand.vmem [shape: f32[1,32], index: 11, kind: input, shape index: {}]
  %s12 = inlined_call_operand.vmem [shape: f32[1,32], index: 12, kind: input, shape index: {}]
  %s13 = inlined_call_operand.vmem [shape: f32[1,32], index: 13, kind: input, shape index: {}]
  %s14 = inlined_call_operand.vmem [shape: f32[1,32], index: 14, kind: input, shape index: {}]
  %s15 = inlined_call_operand.vmem [shape: bf16[32,128], index: 15, kind: input, shape index: {}]
  %s16 = inlined_call_operand.vmem [shape: f32[1,128], index: 16, kind: input, shape index: {}]
  %s17 = inlined_call_operand.vmem [shape: bf16[128,32], index: 17, kind: input, shape index: {}]
  %s18 = inlined_call_operand.vmem [shape: f32[1,32], index: 18, kind: input, shape index: {}]
  %s19 = inlined_call_operand.vmem [shape: f32[2,8,32], index: 19, kind: output, shape index: {}, may-alias: {0,19}]
  %s20 = sld [smem:[#allocation0]]
  $region109: #{bert_forward.2} parent=0
    _
  %s22 = ssub.s32 1, %s20
  %s23 = scalar_select 0, %s22, %s20
  loop: start=0, step=1, limit=4
  $region2: #{bert_forward.2} parent=0 // loop_pre_header
    _
  $region3: #{bert_forward.2} parent=0 // loop_header
    %s25 = sphi 0, %s29
    %p26 = scmp.ge.s32.totalorder %s25, 4
    %s32 = sphi 0, %s44
    %s33 = sphi 0, %s40
    %s34 = sphi 0, %s32
    %s35 = sphi 0, %s33
    %s36 = sphi 0, %s34
    %s37 = sphi 0, %s35
    %s49 = sphi 0, %s51
    %s52 = sphi 0, %s49
    %s53 = sphi 0, %s52
    %s69 = sphi 0, %s53
    %s75 = sphi 0, %s77
    %s78 = sphi 0, %s75
    %s79 = sphi 0, %s78
    %s95 = sphi 0, %s79
    %s101 = sphi 0, %s103
    %s104 = sphi 0, %s101
    %s105 = sphi 0, %s104
    %s121 = sphi 0, %s105
    %s125 = sphi 0, %s125
    %s127 = sphi 0, %s125
    %s128 = sphi 0, %s127
    %s142 = sphi 0, %s128
    %s146 = sphi 0, %s146
    %s148 = sphi 0, %s146
    %s149 = sphi 0, %s148
    %s163 = sphi 0, %s149
    %s167 = sphi 0, %s167
    %s169 = sphi 0, %s167
    %s170 = sphi 0, %s169
    %s184 = sphi 0, %s170
    %s188 = sphi 0, %s188
    %s190 = sphi 0, %s188
    %s191 = sphi 0, %s190
    %s205 = sphi 0, %s191
    %s209 = sphi 0, %s209
    %s211 = sphi 0, %s209
    %s212 = sphi 0, %s211
    %s226 = sphi 0, %s212
    %s230 = sphi 0, %s230
    %s232 = sphi 0, %s230
    %s233 = sphi 0, %s232
    %s247 = sphi 0, %s233
    %s251 = sphi 0, %s251
    %s253 = sphi 0, %s251
    %s254 = sphi 0, %s253
    %s268 = sphi 0, %s254
    %s272 = sphi 0, %s272
    %s274 = sphi 0, %s272
    %s275 = sphi 0, %s274
    %s289 = sphi 0, %s275
    %s293 = sphi 0, %s293
    %s295 = sphi 0, %s293
    %s296 = sphi 0, %s295
    %s310 = sphi 0, %s296
    %s314 = sphi 0, %s314
    %s316 = sphi 0, %s314
    %s317 = sphi 0, %s316
    %s331 = sphi 0, %s317
    %s335 = sphi 0, %s335
    %s337 = sphi 0, %s335
    %s338 = sphi 0, %s337
    %s352 = sphi 0, %s338
    %s356 = sphi 0, %s356
    %s358 = sphi 0, %s356
    %s359 = sphi 0, %s358
    %s373 = sphi 0, %s359
    %s377 = sphi 0, %s377
    %s379 = sphi 0, %s377
    %s380 = sphi 0, %s379
    %s394 = sphi 0, %s380
    %s398 = sphi 0, %s398
    %s400 = sphi 0, %s398
    %s401 = sphi 0, %s400
    %s415 = sphi 0, %s401
    %s419 = sphi 0, %s419
    %s421 = sphi 0, %s419
    %s422 = sphi 0, %s421
    %s436 = sphi 0, %s422
    %s440 = sphi 0, %s440
    %s442 = sphi 0, %s440
    %s443 = sphi 0, %s442
    %s457 = sphi 0, %s443
    %s465 = sphi 0, %s467
    %s468 = sphi 0, %s465
    %s469 = sphi 0, %s468
    %s485 = sphi 0, %s469
  $region4: #{bert_forward.2} parent=0 // loop_header_branch
    %28 = sbr.rel (%p26) target = $region8
  $region5: #{bert_forward.2} parent=0 // loop_body
    %s30 = ssub.s32 %s25, 1
    %s31 = ssub.s32 %s25, 2
    %s38 = sadd.s32 1, %s33
    %p39 = scmp.ge.s32.totalorder %s38, 1
    %s40 = scalar_select %p39, 0, %s38
    %s41 = sadd.s32 1, %s32
    %s42 = scalar_select %p39, %s41, %s32
    %p43 = scmp.ge.s32.totalorder %s42, 2
    %s44 = scalar_select %p43, 0, %s42
    %s45 = ssub.s32 %s32, %s44
    %s46 = ssub.s32 %s33, %s40
    %s47 = sor.u32 %s45, %s46
    %p48 = scmp.eq.s32.totalorder %s47, 0
    %s50 = sadd.s32 %s49, 1
    %s51 = scalar_select %p48, %s49, %s50
    %p54 = pneg %p48
    %p55 = scmp.eq.s32.totalorder %s25, 1
    %p56 = por %p54, %p55
    %p57 = scmp.ne.s32.totalorder %s49, %s52
    %p58 = scmp.eq.s32.totalorder %s25, 0
    %p59 = por %p57, %p58
    %p60 = scmp.ne.s32.totalorder %s49, %s52
    %p61 = scmp.eq.s32.totalorder %s30, 1
    %p62 = por %p60, %p61
    %p63 = scmp.ne.s32.totalorder %s52, %s53
    %p64 = scmp.eq.s32.totalorder %s30, 0
    %p65 = por %p63, %p64
    %p66 = scmp.ne.s32.totalorder %s52, %s53
    %p67 = scmp.eq.s32.totalorder %s31, 1
    %p68 = por %p66, %p67
    %p70 = scmp.ne.s32.totalorder %s53, %s69
    %p71 = scmp.eq.s32.totalorder %s31, 0
    %p72 = por %p70, %p71
    %s73 = ssub.s32 %s32, %s44
    %p74 = scmp.eq.s32.totalorder %s73, 0
    %s76 = sadd.s32 %s75, 1
    %s77 = scalar_select %p74, %s75, %s76
    %p80 = pneg %p74
    %p81 = scmp.eq.s32.totalorder %s25, 1
    %p82 = por %p80, %p81
    %p83 = scmp.ne.s32.totalorder %s75, %s78
    %p84 = scmp.eq.s32.totalorder %s25, 0
    %p85 = por %p83, %p84
    %p86 = scmp.ne.s32.totalorder %s75, %s78
    %p87 = scmp.eq.s32.totalorder %s30, 1
    %p88 = por %p86, %p87
    %p89 = scmp.ne.s32.totalorder %s78, %s79
    %p90 = scmp.eq.s32.totalorder %s30, 0
    %p91 = por %p89, %p90
    %p92 = scmp.ne.s32.totalorder %s78, %s79
    %p93 = scmp.eq.s32.totalorder %s31, 1
    %p94 = por %p92, %p93
    %p96 = scmp.ne.s32.totalorder %s79, %s95
    %p97 = scmp.eq.s32.totalorder %s31, 0
    %p98 = por %p96, %p97
    %s99 = ssub.s32 %s32, %s44
    %p100 = scmp.eq.s32.totalorder %s99, 0
    %s102 = sadd.s32 %s101, 1
    %s103 = scalar_select %p100, %s101, %s102
    %p106 = pneg %p100
    %p107 = scmp.eq.s32.totalorder %s25, 1
    %p108 = por %p106, %p107
    %p109 = scmp.ne.s32.totalorder %s101, %s104
    %p110 = scmp.eq.s32.totalorder %s25, 0
    %p111 = por %p109, %p110
    %p112 = scmp.ne.s32.totalorder %s101, %s104
    %p113 = scmp.eq.s32.totalorder %s30, 1
    %p114 = por %p112, %p113
    %p115 = scmp.ne.s32.totalorder %s104, %s105
    %p116 = scmp.eq.s32.totalorder %s30, 0
    %p117 = por %p115, %p116
    %p118 = scmp.ne.s32.totalorder %s104, %s105
    %p119 = scmp.eq.s32.totalorder %s31, 1
    %p120 = por %p118, %p119
    %p122 = scmp.ne.s32.totalorder %s105, %s121
    %p123 = scmp.eq.s32.totalorder %s31, 0
    %p124 = por %p122, %p123
    %s126 = sadd.s32 %s125, 1
    %p129 = scmp.eq.s32.totalorder %s25, 1
    %p130 = scmp.ne.s32.totalorder %s125, %s127
    %p131 = scmp.eq.s32.totalorder %s25, 0
    %p132 = por %p130, %p131
    %p133 = scmp.ne.s32.totalorder %s125, %s127
    %p134 = scmp.eq.s32.totalorder %s30, 1
    %p135 = por %p133, %p134
    %p136 = scmp.ne.s32.totalorder %s127, %s128
    %p137 = scmp.eq.s32.totalorder %s30, 0
    %p138 = por %p136, %p137
    %p139 = scmp.ne.s32.totalorder %s127, %s128
    %p140 = scmp.eq.s32.totalorder %s31, 1
    %p141 = por %p139, %p140
    %p143 = scmp.ne.s32.totalorder %s128, %s142
    %p144 = scmp.eq.s32.totalorder %s31, 0
    %p145 = por %p143, %p144
    %s147 = sadd.s32 %s146, 1
    %p150 = scmp.eq.s32.totalorder %s25, 1
    %p151 = scmp.ne.s32.totalorder %s146, %s148
    %p152 = scmp.eq.s32.totalorder %s25, 0
    %p153 = por %p151, %p152
    %p154 = scmp.ne.s32.totalorder %s146, %s148
    %p155 = scmp.eq.s32.totalorder %s30, 1
    %p156 = por %p154, %p155
    %p157 = scmp.ne.s32.totalorder %s148, %s149
    %p158 = scmp.eq.s32.totalorder %s30, 0
    %p159 = por %p157, %p158
    %p160 = scmp.ne.s32.totalorder %s148, %s149
    %p161 = scmp.eq.s32.totalorder %s31, 1
    %p162 = por %p160, %p161
    %p164 = scmp.ne.s32.totalorder %s149, %s163
    %p165 = scmp.eq.s32.totalorder %s31, 0
    %p166 = por %p164, %p165
    %s168 = sadd.s32 %s167, 1
    %p171 = scmp.eq.s32.totalorder %s25, 1
    %p172 = scmp.ne.s32.totalorder %s167, %s169
    %p173 = scmp.eq.s32.totalorder %s25, 0
    %p174 = por %p172, %p173
    %p175 = scmp.ne.s32.totalorder %s167, %s169
    %p176 = scmp.eq.s32.totalorder %s30, 1
    %p177 = por %p175, %p176
    %p178 = scmp.ne.s32.totalorder %s169, %s170
    %p179 = scmp.eq.s32.totalorder %s30, 0
    %p180 = por %p178, %p179
    %p181 = scmp.ne.s32.totalorder %s169, %s170
    %p182 = scmp.eq.s32.totalorder %s31, 1
    %p183 = por %p181, %p182
    %p185 = scmp.ne.s32.totalorder %s170, %s184
    %p186 = scmp.eq.s32.totalorder %s31, 0
    %p187 = por %p185, %p186
    %s189 = sadd.s32 %s188, 1
    %p192 = scmp.eq.s32.totalorder %s25, 1
    %p193 = scmp.ne.s32.totalorder %s188, %s190
    %p194 = scmp.eq.s32.totalorder %s25, 0
    %p195 = por %p193, %p194
    %p196 = scmp.ne.s32.totalorder %s188, %s190
    %p197 = scmp.eq.s32.totalorder %s30, 1
    %p198 = por %p196, %p197
    %p199 = scmp.ne.s32.totalorder %s190, %s191
    %p200 = scmp.eq.s32.totalorder %s30, 0
    %p201 = por %p199, %p200
    %p202 = scmp.ne.s32.totalorder %s190, %s191
    %p203 = scmp.eq.s32.totalorder %s31, 1
    %p204 = por %p202, %p203
    %p206 = scmp.ne.s32.totalorder %s191, %s205
    %p207 = scmp.eq.s32.totalorder %s31, 0
    %p208 = por %p206, %p207
    %s210 = sadd.s32 %s209, 1
    %p213 = scmp.eq.s32.totalorder %s25, 1
    %p214 = scmp.ne.s32.totalorder %s209, %s211
    %p215 = scmp.eq.s32.totalorder %s25, 0
    %p216 = por %p214, %p215
    %p217 = scmp.ne.s32.totalorder %s209, %s211
    %p218 = scmp.eq.s32.totalorder %s30, 1
    %p219 = por %p217, %p218
    %p220 = scmp.ne.s32.totalorder %s211, %s212
    %p221 = scmp.eq.s32.totalorder %s30, 0
    %p222 = por %p220, %p221
    %p223 = scmp.ne.s32.totalorder %s211, %s212
    %p224 = scmp.eq.s32.totalorder %s31, 1
    %p225 = por %p223, %p224
    %p227 = scmp.ne.s32.totalorder %s212, %s226
    %p228 = scmp.eq.s32.totalorder %s31, 0
    %p229 = por %p227, %p228
    %s231 = sadd.s32 %s230, 1
    %p234 = scmp.eq.s32.totalorder %s25, 1
    %p235 = scmp.ne.s32.totalorder %s230, %s232
    %p236 = scmp.eq.s32.totalorder %s25, 0
    %p237 = por %p235, %p236
    %p238 = scmp.ne.s32.totalorder %s230, %s232
    %p239 = scmp.eq.s32.totalorder %s30, 1
    %p240 = por %p238, %p239
    %p241 = scmp.ne.s32.totalorder %s232, %s233
    %p242 = scmp.eq.s32.totalorder %s30, 0
    %p243 = por %p241, %p242
    %p244 = scmp.ne.s32.totalorder %s232, %s233
    %p245 = scmp.eq.s32.totalorder %s31, 1
    %p246 = por %p244, %p245
    %p248 = scmp.ne.s32.totalorder %s233, %s247
    %p249 = scmp.eq.s32.totalorder %s31, 0
    %p250 = por %p248, %p249
    %s252 = sadd.s32 %s251, 1
    %p255 = scmp.eq.s32.totalorder %s25, 1
    %p256 = scmp.ne.s32.totalorder %s251, %s253
    %p257 = scmp.eq.s32.totalorder %s25, 0
    %p258 = por %p256, %p257
    %p259 = scmp.ne.s32.totalorder %s251, %s253
    %p260 = scmp.eq.s32.totalorder %s30, 1
    %p261 = por %p259, %p260
    %p262 = scmp.ne.s32.totalorder %s253, %s254
    %p263 = scmp.eq.s32.totalorder %s30, 0
    %p264 = por %p262, %p263
    %p265 = scmp.ne.s32.totalorder %s253, %s254
    %p266 = scmp.eq.s32.totalorder %s31, 1
    %p267 = por %p265, %p266
    %p269 = scmp.ne.s32.totalorder %s254, %s268
    %p270 = scmp.eq.s32.totalorder %s31, 0
    %p271 = por %p269, %p270
    %s273 = sadd.s32 %s272, 1
    %p276 = scmp.eq.s32.totalorder %s25, 1
    %p277 = scmp.ne.s32.totalorder %s272, %s274
    %p278 = scmp.eq.s32.totalorder %s25, 0
    %p279 = por %p277, %p278
    %p280 = scmp.ne.s32.totalorder %s272, %s274
    %p281 = scmp.eq.s32.totalorder %s30, 1
    %p282 = por %p280, %p281
    %p283 = scmp.ne.s32.totalorder %s274, %s275
    %p284 = scmp.eq.s32.totalorder %s30, 0
    %p285 = por %p283, %p284
    %p286 = scmp.ne.s32.totalorder %s274, %s275
    %p287 = scmp.eq.s32.totalorder %s31, 1
    %p288 = por %p286, %p287
    %p290 = scmp.ne.s32.totalorder %s275, %s289
    %p291 = scmp.eq.s32.totalorder %s31, 0
    %p292 = por %p290, %p291
    %s294 = sadd.s32 %s293, 1
    %p297 = scmp.eq.s32.totalorder %s25, 1
    %p298 = scmp.ne.s32.totalorder %s293, %s295
    %p299 = scmp.eq.s32.totalorder %s25, 0
    %p300 = por %p298, %p299
    %p301 = scmp.ne.s32.totalorder %s293, %s295
    %p302 = scmp.eq.s32.totalorder %s30, 1
    %p303 = por %p301, %p302
    %p304 = scmp.ne.s32.totalorder %s295, %s296
    %p305 = scmp.eq.s32.totalorder %s30, 0
    %p306 = por %p304, %p305
    %p307 = scmp.ne.s32.totalorder %s295, %s296
    %p308 = scmp.eq.s32.totalorder %s31, 1
    %p309 = por %p307, %p308
    %p311 = scmp.ne.s32.totalorder %s296, %s310
    %p312 = scmp.eq.s32.totalorder %s31, 0
    %p313 = por %p311, %p312
    %s315 = sadd.s32 %s314, 1
    %p318 = scmp.eq.s32.totalorder %s25, 1
    %p319 = scmp.ne.s32.totalorder %s314, %s316
    %p320 = scmp.eq.s32.totalorder %s25, 0
    %p321 = por %p319, %p320
    %p322 = scmp.ne.s32.totalorder %s314, %s316
    %p323 = scmp.eq.s32.totalorder %s30, 1
    %p324 = por %p322, %p323
    %p325 = scmp.ne.s32.totalorder %s316, %s317
    %p326 = scmp.eq.s32.totalorder %s30, 0
    %p327 = por %p325, %p326
    %p328 = scmp.ne.s32.totalorder %s316, %s317
    %p329 = scmp.eq.s32.totalorder %s31, 1
    %p330 = por %p328, %p329
    %p332 = scmp.ne.s32.totalorder %s317, %s331
    %p333 = scmp.eq.s32.totalorder %s31, 0
    %p334 = por %p332, %p333
    %s336 = sadd.s32 %s335, 1
    %p339 = scmp.eq.s32.totalorder %s25, 1
    %p340 = scmp.ne.s32.totalorder %s335, %s337
    %p341 = scmp.eq.s32.totalorder %s25, 0
    %p342 = por %p340, %p341
    %p343 = scmp.ne.s32.totalorder %s335, %s337
    %p344 = scmp.eq.s32.totalorder %s30, 1
    %p345 = por %p343, %p344
    %p346 = scmp.ne.s32.totalorder %s337, %s338
    %p347 = scmp.eq.s32.totalorder %s30, 0
    %p348 = por %p346, %p347
    %p349 = scmp.ne.s32.totalorder %s337, %s338
    %p350 = scmp.eq.s32.totalorder %s31, 1
    %p351 = por %p349, %p350
    %p353 = scmp.ne.s32.totalorder %s338, %s352
    %p354 = scmp.eq.s32.totalorder %s31, 0
    %p355 = por %p353, %p354
    %s357 = sadd.s32 %s356, 1
    %p360 = scmp.eq.s32.totalorder %s25, 1
    %p361 = scmp.ne.s32.totalorder %s356, %s358
    %p362 = scmp.eq.s32.totalorder %s25, 0
    %p363 = por %p361, %p362
    %p364 = scmp.ne.s32.totalorder %s356, %s358
    %p365 = scmp.eq.s32.totalorder %s30, 1
    %p366 = por %p364, %p365
    %p367 = scmp.ne.s32.totalorder %s358, %s359
    %p368 = scmp.eq.s32.totalorder %s30, 0
    %p369 = por %p367, %p368
    %p370 = scmp.ne.s32.totalorder %s358, %s359
    %p371 = scmp.eq.s32.totalorder %s31, 1
    %p372 = por %p370, %p371
    %p374 = scmp.ne.s32.totalorder %s359, %s373
    %p375 = scmp.eq.s32.totalorder %s31, 0
    %p376 = por %p374, %p375
    %s378 = sadd.s32 %s377, 1
    %p381 = scmp.eq.s32.totalorder %s25, 1
    %p382 = scmp.ne.s32.totalorder %s377, %s379
    %p383 = scmp.eq.s32.totalorder %s25, 0
    %p384 = por %p382, %p383
    %p385 = scmp.ne.s32.totalorder %s377, %s379
    %p386 = scmp.eq.s32.totalorder %s30, 1
    %p387 = por %p385, %p386
    %p388 = scmp.ne.s32.totalorder %s379, %s380
    %p389 = scmp.eq.s32.totalorder %s30, 0
    %p390 = por %p388, %p389
    %p391 = scmp.ne.s32.totalorder %s379, %s380
    %p392 = scmp.eq.s32.totalorder %s31, 1
    %p393 = por %p391, %p392
    %p395 = scmp.ne.s32.totalorder %s380, %s394
    %p396 = scmp.eq.s32.totalorder %s31, 0
    %p397 = por %p395, %p396
    %s399 = sadd.s32 %s398, 1
    %p402 = scmp.eq.s32.totalorder %s25, 1
    %p403 = scmp.ne.s32.totalorder %s398, %s400
    %p404 = scmp.eq.s32.totalorder %s25, 0
    %p405 = por %p403, %p404
    %p406 = scmp.ne.s32.totalorder %s398, %s400
    %p407 = scmp.eq.s32.totalorder %s30, 1
    %p408 = por %p406, %p407
    %p409 = scmp.ne.s32.totalorder %s400, %s401
    %p410 = scmp.eq.s32.totalorder %s30, 0
    %p411 = por %p409, %p410
    %p412 = scmp.ne.s32.totalorder %s400, %s401
    %p413 = scmp.eq.s32.totalorder %s31, 1
    %p414 = por %p412, %p413
    %p416 = scmp.ne.s32.totalorder %s401, %s415
    %p417 = scmp.eq.s32.totalorder %s31, 0
    %p418 = por %p416, %p417
    %s420 = sadd.s32 %s419, 1
    %p423 = scmp.eq.s32.totalorder %s25, 1
    %p424 = scmp.ne.s32.totalorder %s419, %s421
    %p425 = scmp.eq.s32.totalorder %s25, 0
    %p426 = por %p424, %p425
    %p427 = scmp.ne.s32.totalorder %s419, %s421
    %p428 = scmp.eq.s32.totalorder %s30, 1
    %p429 = por %p427, %p428
    %p430 = scmp.ne.s32.totalorder %s421, %s422
    %p431 = scmp.eq.s32.totalorder %s30, 0
    %p432 = por %p430, %p431
    %p433 = scmp.ne.s32.totalorder %s421, %s422
    %p434 = scmp.eq.s32.totalorder %s31, 1
    %p435 = por %p433, %p434
    %p437 = scmp.ne.s32.totalorder %s422, %s436
    %p438 = scmp.eq.s32.totalorder %s31, 0
    %p439 = por %p437, %p438
    %s441 = sadd.s32 %s440, 1
    %p444 = scmp.eq.s32.totalorder %s25, 1
    %p445 = scmp.ne.s32.totalorder %s440, %s442
    %p446 = scmp.eq.s32.totalorder %s25, 0
    %p447 = por %p445, %p446
    %p448 = scmp.ne.s32.totalorder %s440, %s442
    %p449 = scmp.eq.s32.totalorder %s30, 1
    %p450 = por %p448, %p449
    %p451 = scmp.ne.s32.totalorder %s442, %s443
    %p452 = scmp.eq.s32.totalorder %s30, 0
    %p453 = por %p451, %p452
    %p454 = scmp.ne.s32.totalorder %s442, %s443
    %p455 = scmp.eq.s32.totalorder %s31, 1
    %p456 = por %p454, %p455
    %p458 = scmp.ne.s32.totalorder %s443, %s457
    %p459 = scmp.eq.s32.totalorder %s31, 0
    %p460 = por %p458, %p459
    %s461 = ssub.s32 %s32, %s44
    %s462 = ssub.s32 %s33, %s40
    %s463 = sor.u32 %s461, %s462
    %p464 = scmp.eq.s32.totalorder %s463, 0
    %s466 = sadd.s32 %s465, 1
    %s467 = scalar_select %p464, %s465, %s466
    %p470 = pneg %p464
    %p471 = scmp.eq.s32.totalorder %s25, 1
    %p472 = por %p470, %p471
    %p473 = scmp.ne.s32.totalorder %s465, %s468
    %p474 = scmp.eq.s32.totalorder %s25, 0
    %p475 = por %p473, %p474
    %p476 = scmp.ne.s32.totalorder %s465, %s468
    %p477 = scmp.eq.s32.totalorder %s30, 1
    %p478 = por %p476, %p477
    %p479 = scmp.ne.s32.totalorder %s468, %s469
    %p480 = scmp.eq.s32.totalorder %s30, 0
    %p481 = por %p479, %p480
    %p482 = scmp.ne.s32.totalorder %s468, %s469
    %p483 = scmp.eq.s32.totalorder %s31, 1
    %p484 = por %p482, %p483
    %p486 = scmp.ne.s32.totalorder %s469, %s485
    %p487 = scmp.eq.s32.totalorder %s31, 0
    %p488 = por %p486, %p487
    %p489 = scmp.le.s32.totalorder 1, %s25
    %p490 = scmp.lt.s32.totalorder %s25, 3
    %p491 = pnand %p489, %p490
    %p492 = pneg %p491
    // Predicated region
    $region9: #{bert_forward.2} parent=5 // pred_check
      _
    $region10: #{bert_forward.2} parent=5 // pred_check_branch
      %494 = sbr.rel (%p491) target = $region12
    $region11: #{bert_forward.2} parent=5 // pred_region
      %s495 = ssub.s32 %s25, 1
      // Predicated region
      $region13: #{bert_forward.2} parent=11 // pred_check
        %p496 = pneg %p138
      $region14: #{bert_forward.2} parent=11 // pred_check_branch
        %498 = sbr.rel (%p496) target = $region16
      $region15: #{bert_forward.2} parent=11 // pred_region
        _
      $region16: #{bert_forward.2} parent=11 // pred_fallthru
        _
      // Predicated region
      $region17: #{bert_forward.2} parent=11 // pred_check
        %p499 = pneg %p159
      $region18: #{bert_forward.2} parent=11 // pred_check_branch
        %501 = sbr.rel (%p499) target = $region20
      $region19: #{bert_forward.2} parent=11 // pred_region
        _
      $region20: #{bert_forward.2} parent=11 // pred_fallthru
        _
      // Predicated region
      $region21: #{bert_forward.2} parent=11 // pred_check
        %p502 = pneg %p180
      $region22: #{bert_forward.2} parent=11 // pred_check_branch
        %504 = sbr.rel (%p502) target = $region24
      $region23: #{bert_forward.2} parent=11 // pred_region
        _
      $region24: #{bert_forward.2} parent=11 // pred_fallthru
        _
      // Predicated region
      $region25: #{bert_forward.2} parent=11 // pred_check
        %p505 = pneg %p201
      $region26: #{bert_forward.2} parent=11 // pred_check_branch
        %507 = sbr.rel (%p505) target = $region28
      $region27: #{bert_forward.2} parent=11 // pred_region
        _
      $region28: #{bert_forward.2} parent=11 // pred_fallthru
        _
      // Predicated region
      $region29: #{bert_forward.2} parent=11 // pred_check
        %p508 = pneg %p222
      $region30: #{bert_forward.2} parent=11 // pred_check_branch
        %510 = sbr.rel (%p508) target = $region32
      $region31: #{bert_forward.2} parent=11 // pred_region
        _
      $region32: #{bert_forward.2} parent=11 // pred_fallthru
        _
      // Predicated region
      $region33: #{bert_forward.2} parent=11 // pred_check
        %p511 = pneg %p243
      $region34: #{bert_forward.2} parent=11 // pred_check_branch
        %513 = sbr.rel (%p511) target = $region36
      $region35: #{bert_forward.2} parent=11 // pred_region
        _
      $region36: #{bert_forward.2} parent=11 // pred_fallthru
        _
      // Predicated region
      $region37: #{bert_forward.2} parent=11 // pred_check
        %p514 = pneg %p264
      $region38: #{bert_forward.2} parent=11 // pred_check_branch
        %516 = sbr.rel (%p514) target = $region40
      $region39: #{bert_forward.2} parent=11 // pred_region
        _
      $region40: #{bert_forward.2} parent=11 // pred_fallthru
        _
      // Predicated region
      $region41: #{bert_forward.2} parent=11 // pred_check
        %p517 = pneg %p285
      $region42: #{bert_forward.2} parent=11 // pred_check_branch
        %519 = sbr.rel (%p517) target = $region44
      $region43: #{bert_forward.2} parent=11 // pred_region
        _
      $region44: #{bert_forward.2} parent=11 // pred_fallthru
        _
      // Predicated region
      $region45: #{bert_forward.2} parent=11 // pred_check
        %p520 = pneg %p306
      $region46: #{bert_forward.2} parent=11 // pred_check_branch
        %522 = sbr.rel (%p520) target = $region48
      $region47: #{bert_forward.2} parent=11 // pred_region
        _
      $region48: #{bert_forward.2} parent=11 // pred_fallthru
        _
      // Predicated region
      $region49: #{bert_forward.2} parent=11 // pred_check
        %p523 = pneg %p327
      $region50: #{bert_forward.2} parent=11 // pred_check_branch
        %525 = sbr.rel (%p523) target = $region52
      $region51: #{bert_forward.2} parent=11 // pred_region
        _
      $region52: #{bert_forward.2} parent=11 // pred_fallthru
        _
      // Predicated region
      $region53: #{bert_forward.2} parent=11 // pred_check
        %p526 = pneg %p348
      $region54: #{bert_forward.2} parent=11 // pred_check_branch
        %528 = sbr.rel (%p526) target = $region56
      $region55: #{bert_forward.2} parent=11 // pred_region
        _
      $region56: #{bert_forward.2} parent=11 // pred_fallthru
        _
      // Predicated region
      $region57: #{bert_forward.2} parent=11 // pred_check
        %p529 = pneg %p369
      $region58: #{bert_forward.2} parent=11 // pred_check_branch
        %531 = sbr.rel (%p529) target = $region60
      $region59: #{bert_forward.2} parent=11 // pred_region
        _
      $region60: #{bert_forward.2} parent=11 // pred_fallthru
        _
      // Predicated region
      $region61: #{bert_forward.2} parent=11 // pred_check
        %p532 = pneg %p390
      $region62: #{bert_forward.2} parent=11 // pred_check_branch
        %534 = sbr.rel (%p532) target = $region64
      $region63: #{bert_forward.2} parent=11 // pred_region
        _
      $region64: #{bert_forward.2} parent=11 // pred_fallthru
        _
      // Predicated region
      $region65: #{bert_forward.2} parent=11 // pred_check
        %p535 = pneg %p411
      $region66: #{bert_forward.2} parent=11 // pred_check_branch
        %537 = sbr.rel (%p535) target = $region68
      $region67: #{bert_forward.2} parent=11 // pred_region
        _
      $region68: #{bert_forward.2} parent=11 // pred_fallthru
        _
      // Predicated region
      $region69: #{bert_forward.2} parent=11 // pred_check
        %p538 = pneg %p432
      $region70: #{bert_forward.2} parent=11 // pred_check_branch
        %540 = sbr.rel (%p538) target = $region72
      $region71: #{bert_forward.2} parent=11 // pred_region
        _
      $region72: #{bert_forward.2} parent=11 // pred_fallthru
        _
      // Predicated region
      $region73: #{bert_forward.2} parent=11 // pred_check
        %p541 = pneg %p453
      $region74: #{bert_forward.2} parent=11 // pred_check_branch
        %543 = sbr.rel (%p541) target = $region76
      $region75: #{bert_forward.2} parent=11 // pred_region
        _
      $region76: #{bert_forward.2} parent=11 // pred_fallthru
        _
    $region12: #{bert_forward.2} parent=5 // pred_fallthru
      _
    %p544 = scmp.lt.s32.totalorder %s25, 2
    // Predicated region
    $region77: #{bert_forward.2} parent=5 // pred_check
      %p545 = pneg %p544
    $region78: #{bert_forward.2} parent=5 // pred_check_branch
      %547 = sbr.rel (%p545) target = $region80
    $region79: #{bert_forward.2} parent=5 // pred_region
      // Predicated region
      $region81: #{bert_forward.2} parent=79 // pred_check
        %p548 = pneg %p59
      $region82: #{bert_forward.2} parent=79 // pred_check_branch
        %550 = sbr.rel (%p548) target = $region84
      $region83: #{bert_forward.2} parent=79 // pred_region
        %p551 = scmp.lt.s32.totalorder %s32, 1
        %s552 = scalar_select %p551, %s32, 1
        %p553 = scmp.lt.s32.totalorder %s33, 0
        %s554 = scalar_select %p553, %s33, 0
        %s555 = sadd.s32 %s554, %s552
        %s556 = smul.addr %s555, 8
        %s557 = scalar_lea.vmem %s0, %s556
      $region84: #{bert_forward.2} parent=79 // pred_fallthru
        _
      // Predicated region
      $region85: #{bert_forward.2} parent=79 // pred_check
        %p558 = pneg %p85
      $region86: #{bert_forward.2} parent=79 // pred_check_branch
        %560 = sbr.rel (%p558) target = $region88
      $region87: #{bert_forward.2} parent=79 // pred_region
        %p561 = scmp.lt.s32.totalorder %s32, 1
        %s562 = scalar_select %p561, %s32, 1
        %s563 = smul.addr %s562, 8
        %s564 = scalar_lea.vmem %s1, %s563
      $region88: #{bert_forward.2} parent=79 // pred_fallthru
        _
      // Predicated region
      $region89: #{bert_forward.2} parent=79 // pred_check
        %p565 = pneg %p111
      $region90: #{bert_forward.2} parent=79 // pred_check_branch
        %567 = sbr.rel (%p565) target = $region92
      $region91: #{bert_forward.2} parent=79 // pred_region
        %p568 = scmp.lt.s32.totalorder %s32, 1
        %s569 = scalar_select %p568, %s32, 1
        %s570 = scalar_lea.vmem %s2, %s569
      $region92: #{bert_forward.2} parent=79 // pred_fallthru
        _
    $region80: #{bert_forward.2} parent=5 // pred_fallthru
      _
    %p571 = scmp.le.s32.totalorder 1, %s25
    %p572 = scmp.lt.s32.totalorder %s25, 3
    %p573 = pnand %p571, %p572
    %p574 = pneg %p573
    // Predicated region
    $region93: #{bert_forward.2} parent=5 // pred_check
      _
    $region94: #{bert_forward.2} parent=5 // pred_check_branch
      %576 = sbr.rel (%p573) target = $region96
    $region95: #{bert_forward.2} parent=5 // pred_region
      %s577 = ssub.s32 %s25, 1
      %p578 = scmp.lt.s32.totalorder %s34, 1
      %s579 = scalar_select %p578, %s34, 1
      %p580 = scmp.lt.s32.totalorder %s35, 0
      %s581 = scalar_select %p580, %s35, 0
      %s582 = sadd.s32 %s581, %s579
      %s583 = smul.addr %s582, 8
      %s584 = scalar_lea.vmem %s0, %s583
      %p585 = pneg %p65
      %p586 = pneg %p62
      %p587 = scmp.lt.s32.totalorder %s34, 1
      %s588 = scalar_select %p587, %s34, 1
      %s589 = smul.addr %s588, 8
      %s590 = scalar_lea.vmem %s1, %s589
      %p591 = pneg %p91
      %p592 = pneg %p88
      %p593 = scmp.lt.s32.totalorder %s34, 1
      %s594 = scalar_select %p593, %s34, 1
      %s595 = scalar_lea.vmem %s2, %s594
      %p596 = pneg %p117
      %p597 = pneg %p114
      %p598 = pneg %p138
      %p599 = pneg %p135
      %p600 = pneg %p159
      %p601 = pneg %p156
      %p602 = pneg %p180
      %p603 = pneg %p177
      %p604 = pneg %p201
      %p605 = pneg %p198
      %p606 = pneg %p222
      %p607 = pneg %p219
      %p608 = pneg %p243
      %p609 = pneg %p240
      %p610 = pneg %p264
      %p611 = pneg %p261
      %p612 = pneg %p285
      %p613 = pneg %p282
      %p614 = pneg %p306
      %p615 = pneg %p303
      %p616 = pneg %p327
      %p617 = pneg %p324
      %p618 = pneg %p348
      %p619 = pneg %p345
      %p620 = pneg %p369
      %p621 = pneg %p366
      %p622 = pneg %p390
      %p623 = pneg %p387
      %p624 = pneg %p411
      %p625 = pneg %p408
      %p626 = pneg %p432
      %p627 = pneg %p429
      %p628 = pneg %p453
      %p629 = pneg %p450
      %p630 = pneg %p481
      %p631 = pneg %p478
      %p632 = scmp.lt.s32.totalorder %s34, 1
      %s633 = scalar_select %p632, %s34, 1
      %p634 = scmp.lt.s32.totalorder %s35, 0
      %s635 = scalar_select %p634, %s35, 0
      %s636 = sadd.s32 %s635, %s633
      %s637 = smul.addr %s636, 8
      %s638 = scalar_lea.vmem %s19, %s637
      %p639 = scmp.lt.s32.totalorder %s34, 1
      %s640 = scalar_select %p639, %s34, 1
      %p641 = scmp.lt.s32.totalorder %s35, 0
      %s642 = scalar_select %p641, %s35, 0
      %s643 = sadd.s32 %s642, %s640
      %s644 = smul.addr %s643, 8
      %s645 = scalar_lea.vmem %s0, %s644
      %p646 = scmp.lt.s32.totalorder %s34, 1
      %s647 = scalar_select %p646, %s34, 1
      %s648 = smul.addr %s647, 8
      %s649 = scalar_lea.vmem %s1, %s648
      %p650 = scmp.lt.s32.totalorder %s34, 1
      %s651 = scalar_select %p650, %s34, 1
      %s652 = scalar_lea.vmem %s2, %s651
      %p653 = scmp.lt.s32.totalorder %s34, 1
      %s654 = scalar_select %p653, %s34, 1
      %p655 = scmp.lt.s32.totalorder %s35, 0
      %s656 = scalar_select %p655, %s35, 0
      %s657 = sadd.s32 %s656, %s654
      %s658 = smul.addr %s657, 8
      %s659 = scalar_lea.vmem %s19, %s658
      %v661 = vld [vmem:[%s645] sm:$0xff]
      %v662 = vld [vmem:[%s652] sm:$0x1]
      %v663 = vld [vmem:[%s11] sm:$0x1]
      %v664 = vld [vmem:[%s12] sm:$0x1]
      %v665 = vld [vmem:[%s13] sm:$0x1]
      %v666 = vld [vmem:[%s14] sm:$0x1]
      %v667 = vld [vmem:[%s4] sm:$0x1]
      %v668 = vld [vmem:[%s6] sm:$0x1]
      %v669 = vld [vmem:[%s8] sm:$0x1]
      %v670 = vld [vmem:[%s10] sm:$0x1]
      %v671 = vld [vmem:[%s16] sm:$0x1]
      %v672 = vld [vmem:[%s18] sm:$0x1]
      %v673 = vld [vmem:[%s9] sm:$0xf]
      %v674 = vld [vmem:[%s9 + $0x4] sm:$0xf]
      %v675 = vld [vmem:[%s9 + $0x8] sm:$0xf]
      %v676 = vld [vmem:[%s9 + $0xc] sm:$0xf]
      %vm677 = vcmask 261120
      %v678 = vsel %vm677, %v661, 0.0
      %679 = vadd.xlane.f32.xlu0 %v678
      %v680 = vpop.xlane.xlu0 %679
      %v681 = vrcp.pop 32.0
      %v682 = vmul.f32 %v680, %v681
      %v683 = vsub.f32 %v661, %v682
      %v684 = vmul.f32 %v683, %v683
      %v685 = vsel %vm677, %v684, 0.0
      %686 = vadd.xlane.f32.xlu0 %v685
      %v687 = vpop.xlane.xlu0 %686
      %v688 = vmul.f32 %v687, %v681
      %v689 = vadd.f32 %v688, 1e-05
      %v690 = vrsqrt.pop %v689
      %v691 = vmul.f32 %v683, %v690
      %v693 = vlaneseq
      %v694 = vshrl.u32 %v693, 7
      %v695 = vsub.s32 0, %v694
      %v696 = vrot.slane %v663, %v695
      %v698 = vmul.f32 %v691, %v696
      %v700 = vlaneseq
      %v701 = vshrl.u32 %v700, 7
      %v702 = vsub.s32 0, %v701
      %v703 = vrot.slane %v664, %v702
      %v705 = vadd.f32 %v698, %v703
      %v706 = vpack.c.bf16 %v705, %v705
      %v707 = vld [vmem:[%s3] sm:$0xf]
      %v708 = vld [vmem:[%s3 + $0x4] sm:$0xf]
      %v709 = vld [vmem:[%s3 + $0x8] sm:$0xf]
      %v710 = vld [vmem:[%s3 + $0xc] sm:$0xf]
      %v712 = vlaneseq
      %v713 = vshrl.u32 %v712, 7
      %v714 = vsub.s32 0, %v713
      %v715 = vrot.slane %v667, %v714
      %v721 = vunpack.c.l.b16 %v707
      %v722 = vunpack.c.l.b16 %v708
      %v723 = vunpack.c.l.b16 %v709
      %v724 = vunpack.c.l.b16 %v710
      %v725 = vpack.c.b16 %v722, %v721
      %v726 = vpack.c.b16 %v724, %v723
      %v730 = vsel %vm677, %v706, 0
      %732 = vmatprep.subr.bf16.mxu0 0
      %733 = vmatpush1.bf16.msra.mxu0 0
      %734 = vmatprep.subr.bf16.mxu0 0
      %735 = vmatpush1.bf16.msra.mxu0 0
      %736 = vmatprep.subr.bf16.mxu0 0
      %737 = vmatpush1.bf16.msra.mxu0 0
      %738 = vmatprep.subr.bf16.mxu0 0
      %739 = vmatpush1.bf16.msra.mxu0 0
      %740 = vmatprep.subr.bf16.mxu0 0
      %741 = vmatpush1.bf16.msra.mxu0 0
      %742 = vmatprep.subr.bf16.mxu0 0
      %743 = vmatpush1.bf16.msra.mxu0 0
      %744 = vmatprep.subr.bf16.mxu0 0
      %745 = vmatpush1.bf16.msra.mxu0 %v726
      %746 = vmatprep.subr.bf16.mxu0 0
      %747 = vmatpush1.bf16.msra.mxu0 %v725
      %748 = vmatprep.subr.bf16.mxu0 0
      %749 = vmatpush2.bf16.msra.mxu0 0
      %750 = vmatprep.subr.bf16.mxu0 0
      %751 = vmatpush2.bf16.msra.mxu0 0
      %752 = vmatprep.subr.bf16.mxu0 0
      %753 = vmatpush2.bf16.msra.mxu0 0
      %754 = vmatprep.subr.bf16.mxu0 0
      %755 = vmatpush2.bf16.msra.mxu0 0
      %756 = vmatprep.subr.bf16.mxu0 0
      %757 = vmatpush2.bf16.msra.mxu0 0
      %758 = vmatprep.subr.bf16.mxu0 0
      %759 = vmatpush2.bf16.msra.mxu0 0
      %760 = vmatprep.subr.bf16.mxu0 0
      %761 = vmatpush2.bf16.msra.mxu0 0
      %762 = vmatprep.subr.bf16.mxu0 0
      %763 = vmatpush2.bf16.msra.mxu0 0
      %764 = vmatprep.mubr.bf16.mxu0 0
      %765 = vmatmul.mubr.bf16.gmra.mxu0 %v730
      %v766 = vpop.f32.mrf.mxu0
      %v767 = vadd.f32 %v715, %v766
      %v768 = vpop.f32.mrf.mxu0
      %v769 = vpop.f32.mrf.mxu0
      %v770 = vpop.f32.mrf.mxu0
      %771 = vdwg.mxu0
      %v772 = vld [vmem:[%s5] sm:$0xf]
      %v773 = vld [vmem:[%s5 + $0x4] sm:$0xf]
      %v774 = vld [vmem:[%s5 + $0x8] sm:$0xf]
      %v775 = vld [vmem:[%s5 + $0xc] sm:$0xf]
      %v777 = vlaneseq
      %v778 = vshrl.u32 %v777, 7
      %v779 = vsub.s32 0, %v778
      %v780 = vrot.slane %v668, %v779
      %v786 = vunpack.c.l.b16 %v772
      %v787 = vunpack.c.l.b16 %v773
      %v788 = vunpack.c.l.b16 %v774
      %v789 = vunpack.c.l.b16 %v775
      %v790 = vpack.c.b16 %v787, %v786
      %v791 = vpack.c.b16 %v789, %v788
      %794 = vmatprep.subr.bf16.mxu0 0
      %795 = vmatpush1.bf16.msra.mxu0 0
      %796 = vmatprep.subr.bf16.mxu0 0
      %797 = vmatpush1.bf16.msra.mxu0 0
      %798 = vmatprep.subr.bf16.mxu0 0
      %799 = vmatpush1.bf16.msra.mxu0 0
      %800 = vmatprep.subr.bf16.mxu0 0
      %801 = vmatpush1.bf16.msra.mxu0 0
      %802 = vmatprep.subr.bf16.mxu0 0
      %803 = vmatpush1.bf16.msra.mxu0 0
      %804 = vmatprep.subr.bf16.mxu0 0
      %805 = vmatpush1.bf16.msra.mxu0 0
      %806 = vmatprep.subr.bf16.mxu0 0
      %807 = vmatpush1.bf16.msra.mxu0 %v791
      %808 = vmatprep.subr.bf16.mxu0 0
      %809 = vmatpush1.bf16.msra.mxu0 %v790
      %810 = vmatprep.subr.bf16.mxu0 0
      %811 = vmatpush2.bf16.msra.mxu0 0
      %812 = vmatprep.subr.bf16.mxu0 0
      %813 = vmatpush2.bf16.msra.mxu0 0
      %814 = vmatprep.subr.bf16.mxu0 0
      %815 = vmatpush2.bf16.msra.mxu0 0
      %816 = vmatprep.subr.bf16.mxu0 0
      %817 = vmatpush2.bf16.msra.mxu0 0
      %818 = vmatprep.subr.bf16.mxu0 0
      %819 = vmatpush2.bf16.msra.mxu0 0
      %820 = vmatprep.subr.bf16.mxu0 0
      %821 = vmatpush2.bf16.msra.mxu0 0
      %822 = vmatprep.subr.bf16.mxu0 0
      %823 = vmatpush2.bf16.msra.mxu0 0
      %824 = vmatprep.subr.bf16.mxu0 0
      %825 = vmatpush2.bf16.msra.mxu0 0
      %826 = vmatprep.mubr.bf16.mxu0 0
      %827 = vmatmul.mubr.bf16.gmra.mxu0 %v730
      %v828 = vpop.f32.mrf.mxu0
      %v829 = vadd.f32 %v780, %v828
      %v830 = vpop.f32.mrf.mxu0
      %v831 = vpop.f32.mrf.mxu0
      %v832 = vpop.f32.mrf.mxu0
      %833 = vdwg.mxu0
      %v834 = vld [vmem:[%s7] sm:$0xf]
      %v835 = vld [vmem:[%s7 + $0x4] sm:$0xf]
      %v836 = vld [vmem:[%s7 + $0x8] sm:$0xf]
      %v837 = vld [vmem:[%s7 + $0xc] sm:$0xf]
      %v839 = vlaneseq
      %v840 = vshrl.u32 %v839, 7
      %v841 = vsub.s32 0, %v840
      %v842 = vrot.slane %v669, %v841
      %v848 = vunpack.c.l.b16 %v834
      %v849 = vunpack.c.l.b16 %v835
      %v850 = vunpack.c.l.b16 %v836
      %v851 = vunpack.c.l.b16 %v837
      %v852 = vpack.c.b16 %v849, %v848
      %v853 = vpack.c.b16 %v851, %v850
      %856 = vmatprep.subr.bf16.mxu0 0
      %857 = vmatpush1.bf16.msra.mxu0 0
      %858 = vmatprep.subr.bf16.mxu0 0
      %859 = vmatpush1.bf16.msra.mxu0 0
      %860 = vmatprep.subr.bf16.mxu0 0
      %861 = vmatpush1.bf16.msra.mxu0 0
      %862 = vmatprep.subr.bf16.mxu0 0
      %863 = vmatpush1.bf16.msra.mxu0 0
      %864 = vmatprep.subr.bf16.mxu0 0
      %865 = vmatpush1.bf16.msra.mxu0 0
      %866 = vmatprep.subr.bf16.mxu0 0
      %867 = vmatpush1.bf16.msra.mxu0 0
      %868 = vmatprep.subr.bf16.mxu0 0
      %869 = vmatpush1.bf16.msra.mxu0 %v853
      %870 = vmatprep.subr.bf16.mxu0 0
      %871 = vmatpush1.bf16.msra.mxu0 %v852
      %872 = vmatprep.subr.bf16.mxu0 0
      %873 = vmatpush2.bf16.msra.mxu0 0
      %874 = vmatprep.subr.bf16.mxu0 0
      %875 = vmatpush2.bf16.msra.mxu0 0
      %876 = vmatprep.subr.bf16.mxu0 0
      %877 = vmatpush2.bf16.msra.mxu0 0
      %878 = vmatprep.subr.bf16.mxu0 0
      %879 = vmatpush2.bf16.msra.mxu0 0
      %880 = vmatprep.subr.bf16.mxu0 0
      %881 = vmatpush2.bf16.msra.mxu0 0
      %882 = vmatprep.subr.bf16.mxu0 0
      %883 = vmatpush2.bf16.msra.mxu0 0
      %884 = vmatprep.subr.bf16.mxu0 0
      %885 = vmatpush2.bf16.msra.mxu0 0
      %886 = vmatprep.subr.bf16.mxu0 0
      %887 = vmatpush2.bf16.msra.mxu0 0
      %888 = vmatprep.mubr.bf16.mxu0 0
      %889 = vmatmul.mubr.bf16.gmra.mxu0 %v730
      %v890 = vpop.f32.mrf.mxu0
      %v891 = vadd.f32 %v842, %v890
      %v892 = vpop.f32.mrf.mxu0
      %v893 = vpop.f32.mrf.mxu0
      %v894 = vpop.f32.mrf.mxu0
      %895 = vdwg.mxu0
      %v896 = vpack.c.bf16 %v767, %v767
      %v897 = vpack.c.bf16 %v829, %v829
      %v898 = vpack.c.bf16 %v891, %v891
      %vm899 = vcmask 64512
      %v901 = vsel %vm899, %v896, 0
      %v904 = vsel %vm899, %v897, 0
      %906 = vmatprep.subr.bf16.mxu0 0
      %907 = vmatpush1.bf16.xpose.msra.mxu0 0
      %908 = vmatprep.subr.bf16.mxu0 0
      %909 = vmatpush1.bf16.xpose.msra.mxu0 0
      %910 = vmatprep.subr.bf16.mxu0 0
      %911 = vmatpush1.bf16.xpose.msra.mxu0 0
      %912 = vmatprep.subr.bf16.mxu0 0
      %913 = vmatpush1.bf16.xpose.msra.mxu0 0
      %914 = vmatprep.subr.bf16.mxu0 0
      %915 = vmatpush1.bf16.xpose.msra.mxu0 0
      %916 = vmatprep.subr.bf16.mxu0 0
      %917 = vmatpush1.bf16.xpose.msra.mxu0 0
      %918 = vmatprep.subr.bf16.mxu0 0
      %919 = vmatpush1.bf16.xpose.msra.mxu0 0
      %920 = vmatprep.subr.bf16.mxu0 0
      %921 = vmatpush1.bf16.xpose.msra.mxu0 %v904
      %922 = vmatprep.subr.bf16.mxu0 0
      %923 = vmatpush2.bf16.xpose.msra.mxu0 0
      %924 = vmatprep.subr.bf16.mxu0 0
      %925 = vmatpush2.bf16.xpose.msra.mxu0 0
      %926 = vmatprep.subr.bf16.mxu0 0
      %927 = vmatpush2.bf16.xpose.msra.mxu0 0
      %928 = vmatprep.subr.bf16.mxu0 0
      %929 = vmatpush2.bf16.xpose.msra.mxu0 0
      %930 = vmatprep.subr.bf16.mxu0 0
      %931 = vmatpush2.bf16.xpose.msra.mxu0 0
      %932 = vmatprep.subr.bf16.mxu0 0
      %933 = vmatpush2.bf16.xpose.msra.mxu0 0
      %934 = vmatprep.subr.bf16.mxu0 0
      %935 = vmatpush2.bf16.xpose.msra.mxu0 0
      %936 = vmatprep.subr.bf16.mxu0 0
      %937 = vmatpush2.bf16.xpose.msra.mxu0 0
      %938 = vmatprep.mubr.bf16.mxu0 0
      %939 = vmatmul.mubr.bf16.gmra.mxu0 %v901
      %v940 = vpop.f32.mrf.mxu0
      %v941 = vadd.f32 0.0, %v940
      %v942 = vpop.f32.mrf.mxu0
      %v943 = vpop.f32.mrf.mxu0
      %v944 = vpop.f32.mrf.mxu0
      %945 = vdwg.mxu0
      %v946 = vmul.f32 %v941, 0.35355338
      %v948 = vlaneseq
      %v949 = vshrl.u32 %v948, 7
      %v950 = vsub.s32 0, %v949
      %v951 = vrot.slane %v662, %v950
      %v953 = vadd.f32 %v946, %v951
      %v954 = vsel %vm899, %v953, -inf
      %955 = vmax.xlane.f32.xlu0 %v954
      %v956 = vpop.xlane.xlu0 %955
      %v957 = vsub.f32 %v953, %v956
      %v958 = vmul.f32 %v957, 1.442695
      %v959 = vpow.pop %v958
      %v960 = vsel %vm899, %v959, 0.0
      %961 = vadd.xlane.f32.xlu0 %v960
      %v962 = vpop.xlane.xlu0 %961
      %v963 = vrcp.pop %v962
      %v964 = vmul.f32 %v959, %v963
      %v965 = vpack.c.bf16 %v964, %v964
      %v967 = vsel %vm899, %v965, 0
      %vm969 = vcmask 1043456
      %v971 = vsel %vm969, %v898, 0
      %973 = vmatprep.subr.bf16.mxu0 0
      %974 = vmatpush1.bf16.msra.mxu0 0
      %975 = vmatprep.subr.bf16.mxu0 0
      %976 = vmatpush1.bf16.msra.mxu0 0
      %977 = vmatprep.subr.bf16.mxu0 0
      %978 = vmatpush1.bf16.msra.mxu0 0
      %979 = vmatprep.subr.bf16.mxu0 0
      %980 = vmatpush1.bf16.msra.mxu0 0
      %981 = vmatprep.subr.bf16.mxu0 0
      %982 = vmatpush1.bf16.msra.mxu0 0
      %983 = vmatprep.subr.bf16.mxu0 0
      %984 = vmatpush1.bf16.msra.mxu0 0
      %985 = vmatprep.subr.bf16.mxu0 0
      %986 = vmatpush1.bf16.msra.mxu0 0
      %987 = vmatprep.subr.bf16.mxu0 0
      %988 = vmatpush1.bf16.msra.mxu0 %v971
      %989 = vmatprep.subr.bf16.mxu0 0
      %990 = vmatpush2.bf16.msra.mxu0 0
      %991 = vmatprep.subr.bf16.mxu0 0
      %992 = vmatpush2.bf16.msra.mxu0 0
      %993 = vmatprep.subr.bf16.mxu0 0
      %994 = vmatpush2.bf16.msra.mxu0 0
      %995 = vmatprep.subr.bf16.mxu0 0
      %996 = vmatpush2.bf16.msra.mxu0 0
      %997 = vmatprep.subr.bf16.mxu0 0
      %998 = vmatpush2.bf16.msra.mxu0 0
      %999 = vmatprep.subr.bf16.mxu0 0
      %1000 = vmatpush2.bf16.msra.mxu0 0
      %1001 = vmatprep.subr.bf16.mxu0 0
      %1002 = vmatpush2.bf16.msra.mxu0 0
      %1003 = vmatprep.subr.bf16.mxu0 0
      %1004 = vmatpush2.bf16.msra.mxu0 0
      %1005 = vmatprep.mubr.bf16.mxu0 0
      %1006 = vmatmul.mubr.bf16.gmra.mxu0 %v967
      %v1007 = vpop.f32.mrf.mxu0
      %v1008 = vadd.f32 0.0, %v1007
      %v1009 = vpop.f32.mrf.mxu0
      %v1010 = vpop.f32.mrf.mxu0
      %v1011 = vpop.f32.mrf.mxu0
      %1012 = vdwg.mxu0
      %v1013 = vpack.c.bf16 %v1008, %v1008
      %1015 = vrot.lane.b32.xlu0 %v896, 120
      %v1016 = vpop.permute.xlu0 %1015
      %1018 = vrot.lane.b32.xlu0 %v897, 120
      %v1019 = vpop.permute.xlu0 %1018
      %v1021 = vsel %vm899, %v1016, 0
      %v1024 = vsel %vm899, %v1019, 0
      %1026 = vmatprep.subr.bf16.mxu0 0
      %1027 = vmatpush1.bf16.xpose.msra.mxu0 0
      %1028 = vmatprep.subr.bf16.mxu0 0
      %1029 = vmatpush1.bf16.xpose.msra.mxu0 0
      %1030 = vmatprep.subr.bf16.mxu0 0
      %1031 = vmatpush1.bf16.xpose.msra.mxu0 0
      %1032 = vmatprep.subr.bf16.mxu0 0
      %1033 = vmatpush1.bf16.xpose.msra.mxu0 0
      %1034 = vmatprep.subr.bf16.mxu0 0
      %1035 = vmatpush1.bf16.xpose.msra.mxu0 0
      %1036 = vmatprep.subr.bf16.mxu0 0
      %1037 = vmatpush1.bf16.xpose.msra.mxu0 0
      %1038 = vmatprep.subr.bf16.mxu0 0
      %1039 = vmatpush1.bf16.xpose.msra.mxu0 0
      %1040 = vmatprep.subr.bf16.mxu0 0
      %1041 = vmatpush1.bf16.xpose.msra.mxu0 %v1024
      %1042 = vmatprep.subr.bf16.mxu0 0
      %1043 = vmatpush2.bf16.xpose.msra.mxu0 0
      %1044 = vmatprep.subr.bf16.mxu0 0
      %1045 = vmatpush2.bf16.xpose.msra.mxu0 0
      %1046 = vmatprep.subr.bf16.mxu0 0
      %1047 = vmatpush2.bf16.xpose.msra.mxu0 0
      %1048 = vmatprep.subr.bf16.mxu0 0
      %1049 = vmatpush2.bf16.xpose.msra.mxu0 0
      %1050 = vmatprep.subr.bf16.mxu0 0
      %1051 = vmatpush2.bf16.xpose.msra.mxu0 0
      %1052 = vmatprep.subr.bf16.mxu0 0
      %1053 = vmatpush2.bf16.xpose.msra.mxu0 0
      %1054 = vmatprep.subr.bf16.mxu0 0
      %1055 = vmatpush2.bf16.xpose.msra.mxu0 0
      %1056 = vmatprep.subr.bf16.mxu0 0
      %1057 = vmatpush2.bf16.xpose.msra.mxu0 0
      %1058 = vmatprep.mubr.bf16.mxu0 0
      %1059 = vmatmul.mubr.bf16.gmra.mxu0 %v1021
      %v1060 = vpop.f32.mrf.mxu0
      %v1061 = vadd.f32 0.0, %v1060
      %v1062 = vpop.f32.mrf.mxu0
      %v1063 = vpop.f32.mrf.mxu0
      %v1064 = vpop.f32.mrf.mxu0
      %1065 = vdwg.mxu0
      %v1066 = vmul.f32 %v1061, 0.35355338
      %v1067 = vadd.f32 %v1066, %v951
      %v1068 = vsel %vm899, %v1067, -inf
      %1069 = vmax.xlane.f32.xlu0 %v1068
      %v1070 = vpop.xlane.xlu0 %1069
      %v1071 = vsub.f32 %v1067, %v1070
      %v1072 = vmul.f32 %v1071, 1.442695
      %v1073 = vpow.pop %v1072
      %v1074 = vsel %vm899, %v1073, 0.0
      %1075 = vadd.xlane.f32.xlu0 %v1074
      %v1076 = vpop.xlane.xlu0 %1075
      %v1077 = vrcp.pop %v1076
      %v1078 = vmul.f32 %v1073, %v1077
      %v1079 = vpack.c.bf16 %v1078, %v1078
      %1081 = vrot.lane.b32.xlu0 %v898, 120
      %v1082 = vpop.permute.xlu0 %1081
      %v1084 = vsel %vm899, %v1079, 0
      %v1087 = vsel %vm969, %v1082, 0
      %1089 = vmatprep.subr.bf16.mxu0 0
      %1090 = vmatpush1.bf16.msra.mxu0 0
      %1091 = vmatprep.subr.bf16.mxu0 0
      %1092 = vmatpush1.bf16.msra.mxu0 0
      %1093 = vmatprep.subr.bf16.mxu0 0
      %1094 = vmatpush1.bf16.msra.mxu0 0
      %1095 = vmatprep.subr.bf16.mxu0 0
      %1096 = vmatpush1.bf16.msra.mxu0 0
      %1097 = vmatprep.subr.bf16.mxu0 0
      %1098 = vmatpush1.bf16.msra.mxu0 0
      %1099 = vmatprep.subr.bf16.mxu0 0
      %1100 = vmatpush1.bf16.msra.mxu0 0
      %1101 = vmatprep.subr.bf16.mxu0 0
      %1102 = vmatpush1.bf16.msra.mxu0 0
      %1103 = vmatprep.subr.bf16.mxu0 0
      %1104 = vmatpush1.bf16.msra.mxu0 %v1087
      %1105 = vmatprep.subr.bf16.mxu0 0
      %1106 = vmatpush2.bf16.msra.mxu0 0
      %1107 = vmatprep.subr.bf16.mxu0 0
      %1108 = vmatpush2.bf16.msra.mxu0 0
      %1109 = vmatprep.subr.bf16.mxu0 0
      %1110 = vmatpush2.bf16.msra.mxu0 0
      %1111 = vmatprep.subr.bf16.mxu0 0
      %1112 = vmatpush2.bf16.msra.mxu0 0
      %1113 = vmatprep.subr.bf16.mxu0 0
      %1114 = vmatpush2.bf16.msra.mxu0 0
      %1115 = vmatprep.subr.bf16.mxu0 0
      %1116 = vmatpush2.bf16.msra.mxu0 0
      %1117 = vmatprep.subr.bf16.mxu0 0
      %1118 = vmatpush2.bf16.msra.mxu0 0
      %1119 = vmatprep.subr.bf16.mxu0 0
      %1120 = vmatpush2.bf16.msra.mxu0 0
      %1121 = vmatprep.mubr.bf16.mxu0 0
      %1122 = vmatmul.mubr.bf16.gmra.mxu0 %v1084
      %v1123 = vpop.f32.mrf.mxu0
      %v1124 = vadd.f32 0.0, %v1123
      %v1125 = vpop.f32.mrf.mxu0
      %v1126 = vpop.f32.mrf.mxu0
      %v1127 = vpop.f32.mrf.mxu0
      %1128 = vdwg.mxu0
      %v1129 = vpack.c.bf16 %v1124, %v1124
      %v1131 = vsel %vm899, %v1129, 0
      %v1134 = vsel %vm969, %v674, 0
      %1136 = vmatprep.subr.bf16.mxu0 0
      %1137 = vmatpush1.bf16.msra.mxu0 0
      %1138 = vmatprep.subr.bf16.mxu0 0
      %1139 = vmatpush1.bf16.msra.mxu0 0
      %1140 = vmatprep.subr.bf16.mxu0 0
      %1141 = vmatpush1.bf16.msra.mxu0 0
      %1142 = vmatprep.subr.bf16.mxu0 0
      %1143 = vmatpush1.bf16.msra.mxu0 0
      %1144 = vmatprep.subr.bf16.mxu0 0
      %1145 = vmatpush1.bf16.msra.mxu0 0
      %1146 = vmatprep.subr.bf16.mxu0 0
      %1147 = vmatpush1.bf16.msra.mxu0 0
      %1148 = vmatprep.subr.bf16.mxu0 0
      %1149 = vmatpush1.bf16.msra.mxu0 0
      %1150 = vmatprep.subr.bf16.mxu0 0
      %1151 = vmatpush1.bf16.msra.mxu0 %v1134
      %1152 = vmatprep.subr.bf16.mxu0 0
      %1153 = vmatpush2.bf16.msra.mxu0 0
      %1154 = vmatprep.subr.bf16.mxu0 0
      %1155 = vmatpush2.bf16.msra.mxu0 0
      %1156 = vmatprep.subr.bf16.mxu0 0
      %1157 = vmatpush2.bf16.msra.mxu0 0
      %1158 = vmatprep.subr.bf16.mxu0 0
      %1159 = vmatpush2.bf16.msra.mxu0 0
      %1160 = vmatprep.subr.bf16.mxu0 0
      %1161 = vmatpush2.bf16.msra.mxu0 0
      %1162 = vmatprep.subr.bf16.mxu0 0
      %1163 = vmatpush2.bf16.msra.mxu0 0
      %1164 = vmatprep.subr.bf16.mxu0 0
      %1165 = vmatpush2.bf16.msra.mxu0 0
      %1166 = vmatprep.subr.bf16.mxu0 0
      %1167 = vmatpush2.bf16.msra.mxu0 0
      %1168 = vmatprep.mubr.bf16.mxu0 0
      %1169 = vmatmul.mubr.bf16.gmra.mxu0 %v1131
      %v1170 = vpop.f32.mrf.mxu0
      %v1171 = vadd.f32 0.0, %v1170
      %v1172 = vpop.f32.mrf.mxu0
      %v1173 = vpop.f32.mrf.mxu0
      %v1174 = vpop.f32.mrf.mxu0
      %1175 = vdwg.mxu0
      %v1177 = vsel %vm899, %v1013, 0
      %v1180 = vsel %vm969, %v673, 0
      %1182 = vmatprep.subr.bf16.mxu0 0
      %1183 = vmatpush1.bf16.msra.mxu0 0
      %1184 = vmatprep.subr.bf16.mxu0 0
      %1185 = vmatpush1.bf16.msra.mxu0 0
      %1186 = vmatprep.subr.bf16.mxu0 0
      %1187 = vmatpush1.bf16.msra.mxu0 0
      %1188 = vmatprep.subr.bf16.mxu0 0
      %1189 = vmatpush1.bf16.msra.mxu0 0
      %1190 = vmatprep.subr.bf16.mxu0 0
      %1191 = vmatpush1.bf16.msra.mxu0 0
      %1192 = vmatprep.subr.bf16.mxu0 0
      %1193 = vmatpush1.bf16.msra.mxu0 0
      %1194 = vmatprep.subr.bf16.mxu0 0
      %1195 = vmatpush1.bf16.msra.mxu0 0
      %1196 = vmatprep.subr.bf16.mxu0 0
      %1197 = vmatpush1.bf16.msra.mxu0 %v1180
      %1198 = vmatprep.subr.bf16.mxu0 0
      %1199 = vmatpush2.bf16.msra.mxu0 0
      %1200 = vmatprep.subr.bf16.mxu0 0
      %1201 = vmatpush2.bf16.msra.mxu0 0
      %1202 = vmatprep.subr.bf16.mxu0 0
      %1203 = vmatpush2.bf16.msra.mxu0 0
      %1204 = vmatprep.subr.bf16.mxu0 0
      %1205 = vmatpush2.bf16.msra.mxu0 0
      %1206 = vmatprep.subr.bf16.mxu0 0
      %1207 = vmatpush2.bf16.msra.mxu0 0
      %1208 = vmatprep.subr.bf16.mxu0 0
      %1209 = vmatpush2.bf16.msra.mxu0 0
      %1210 = vmatprep.subr.bf16.mxu0 0
      %1211 = vmatpush2.bf16.msra.mxu0 0
      %1212 = vmatprep.subr.bf16.mxu0 0
      %1213 = vmatpush2.bf16.msra.mxu0 0
      %1214 = vmatprep.mubr.bf16.mxu0 0
      %1215 = vmatmul.mubr.bf16.gmra.mxu0 %v1177
      %v1216 = vpop.f32.mrf.mxu0
      %v1217 = vadd.f32 %v1171, %v1216
      %v1218 = vpop.f32.mrf.mxu0
      %v1219 = vpop.f32.mrf.mxu0
      %v1220 = vpop.f32.mrf.mxu0
      %1221 = vdwg.mxu0
      %1222 = vrot.lane.b32.xlu0 %v896, 112
      %v1223 = vpop.permute.xlu0 %1222
      %1224 = vrot.lane.b32.xlu0 %v897, 112
      %v1225 = vpop.permute.xlu0 %1224
      %v1227 = vsel %vm899, %v1223, 0
      %v1230 = vsel %vm899, %v1225, 0
      %1232 = vmatprep.subr.bf16.mxu0 0
      %1233 = vmatpush1.bf16.xpose.msra.mxu0 0
      %1234 = vmatprep.subr.bf16.mxu0 0
      %1235 = vmatpush1.bf16.xpose.msra.mxu0 0
      %1236 = vmatprep.subr.bf16.mxu0 0
      %1237 = vmatpush1.bf16.xpose.msra.mxu0 0
      %1238 = vmatprep.subr.bf16.mxu0 0
      %1239 = vmatpush1.bf16.xpose.msra.mxu0 0
      %1240 = vmatprep.subr.bf16.mxu0 0
      %1241 = vmatpush1.bf16.xpose.msra.mxu0 0
      %1242 = vmatprep.subr.bf16.mxu0 0
      %1243 = vmatpush1.bf16.xpose.msra.mxu0 0
      %1244 = vmatprep.subr.bf16.mxu0 0
      %1245 = vmatpush1.bf16.xpose.msra.mxu0 0
      %1246 = vmatprep.subr.bf16.mxu0 0
      %1247 = vmatpush1.bf16.xpose.msra.mxu0 %v1230
      %1248 = vmatprep.subr.bf16.mxu0 0
      %1249 = vmatpush2.bf16.xpose.msra.mxu0 0
      %1250 = vmatprep.subr.bf16.mxu0 0
      %1251 = vmatpush2.bf16.xpose.msra.mxu0 0
      %1252 = vmatprep.subr.bf16.mxu0 0
      %1253 = vmatpush2.bf16.xpose.msra.mxu0 0
      %1254 = vmatprep.subr.bf16.mxu0 0
      %1255 = vmatpush2.bf16.xpose.msra.mxu0 0
      %1256 = vmatprep.subr.bf16.mxu0 0
      %1257 = vmatpush2.bf16.xpose.msra.mxu0 0
      %1258 = vmatprep.subr.bf16.mxu0 0
      %1259 = vmatpush2.bf16.xpose.msra.mxu0 0
      %1260 = vmatprep.subr.bf16.mxu0 0
      %1261 = vmatpush2.bf16.xpose.msra.mxu0 0
      %1262 = vmatprep.subr.bf16.mxu0 0
      %1263 = vmatpush2.bf16.xpose.msra.mxu0 0
      %1264 = vmatprep.mubr.bf16.mxu0 0
      %1265 = vmatmul.mubr.bf16.gmra.mxu0 %v1227
      %v1266 = vpop.f32.mrf.mxu0
      %v1267 = vadd.f32 0.0, %v1266
      %v1268 = vpop.f32.mrf.mxu0
      %v1269 = vpop.f32.mrf.mxu0
      %v1270 = vpop.f32.mrf.mxu0
      %1271 = vdwg.mxu0
      %v1272 = vmul.f32 %v1267, 0.35355338
      %v1273 = vadd.f32 %v1272, %v951
      %v1274 = vsel %vm899, %v1273, -inf
      %1275 = vmax.xlane.f32.xlu0 %v1274
      %v1276 = vpop.xlane.xlu0 %1275
      %v1277 = vsub.f32 %v1273, %v1276
      %v1278 = vmul.f32 %v1277, 1.442695
      %v1279 = vpow.pop %v1278
      %v1280 = vsel %vm899, %v1279, 0.0
      %1281 = vadd.xlane.f32.xlu0 %v1280
      %v1282 = vpop.xlane.xlu0 %1281
      %v1283 = vrcp.pop %v1282
      %v1284 = vmul.f32 %v1279, %v1283
      %v1285 = vpack.c.bf16 %v1284, %v1284
      %1286 = vrot.lane.b32.xlu0 %v898, 112
      %v1287 = vpop.permute.xlu0 %1286
      %v1289 = vsel %vm899, %v1285, 0
      %v1292 = vsel %vm969, %v1287, 0
      %1294 = vmatprep.subr.bf16.mxu0 0
      %1295 = vmatpush1.bf16.msra.mxu0 0
      %1296 = vmatprep.subr.bf16.mxu0 0
      %1297 = vmatpush1.bf16.msra.mxu0 0
      %1298 = vmatprep.subr.bf16.mxu0 0
      %1299 = vmatpush1.bf16.msra.mxu0 0
      %1300 = vmatprep.subr.bf16.mxu0 0
      %1301 = vmatpush1.bf16.msra.mxu0 0
      %1302 = vmatprep.subr.bf16.mxu0 0
      %1303 = vmatpush1.bf16.msra.mxu0 0
      %1304 = vmatprep.subr.bf16.mxu0 0
      %1305 = vmatpush1.bf16.msra.mxu0 0
      %1306 = vmatprep.subr.bf16.mxu0 0
      %1307 = vmatpush1.bf16.msra.mxu0 0
      %1308 = vmatprep.subr.bf16.mxu0 0
      %1309 = vmatpush1.bf16.msra.mxu0 %v1292
      %1310 = vmatprep.subr.bf16.mxu0 0
      %1311 = vmatpush2.bf16.msra.mxu0 0
      %1312 = vmatprep.subr.bf16.mxu0 0
      %1313 = vmatpush2.bf16.msra.mxu0 0
      %1314 = vmatprep.subr.bf16.mxu0 0
      %1315 = vmatpush2.bf16.msra.mxu0 0
      %1316 = vmatprep.subr.bf16.mxu0 0
      %1317 = vmatpush2.bf16.msra.mxu0 0
      %1318 = vmatprep.subr.bf16.mxu0 0
      %1319 = vmatpush2.bf16.msra.mxu0 0
      %1320 = vmatprep.subr.bf16.mxu0 0
      %1321 = vmatpush2.bf16.msra.mxu0 0
      %1322 = vmatprep.subr.bf16.mxu0 0
      %1323 = vmatpush2.bf16.msra.mxu0 0
      %1324 = vmatprep.subr.bf16.mxu0 0
      %1325 = vmatpush2.bf16.msra.mxu0 0
      %1326 = vmatprep.mubr.bf16.mxu0 0
      %1327 = vmatmul.mubr.bf16.gmra.mxu0 %v1289
      %v1328 = vpop.f32.mrf.mxu0
      %v1329 = vadd.f32 0.0, %v1328
      %v1330 = vpop.f32.mrf.mxu0
      %v1331 = vpop.f32.mrf.mxu0
      %v1332 = vpop.f32.mrf.mxu0
      %1333 = vdwg.mxu0
      %v1334 = vpack.c.bf16 %v1329, %v1329
      %v1336 = vsel %vm899, %v1334, 0
      %v1339 = vsel %vm969, %v675, 0
      %1341 = vmatprep.subr.bf16.mxu0 0
      %1342 = vmatpush1.bf16.msra.mxu0 0
      %1343 = vmatprep.subr.bf16.mxu0 0
      %1344 = vmatpush1.bf16.msra.mxu0 0
      %1345 = vmatprep.subr.bf16.mxu0 0
      %1346 = vmatpush1.bf16.msra.mxu0 0
      %1347 = vmatprep.subr.bf16.mxu0 0
      %1348 = vmatpush1.bf16.msra.mxu0 0
      %1349 = vmatprep.subr.bf16.mxu0 0
      %1350 = vmatpush1.bf16.msra.mxu0 0
      %1351 = vmatprep.subr.bf16.mxu0 0
      %1352 = vmatpush1.bf16.msra.mxu0 0
      %1353 = vmatprep.subr.bf16.mxu0 0
      %1354 = vmatpush1.bf16.msra.mxu0 0
      %1355 = vmatprep.subr.bf16.mxu0 0
      %1356 = vmatpush1.bf16.msra.mxu0 %v1339
      %1357 = vmatprep.subr.bf16.mxu0 0
      %1358 = vmatpush2.bf16.msra.mxu0 0
      %1359 = vmatprep.subr.bf16.mxu0 0
      %1360 = vmatpush2.bf16.msra.mxu0 0
      %1361 = vmatprep.subr.bf16.mxu0 0
      %1362 = vmatpush2.bf16.msra.mxu0 0
      %1363 = vmatprep.subr.bf16.mxu0 0
      %1364 = vmatpush2.bf16.msra.mxu0 0
      %1365 = vmatprep.subr.bf16.mxu0 0
      %1366 = vmatpush2.bf16.msra.mxu0 0
      %1367 = vmatprep.subr.bf16.mxu0 0
      %1368 = vmatpush2.bf16.msra.mxu0 0
      %1369 = vmatprep.subr.bf16.mxu0 0
      %1370 = vmatpush2.bf16.msra.mxu0 0
      %1371 = vmatprep.subr.bf16.mxu0 0
      %1372 = vmatpush2.bf16.msra.mxu0 0
      %1373 = vmatprep.mubr.bf16.mxu0 0
      %1374 = vmatmul.mubr.bf16.gmra.mxu0 %v1336
      %v1375 = vpop.f32.mrf.mxu0
      %v1376 = vadd.f32 0.0, %v1375
      %v1377 = vpop.f32.mrf.mxu0
      %v1378 = vpop.f32.mrf.mxu0
      %v1379 = vpop.f32.mrf.mxu0
      %1380 = vdwg.mxu0
      %v1381 = vadd.f32 %v1217, %v1376
      %1382 = vrot.lane.b32.xlu0 %v896, 104
      %v1383 = vpop.permute.xlu0 %1382
      %1384 = vrot.lane.b32.xlu0 %v897, 104
      %v1385 = vpop.permute.xlu0 %1384
      %v1387 = vsel %vm899, %v1383, 0
      %v1390 = vsel %vm899, %v1385, 0
      %1392 = vmatprep.subr.bf16.mxu0 0
      %1393 = vmatpush1.bf16.xpose.msra.mxu0 0
      %1394 = vmatprep.subr.bf16.mxu0 0
      %1395 = vmatpush1.bf16.xpose.msra.mxu0 0
      %1396 = vmatprep.subr.bf16.mxu0 0
      %1397 = vmatpush1.bf16.xpose.msra.mxu0 0
      %1398 = vmatprep.subr.bf16.mxu0 0
      %1399 = vmatpush1.bf16.xpose.msra.mxu0 0
      %1400 = vmatprep.subr.bf16.mxu0 0
      %1401 = vmatpush1.bf16.xpose.msra.mxu0 0
      %1402 = vmatprep.subr.bf16.mxu0 0
      %1403 = vmatpush1.bf16.xpose.msra.mxu0 0
      %1404 = vmatprep.subr.bf16.mxu0 0
      %1405 = vmatpush1.bf16.xpose.msra.mxu0 0
      %1406 = vmatprep.subr.bf16.mxu0 0
      %1407 = vmatpush1.bf16.xpose.msra.mxu0 %v1390
      %1408 = vmatprep.subr.bf16.mxu0 0
      %1409 = vmatpush2.bf16.xpose.msra.mxu0 0
      %1410 = vmatprep.subr.bf16.mxu0 0
      %1411 = vmatpush2.bf16.xpose.msra.mxu0 0
      %1412 = vmatprep.subr.bf16.mxu0 0
      %1413 = vmatpush2.bf16.xpose.msra.mxu0 0
      %1414 = vmatprep.subr.bf16.mxu0 0
      %1415 = vmatpush2.bf16.xpose.msra.mxu0 0
      %1416 = vmatprep.subr.bf16.mxu0 0
      %1417 = vmatpush2.bf16.xpose.msra.mxu0 0
      %1418 = vmatprep.subr.bf16.mxu0 0
      %1419 = vmatpush2.bf16.xpose.msra.mxu0 0
      %1420 = vmatprep.subr.bf16.mxu0 0
      %1421 = vmatpush2.bf16.xpose.msra.mxu0 0
      %1422 = vmatprep.subr.bf16.mxu0 0
      %1423 = vmatpush2.bf16.xpose.msra.mxu0 0
      %1424 = vmatprep.mubr.bf16.mxu0 0
      %1425 = vmatmul.mubr.bf16.gmra.mxu0 %v1387
      %v1426 = vpop.f32.mrf.mxu0
      %v1427 = vadd.f32 0.0, %v1426
      %v1428 = vpop.f32.mrf.mxu0
      %v1429 = vpop.f32.mrf.mxu0
      %v1430 = vpop.f32.mrf.mxu0
      %1431 = vdwg.mxu0
      %v1432 = vmul.f32 %v1427, 0.35355338
      %v1433 = vadd.f32 %v1432, %v951
      %v1434 = vsel %vm899, %v1433, -inf
      %1435 = vmax.xlane.f32.xlu0 %v1434
      %v1436 = vpop.xlane.xlu0 %1435
      %v1437 = vsub.f32 %v1433, %v1436
      %v1438 = vmul.f32 %v1437, 1.442695
      %v1439 = vpow.pop %v1438
      %v1440 = vsel %vm899, %v1439, 0.0
      %1441 = vadd.xlane.f32.xlu0 %v1440
      %v1442 = vpop.xlane.xlu0 %1441
      %v1443 = vrcp.pop %v1442
      %v1444 = vmul.f32 %v1439, %v1443
      %v1445 = vpack.c.bf16 %v1444, %v1444
      %1446 = vrot.lane.b32.xlu0 %v898, 104
      %v1447 = vpop.permute.xlu0 %1446
      %v1449 = vsel %vm899, %v1445, 0
      %v1452 = vsel %vm969, %v1447, 0
      %1454 = vmatprep.subr.bf16.mxu0 0
      %1455 = vmatpush1.bf16.msra.mxu0 0
      %1456 = vmatprep.subr.bf16.mxu0 0
      %1457 = vmatpush1.bf16.msra.mxu0 0
      %1458 = vmatprep.subr.bf16.mxu0 0
      %1459 = vmatpush1.bf16.msra.mxu0 0
      %1460 = vmatprep.subr.bf16.mxu0 0
      %1461 = vmatpush1.bf16.msra.mxu0 0
      %1462 = vmatprep.subr.bf16.mxu0 0
      %1463 = vmatpush1.bf16.msra.mxu0 0
      %1464 = vmatprep.subr.bf16.mxu0 0
      %1465 = vmatpush1.bf16.msra.mxu0 0
      %1466 = vmatprep.subr.bf16.mxu0 0
      %1467 = vmatpush1.bf16.msra.mxu0 0
      %1468 = vmatprep.subr.bf16.mxu0 0
      %1469 = vmatpush1.bf16.msra.mxu0 %v1452
      %1470 = vmatprep.subr.bf16.mxu0 0
      %1471 = vmatpush2.bf16.msra.mxu0 0
      %1472 = vmatprep.subr.bf16.mxu0 0
      %1473 = vmatpush2.bf16.msra.mxu0 0
      %1474 = vmatprep.subr.bf16.mxu0 0
      %1475 = vmatpush2.bf16.msra.mxu0 0
      %1476 = vmatprep.subr.bf16.mxu0 0
      %1477 = vmatpush2.bf16.msra.mxu0 0
      %1478 = vmatprep.subr.bf16.mxu0 0
      %1479 = vmatpush2.bf16.msra.mxu0 0
      %1480 = vmatprep.subr.bf16.mxu0 0
      %1481 = vmatpush2.bf16.msra.mxu0 0
      %1482 = vmatprep.subr.bf16.mxu0 0
      %1483 = vmatpush2.bf16.msra.mxu0 0
      %1484 = vmatprep.subr.bf16.mxu0 0
      %1485 = vmatpush2.bf16.msra.mxu0 0
      %1486 = vmatprep.mubr.bf16.mxu0 0
      %1487 = vmatmul.mubr.bf16.gmra.mxu0 %v1449
      %v1488 = vpop.f32.mrf.mxu0
      %v1489 = vadd.f32 0.0, %v1488
      %v1490 = vpop.f32.mrf.mxu0
      %v1491 = vpop.f32.mrf.mxu0
      %v1492 = vpop.f32.mrf.mxu0
      %1493 = vdwg.mxu0
      %v1494 = vpack.c.bf16 %v1489, %v1489
      %v1496 = vsel %vm899, %v1494, 0
      %v1499 = vsel %vm969, %v676, 0
      %1501 = vmatprep.subr.bf16.mxu0 0
      %1502 = vmatpush1.bf16.msra.mxu0 0
      %1503 = vmatprep.subr.bf16.mxu0 0
      %1504 = vmatpush1.bf16.msra.mxu0 0
      %1505 = vmatprep.subr.bf16.mxu0 0
      %1506 = vmatpush1.bf16.msra.mxu0 0
      %1507 = vmatprep.subr.bf16.mxu0 0
      %1508 = vmatpush1.bf16.msra.mxu0 0
      %1509 = vmatprep.subr.bf16.mxu0 0
      %1510 = vmatpush1.bf16.msra.mxu0 0
      %1511 = vmatprep.subr.bf16.mxu0 0
      %1512 = vmatpush1.bf16.msra.mxu0 0
      %1513 = vmatprep.subr.bf16.mxu0 0
      %1514 = vmatpush1.bf16.msra.mxu0 0
      %1515 = vmatprep.subr.bf16.mxu0 0
      %1516 = vmatpush1.bf16.msra.mxu0 %v1499
      %1517 = vmatprep.subr.bf16.mxu0 0
      %1518 = vmatpush2.bf16.msra.mxu0 0
      %1519 = vmatprep.subr.bf16.mxu0 0
      %1520 = vmatpush2.bf16.msra.mxu0 0
      %1521 = vmatprep.subr.bf16.mxu0 0
      %1522 = vmatpush2.bf16.msra.mxu0 0
      %1523 = vmatprep.subr.bf16.mxu0 0
      %1524 = vmatpush2.bf16.msra.mxu0 0
      %1525 = vmatprep.subr.bf16.mxu0 0
      %1526 = vmatpush2.bf16.msra.mxu0 0
      %1527 = vmatprep.subr.bf16.mxu0 0
      %1528 = vmatpush2.bf16.msra.mxu0 0
      %1529 = vmatprep.subr.bf16.mxu0 0
      %1530 = vmatpush2.bf16.msra.mxu0 0
      %1531 = vmatprep.subr.bf16.mxu0 0
      %1532 = vmatpush2.bf16.msra.mxu0 0
      %1533 = vmatprep.mubr.bf16.mxu0 0
      %1534 = vmatmul.mubr.bf16.gmra.mxu0 %v1496
      %v1535 = vpop.f32.mrf.mxu0
      %v1536 = vadd.f32 0.0, %v1535
      %v1537 = vpop.f32.mrf.mxu0
      %v1538 = vpop.f32.mrf.mxu0
      %v1539 = vpop.f32.mrf.mxu0
      %1540 = vdwg.mxu0
      %v1541 = vadd.f32 %v1381, %v1536
      %v1542 = vadd.f32 %v661, %v1541
      %v1544 = vlaneseq
      %v1545 = vshrl.u32 %v1544, 7
      %v1546 = vsub.s32 0, %v1545
      %v1547 = vrot.slane %v670, %v1546
      %v1549 = vadd.f32 %v1542, %v1547
      %v1550 = vsel %vm677, %v1549, 0.0
      %1551 = vadd.xlane.f32.xlu0 %v1550
      %v1552 = vpop.xlane.xlu0 %1551
      %v1553 = vmul.f32 %v1552, %v681
      %v1554 = vsub.f32 %v1549, %v1553
      %v1555 = vmul.f32 %v1554, %v1554
      %v1556 = vsel %vm677, %v1555, 0.0
      %1557 = vadd.xlane.f32.xlu0 %v1556
      %v1558 = vpop.xlane.xlu0 %1557
      %v1559 = vmul.f32 %v1558, %v681
      %v1560 = vadd.f32 %v1559, 1e-05
      %v1561 = vrsqrt.pop %v1560
      %v1562 = vmul.f32 %v1554, %v1561
      %v1564 = vlaneseq
      %v1565 = vshrl.u32 %v1564, 7
      %v1566 = vsub.s32 0, %v1565
      %v1567 = vrot.slane %v665, %v1566
      %v1569 = vmul.f32 %v1562, %v1567
      %v1571 = vlaneseq
      %v1572 = vshrl.u32 %v1571, 7
      %v1573 = vsub.s32 0, %v1572
      %v1574 = vrot.slane %v666, %v1573
      %v1576 = vadd.f32 %v1569, %v1574
      %v1577 = vpack.c.bf16 %v1576, %v1576
      %v1578 = vld [vmem:[%s15] sm:$0xf]
      %v1579 = vld [vmem:[%s15 + $0x4] sm:$0xf]
      %v1580 = vld [vmem:[%s15 + $0x8] sm:$0xf]
      %v1581 = vld [vmem:[%s15 + $0xc] sm:$0xf]
      %v1583 = vlaneseq
      %v1584 = vshrl.u32 %v1583, 7
      %v1585 = vsub.s32 0, %v1584
      %v1586 = vrot.slane %v671, %v1585
      %v1592 = vunpack.c.l.b16 %v1578
      %v1593 = vunpack.c.l.b16 %v1579
      %v1594 = vunpack.c.l.b16 %v1580
      %v1595 = vunpack.c.l.b16 %v1581
      %v1596 = vpack.c.b16 %v1593, %v1592
      %v1597 = vpack.c.b16 %v1595, %v1594
      %v1601 = vsel %vm677, %v1577, 0
      %1603 = vmatprep.subr.bf16.mxu0 0
      %1604 = vmatpush1.bf16.msra.mxu0 0
      %1605 = vmatprep.subr.bf16.mxu0 0
      %1606 = vmatpush1.bf16.msra.mxu0 0
      %1607 = vmatprep.subr.bf16.mxu0 0
      %1608 = vmatpush1.bf16.msra.mxu0 0
      %1609 = vmatprep.subr.bf16.mxu0 0
      %1610 = vmatpush1.bf16.msra.mxu0 0
      %1611 = vmatprep.subr.bf16.mxu0 0
      %1612 = vmatpush1.bf16.msra.mxu0 0
      %1613 = vmatprep.subr.bf16.mxu0 0
      %1614 = vmatpush1.bf16.msra.mxu0 0
      %1615 = vmatprep.subr.bf16.mxu0 0
      %1616 = vmatpush1.bf16.msra.mxu0 %v1597
      %1617 = vmatprep.subr.bf16.mxu0 0
      %1618 = vmatpush1.bf16.msra.mxu0 %v1596
      %1619 = vmatprep.subr.bf16.mxu0 0
      %1620 = vmatpush2.bf16.msra.mxu0 0
      %1621 = vmatprep.subr.bf16.mxu0 0
      %1622 = vmatpush2.bf16.msra.mxu0 0
      %1623 = vmatprep.subr.bf16.mxu0 0
      %1624 = vmatpush2.bf16.msra.mxu0 0
      %1625 = vmatprep.subr.bf16.mxu0 0
      %1626 = vmatpush2.bf16.msra.mxu0 0
      %1627 = vmatprep.subr.bf16.mxu0 0
      %1628 = vmatpush2.bf16.msra.mxu0 0
      %1629 = vmatprep.subr.bf16.mxu0 0
      %1630 = vmatpush2.bf16.msra.mxu0 0
      %1631 = vmatprep.subr.bf16.mxu0 0
      %1632 = vmatpush2.bf16.msra.mxu0 0
      %1633 = vmatprep.subr.bf16.mxu0 0
      %1634 = vmatpush2.bf16.msra.mxu0 0
      %1635 = vmatprep.mubr.bf16.mxu0 0
      %1636 = vmatmul.mubr.bf16.gmra.mxu0 %v1601
      %v1637 = vpop.f32.mrf.mxu0
      %v1638 = vadd.f32 %v1586, %v1637
      %v1639 = vpop.f32.mrf.mxu0
      %v1640 = vpop.f32.mrf.mxu0
      %v1641 = vpop.f32.mrf.mxu0
      %1642 = vdwg.mxu0
      %v1643 = vmul.f32 %v1638, 0.5
      %v1644 = vmul.f32 %v1638, 0.044715
      %v1645 = vmul.f32 %v1644, %v1638
      %v1646 = vmul.f32 %v1645, %v1638
      %v1647 = vadd.f32 %v1638, %v1646
      %v1648 = vmul.f32 %v1647, 0.7978846
      %v1649 = vtanh.pop %v1648
      %v1650 = vadd.f32 %v1649, 1.0
      %v1651 = vmul.f32 %v1643, %v1650
      %v1652 = vpack.c.bf16 %v1651, %v1651
      %v1653 = vld [vmem:[%s17] sm:$0xf]
      %v1654 = vld [vmem:[%s17 + $0x4] sm:$0xf]
      %v1655 = vld [vmem:[%s17 + $0x8] sm:$0xf]
      %v1656 = vld [vmem:[%s17 + $0xc] sm:$0xf]
      %v1657 = vld [vmem:[%s17 + $0x10] sm:$0xf]
      %v1658 = vld [vmem:[%s17 + $0x14] sm:$0xf]
      %v1659 = vld [vmem:[%s17 + $0x18] sm:$0xf]
      %v1660 = vld [vmem:[%s17 + $0x1c] sm:$0xf]
      %v1661 = vld [vmem:[%s17 + $0x20] sm:$0xf]
      %v1662 = vld [vmem:[%s17 + $0x24] sm:$0xf]
      %v1663 = vld [vmem:[%s17 + $0x28] sm:$0xf]
      %v1664 = vld [vmem:[%s17 + $0x2c] sm:$0xf]
      %v1665 = vld [vmem:[%s17 + $0x30] sm:$0xf]
      %v1666 = vld [vmem:[%s17 + $0x34] sm:$0xf]
      %v1667 = vld [vmem:[%s17 + $0x38] sm:$0xf]
      %v1668 = vld [vmem:[%s17 + $0x3c] sm:$0xf]
      %v1670 = vlaneseq
      %v1671 = vshrl.u32 %v1670, 7
      %v1672 = vsub.s32 0, %v1671
      %v1673 = vrot.slane %v672, %v1672
      %v1691 = vunpack.c.l.b16 %v1653
      %v1692 = vunpack.c.l.b16 %v1654
      %v1693 = vunpack.c.l.b16 %v1655
      %v1694 = vunpack.c.l.b16 %v1656
      %v1695 = vunpack.c.l.b16 %v1657
      %v1696 = vunpack.c.l.b16 %v1658
      %v1697 = vunpack.c.l.b16 %v1659
      %v1698 = vunpack.c.l.b16 %v1660
      %v1699 = vunpack.c.l.b16 %v1661
      %v1700 = vunpack.c.l.b16 %v1662
      %v1701 = vunpack.c.l.b16 %v1663
      %v1702 = vunpack.c.l.b16 %v1664
      %v1703 = vunpack.c.l.b16 %v1665
      %v1704 = vunpack.c.l.b16 %v1666
      %v1705 = vunpack.c.l.b16 %v1667
      %v1706 = vunpack.c.l.b16 %v1668
      %v1707 = vpack.c.b16 %v1692, %v1691
      %v1708 = vpack.c.b16 %v1694, %v1693
      %v1709 = vpack.c.b16 %v1696, %v1695
      %v1710 = vpack.c.b16 %v1698, %v1697
      %v1711 = vpack.c.b16 %v1700, %v1699
      %v1712 = vpack.c.b16 %v1702, %v1701
      %v1713 = vpack.c.b16 %v1704, %v1703
      %v1714 = vpack.c.b16 %v1706, %v1705
      %1723 = vmatprep.subr.bf16.mxu0 0
      %1724 = vmatpush1.bf16.msra.mxu0 %v1714
      %1725 = vmatprep.subr.bf16.mxu0 0
      %1726 = vmatpush1.bf16.msra.mxu0 %v1713
      %1727 = vmatprep.subr.bf16.mxu0 0
      %1728 = vmatpush1.bf16.msra.mxu0 %v1712
      %1729 = vmatprep.subr.bf16.mxu0 0
      %1730 = vmatpush1.bf16.msra.mxu0 %v1711
      %1731 = vmatprep.subr.bf16.mxu0 0
      %1732 = vmatpush1.bf16.msra.mxu0 %v1710
      %1733 = vmatprep.subr.bf16.mxu0 0
      %1734 = vmatpush1.bf16.msra.mxu0 %v1709
      %1735 = vmatprep.subr.bf16.mxu0 0
      %1736 = vmatpush1.bf16.msra.mxu0 %v1708
      %1737 = vmatprep.subr.bf16.mxu0 0
      %1738 = vmatpush1.bf16.msra.mxu0 %v1707
      %1739 = vmatprep.subr.bf16.mxu0 0
      %1740 = vmatpush2.bf16.msra.mxu0 0
      %1741 = vmatprep.subr.bf16.mxu0 0
      %1742 = vmatpush2.bf16.msra.mxu0 0
      %1743 = vmatprep.subr.bf16.mxu0 0
      %1744 = vmatpush2.bf16.msra.mxu0 0
      %1745 = vmatprep.subr.bf16.mxu0 0
      %1746 = vmatpush2.bf16.msra.mxu0 0
      %1747 = vmatprep.subr.bf16.mxu0 0
      %1748 = vmatpush2.bf16.msra.mxu0 0
      %1749 = vmatprep.subr.bf16.mxu0 0
      %1750 = vmatpush2.bf16.msra.mxu0 0
      %1751 = vmatprep.subr.bf16.mxu0 0
      %1752 = vmatpush2.bf16.msra.mxu0 0
      %1753 = vmatprep.subr.bf16.mxu0 0
      %1754 = vmatpush2.bf16.msra.mxu0 0
      %1755 = vmatprep.mubr.bf16.mxu0 0
      %1756 = vmatmul.mubr.bf16.gmra.mxu0 %v1652
      %v1757 = vpop.f32.mrf.mxu0
      %v1758 = vadd.f32 %v1673, %v1757
      %v1759 = vpop.f32.mrf.mxu0
      %v1760 = vpop.f32.mrf.mxu0
      %v1761 = vpop.f32.mrf.mxu0
      %1762 = vdwg.mxu0
      %v1763 = vadd.f32 %v1549, %v1758
      %1764 = vst.msk [vmem:[%s659] sm:$0xff] %vm677, %v1763
      %p1765 = scmp.lt.s32.totalorder %s34, 1
      %s1766 = scalar_select %p1765, %s34, 1
      %p1767 = scmp.lt.s32.totalorder %s35, 0
      %s1768 = scalar_select %p1767, %s35, 0
      %s1769 = sadd.s32 %s1768, %s1766
      %s1770 = smul.addr %s1769, 8
      %s1771 = scalar_lea.vmem %s19, %s1770
      // Predicated region
      $region97: #{bert_forward.2} parent=95 // pred_check
        %p1772 = pneg %p478
      $region98: #{bert_forward.2} parent=95 // pred_check_branch
        %1774 = sbr.rel (%p1772) target = $region100
      $region99: #{bert_forward.2} parent=95 // pred_region
        _
      $region100: #{bert_forward.2} parent=95 // pred_fallthru
        _
    $region96: #{bert_forward.2} parent=5 // pred_fallthru
      _
    %p1775 = scmp.le.s32.totalorder 2, %s25
    // Predicated region
    $region101: #{bert_forward.2} parent=5 // pred_check
      %p1776 = pneg %p1775
    $region102: #{bert_forward.2} parent=5 // pred_check_branch
      %1778 = sbr.rel (%p1776) target = $region104
    $region103: #{bert_forward.2} parent=5 // pred_region
      %s1779 = ssub.s32 %s25, 2
      // Predicated region
      $region105: #{bert_forward.2} parent=103 // pred_check
        %p1780 = pneg %p484
      $region106: #{bert_forward.2} parent=103 // pred_check_branch
        %1782 = sbr.rel (%p1780) target = $region108
      $region107: #{bert_forward.2} parent=103 // pred_region
        %p1783 = scmp.lt.s32.totalorder %s36, 1
        %s1784 = scalar_select %p1783, %s36, 1
        %p1785 = scmp.lt.s32.totalorder %s37, 0
        %s1786 = scalar_select %p1785, %s37, 0
        %s1787 = sadd.s32 %s1786, %s1784
        %s1788 = smul.addr %s1787, 8
        %s1789 = scalar_lea.vmem %s19, %s1788
      $region108: #{bert_forward.2} parent=103 // pred_fallthru
        _
    $region104: #{bert_forward.2} parent=5 // pred_fallthru
      _
  $region6: #{bert_forward.2} parent=0 // loop_footer
    %s29 = sadd.s32 1, %s25
  $region7: #{bert_forward.2} parent=0 // loop_footer_branch
    %24 = sbr.rel target = $region3
  $region8: #{bert_forward.2} parent=0 // loop_exit
    _

</llo_original>
